<compile_context>
chip_gen: v7x
topology: tpu7x:2x2x1
jax: 0.10.0
libtpu: 0.0.40
codegen_flags: <defaults>
</compile_context>

<pallas_src>
import numpy as np

import jax
import jax.numpy as jnp
from jax.experimental import pallas as pl
from jax.experimental.pallas import tpu as pltpu

IMG = 32                  # input spatial size (fc1 assumes 16*5*5 features -> 32x32)
IMG2 = IMG * IMG          # 1024 lanes per image
KSZ = 5                   # conv kernel size
NTAP = KSZ * KSZ          # 25 taps per conv
CPAD = 8                  # conv channel dims padded to 8 (one sublane tile); padded
                          # channels carry zero weights, so results are unchanged
KSTACK = NTAP * CPAD      # 200: contraction size of each stacked conv matmul


def _shift_left(v, d):
    """out[:, i] = v[:, (i + d) % n] via a single XLU lane rotation.

    The circular wrap only writes lanes >= n - d; for IMG=32, KSZ=5 and the
    stride 1->2->4 embedding those lanes are never valid outputs of any
    downstream stage, so wrapped values never reach a real result.
    """
    if d == 0:
        return v
    n = v.shape[-1]
    return pltpu.roll(v, shift=n - d, axis=1)   # == jnp.roll(v, -d, axis=1)


# -----------------------------------------------------------------------------
# Fully fused per-image kernel:
#   conv1 -> ReLU -> pool -> conv2 -> ReLU -> pool -> gather -> fc1 -> fc2 -> fc3
# -----------------------------------------------------------------------------
def _lenet_kernel(x_ref, w1_ref, b1_ref, w2_ref, b2_ref, sel_ref,
                  fw1_ref, fb1_ref, fw2_ref, fb2_ref, fw3_ref, fb3_ref,
                  o_ref, fvec_ref):
    x = x_ref[0]                                     # [8, 1024] (channels padded to 8)

    # ---- conv1 (5x5 valid) + ReLU: ONE stacked [8,200]@[200,1024] MXU matmul.
    taps = [_shift_left(x, kh * IMG + kw) for kh in range(KSZ) for kw in range(KSZ)]
    xs = jnp.concatenate(taps, axis=0)               # [200, 1024], 8-sublane-aligned pieces
    a1 = jnp.dot(w1_ref[...], xs, preferred_element_type=jnp.float32)
    a1 = jnp.maximum(a1 + b1_ref[...], 0.0)          # [8, 1024]; valid at oh*32+ow, oh/ow < 28

    # ---- maxpool 2x2/2: two cascaded rolls cover offsets {0, 1, 32, 33}.
    m = jnp.maximum(a1, _shift_left(a1, 1))
    p1 = jnp.maximum(m, _shift_left(m, IMG))         # valid on the stride-2 embedded grid

    # ---- conv2 (5x5) + ReLU on the stride-2 grid: ONE stacked [16,200]@[200,1024] matmul.
    taps = [_shift_left(p1, 2 * (kh * IMG + kw)) for kh in range(KSZ) for kw in range(KSZ)]
    ps = jnp.concatenate(taps, axis=0)               # [200, 1024]
    a2 = jnp.dot(w2_ref[...], ps, preferred_element_type=jnp.float32)
    a2 = jnp.maximum(a2 + b2_ref[...], 0.0)          # [16, 1024]; valid at oh2*64 + ow2*2

    # ---- maxpool on the stride-2 grid -> stride-4 grid (offsets {0, 2, 64, 66}).
    m = jnp.maximum(a2, _shift_left(a2, 2))
    p2 = jnp.maximum(m, _shift_left(m, 2 * IMG))     # valid at lane q*128 + r*4, q/r < 5

    # ---- gather the 16*5*5 valid pooled pixels with a per-image one-hot matmul
    # (sel is a fixed [1024, 25] constant -> O(B) total), then lay them out in
    # torch's (c, h, w) flatten order via 16 row stores into a [1, 400] scratch.
    feat = jnp.dot(p2, sel_ref[...], preferred_element_type=jnp.float32)   # [16, 25]
    for c in range(16):
        fvec_ref[:, pl.ds(c * 25, 25)] = feat[c:c + 1, :]
    f = fvec_ref[...]                                # [1, 400]

    # ---- fc1 -> ReLU -> fc2 -> ReLU -> fc3 (weights resident in VMEM, fused).
    h = jnp.maximum(jnp.dot(f, fw1_ref[...], preferred_element_type=jnp.float32)
                    + fb1_ref[...], 0.0)
    h = jnp.maximum(jnp.dot(h, fw2_ref[...], preferred_element_type=jnp.float32)
                    + fb2_ref[...], 0.0)
    o_ref[0] = (jnp.dot(h, fw3_ref[...], preferred_element_type=jnp.float32)
                + fb3_ref[...]).astype(o_ref.dtype)


# -----------------------------------------------------------------------------
# pallas_call plumbing
# -----------------------------------------------------------------------------
def _const2(b):            # weights / constants: same block every grid step
    return (0, 0)


@jax.jit
def neural_network_forward(x, kp):
    """x: [B, 3, 32, 32] float32 (NCHW, as in PyTorch). Returns [B, 10]."""
    B = x.shape[0]
    # Layout glue: zero-pad channels 3 -> 8 and flatten HxW into 1024 lanes.
    xp = jnp.pad(x, ((0, 0), (0, CPAD - 3), (0, 0), (0, 0))).reshape(B, CPAD, IMG2)

    out = pl.pallas_call(
        _lenet_kernel,
        out_shape=jax.ShapeDtypeStruct((B, 1, 10), jnp.float32),
        grid=(B,),
        in_specs=[
            pl.BlockSpec((1, CPAD, IMG2), lambda b: (b, 0, 0)),   # one image per step
            pl.BlockSpec((CPAD, KSTACK), _const2),                # conv1 weight [8, 200]
            pl.BlockSpec((CPAD, 1), _const2),                     # conv1 bias
            pl.BlockSpec((16, KSTACK), _const2),                  # conv2 weight [16, 200]
            pl.BlockSpec((16, 1), _const2),                       # conv2 bias
            pl.BlockSpec((IMG2, NTAP), _const2),                  # one-hot gather constant
            pl.BlockSpec((400, 120), _const2),                    # fc1 weight
            pl.BlockSpec((1, 120), _const2),                      # fc1 bias
            pl.BlockSpec((120, 84), _const2),                     # fc2 weight
            pl.BlockSpec((1, 84), _const2),                       # fc2 bias
            pl.BlockSpec((84, 10), _const2),                      # fc3 weight
            pl.BlockSpec((1, 10), _const2),                       # fc3 bias
        ],
        out_specs=pl.BlockSpec((1, 1, 10), lambda b: (b, 0, 0)),
        scratch_shapes=[pltpu.VMEM((1, 400), jnp.float32)],       # flattened feature row
        compiler_params=pltpu.CompilerParams(
            dimension_semantics=("parallel",)),                   # megacore-shardable (v7x)
    )(xp, kp["conv1_w"], kp["conv1_b"], kp["conv2_w"], kp["conv2_b"], kp["sel"],
      kp["fc1_w"], kp["fc1_b"], kp["fc2_w"], kp["fc2_b"], kp["fc3_w"], kp["fc3_b"])
    return out.reshape(B, 10)


# -----------------------------------------------------------------------------
# Parameters: torch-layout init + one-time repack into kernel layouts
# -----------------------------------------------------------------------------
def _make_sel():
    """One-hot [1024, 25] selecting pool2's valid lanes (q*128 + r*4) in (h, w) order."""
    s = np.arange(NTAP)
    q, r = s // KSZ, s % KSZ
    sel = np.zeros((IMG2, NTAP), np.float32)
    sel[q * (4 * IMG) + r * 4, s] = 1.0
    return jnp.asarray(sel)


def init_params(key):
    """Torch-layout params, U(-1/sqrt(fan_in), 1/sqrt(fan_in)) like PyTorch."""
    def unif(k, shape, fan_in):
        bound = 1.0 / np.sqrt(fan_in)
        return jax.random.uniform(k, shape, jnp.float32, -bound, bound)

    ks = jax.random.split(key, 10)
    return {
        "conv1_w": unif(ks[0], (6, 3, 5, 5), 3 * 25),
        "conv1_b": unif(ks[1], (6,), 3 * 25),
        "conv2_w": unif(ks[2], (16, 6, 5, 5), 6 * 25),
        "conv2_b": unif(ks[3], (16,), 6 * 25),
        "fc1_w": unif(ks[4], (120, 16 * 25), 16 * 25),
        "fc1_b": unif(ks[5], (120,), 16 * 25),
        "fc2_w": unif(ks[6], (84, 120), 120),
        "fc2_b": unif(ks[7], (84,), 120),
        "fc3_w": unif(ks[8], (10, 84), 84),
        "fc3_b": unif(ks[9], (10,), 84),
    }


def pack_params(p):
    """One-time repack (done at init, not per forward)."""
    # Conv weights [OC, C, kh, kw] -> [OC_pad, (kh, kw, c_pad)]: each 5x5 tap's
    # channel block is a contiguous 8-wide slab matching the stacked conv operand.
    c1 = jnp.transpose(p["conv1_w"], (0, 2, 3, 1))                     # [6, 5, 5, 3]
    c1 = jnp.pad(c1, ((0, CPAD - 6), (0, 0), (0, 0), (0, CPAD - 3)))   # [8, 5, 5, 8]
    c2 = jnp.transpose(p["conv2_w"], (0, 2, 3, 1))                     # [16, 5, 5, 6]
    c2 = jnp.pad(c2, ((0, 0), (0, 0), (0, 0), (0, CPAD - 6)))          # [16, 5, 5, 8]
    return {
        "conv1_w": c1.reshape(CPAD, KSTACK),
        "conv1_b": jnp.pad(p["conv1_b"], (0, CPAD - 6)).reshape(CPAD, 1),
        "conv2_w": c2.reshape(16, KSTACK),
        "conv2_b": p["conv2_b"].reshape(16, 1),
        # fc weights stored [in, out]; `in` keeps torch's (c, h, w) flatten order.
        "fc1_w": p["fc1_w"].T, "fc1_b": p["fc1_b"].reshape(1, -1),
        "fc2_w": p["fc2_w"].T, "fc2_b": p["fc2_b"].reshape(1, -1),
        "fc3_w": p["fc3_w"].T, "fc3_b": p["fc3_b"].reshape(1, -1),
        "sel": _make_sel(),
    }


if __name__ == "__main__":
    key = jax.random.PRNGKey(0)
    k_params, k_x = jax.random.split(key)
    params = pack_params(init_params(k_params))

    # CIFAR-shaped input: batch=2, 3 channels, 32x32 (required so the flattened
    # feature size is 16*5*5 = 400, as the module's fc1 assumes).
    x = jax.random.normal(k_x, (2, 3, 32, 32), dtype=jnp.float32)

    out = neural_network_forward(x, params)
    out = jax.block_until_ready(out)
    assert out.shape == (2, 10) and out.dtype == jnp.float32
    assert bool(jnp.all(jnp.isfinite(out)))
    print("KERNEL_OK")
</pallas_src>

<mosaic_0001>
module attributes {stable_mosaic.version = 11 : i64} {
  func.func @_lenet_kernel(%arg0: i32, %arg1: memref<1x8x1024xf32, #tpu.memory_space<vmem>>, %arg2: memref<8x200xf32, #tpu.memory_space<vmem>>, %arg3: memref<8x1xf32, #tpu.memory_space<vmem>>, %arg4: memref<16x200xf32, #tpu.memory_space<vmem>>, %arg5: memref<16x1xf32, #tpu.memory_space<vmem>>, %arg6: memref<1024x25xf32, #tpu.memory_space<vmem>>, %arg7: memref<400x120xf32, #tpu.memory_space<vmem>>, %arg8: memref<1x120xf32, #tpu.memory_space<vmem>>, %arg9: memref<120x84xf32, #tpu.memory_space<vmem>>, %arg10: memref<1x84xf32, #tpu.memory_space<vmem>>, %arg11: memref<84x10xf32, #tpu.memory_space<vmem>>, %arg12: memref<1x10xf32, #tpu.memory_space<vmem>>, %arg13: memref<1x1x10xf32, #tpu.memory_space<vmem>>, %arg14: memref<1x400xf32, #tpu.memory_space<vmem>>) attributes {dimension_semantics = [#tpu.dimension_semantics<parallel>], iteration_bounds = array<i64: 2>, scalar_prefetch = 0 : i64, scratch_operands = 1 : i64, tpu.core_type = #tpu.core_type<tc>, window_params = [{transform_indices = @transform_0, window_bounds = array<i64: 1, 8, 1024>}, {pipeline_mode = #tpu.pipeline_mode<synchronous>, transform_indices = @transform_1, window_bounds = array<i64: 8, 200>}, {pipeline_mode = #tpu.pipeline_mode<synchronous>, transform_indices = @transform_2, window_bounds = array<i64: 8, 1>}, {pipeline_mode = #tpu.pipeline_mode<synchronous>, transform_indices = @transform_3, window_bounds = array<i64: 16, 200>}, {pipeline_mode = #tpu.pipeline_mode<synchronous>, transform_indices = @transform_4, window_bounds = array<i64: 16, 1>}, {pipeline_mode = #tpu.pipeline_mode<synchronous>, transform_indices = @transform_5, window_bounds = array<i64: 1024, 25>}, {pipeline_mode = #tpu.pipeline_mode<synchronous>, transform_indices = @transform_6, window_bounds = array<i64: 400, 120>}, {pipeline_mode = #tpu.pipeline_mode<synchronous>, transform_indices = @transform_7, window_bounds = array<i64: 1, 120>}, {pipeline_mode = #tpu.pipeline_mode<synchronous>, transform_indices = @transform_8, window_bounds = array<i64: 120, 84>}, {pipeline_mode = #tpu.pipeline_mode<synchronous>, transform_indices = @transform_9, window_bounds = array<i64: 1, 84>}, {pipeline_mode = #tpu.pipeline_mode<synchronous>, transform_indices = @transform_10, window_bounds = array<i64: 84, 10>}, {pipeline_mode = #tpu.pipeline_mode<synchronous>, transform_indices = @transform_11, window_bounds = array<i64: 1, 10>}, {transform_indices = @transform_12, window_bounds = array<i64: 1, 1, 10>}]} {
    %c0 = arith.constant 0 : index
    %c0_0 = arith.constant 0 : index
    %c0_1 = arith.constant 0 : index
    %0 = vector.load %arg1[%c0, %c0_0, %c0_1] : memref<1x8x1024xf32, #tpu.memory_space<vmem>>, vector<1x8x1024xf32>
    %1 = vector.shape_cast %0 : vector<1x8x1024xf32> to vector<8x1024xf32>
    %c1023_i32 = arith.constant 1023 : i32
    %2 = tpu.dynamic_rotate %1 by %c1023_i32 dim 1 : vector<8x1024xf32>, i32 -> vector<8x1024xf32>
    %c1022_i32 = arith.constant 1022 : i32
    %3 = tpu.dynamic_rotate %1 by %c1022_i32 dim 1 : vector<8x1024xf32>, i32 -> vector<8x1024xf32>
    %c1021_i32 = arith.constant 1021 : i32
    %4 = tpu.dynamic_rotate %1 by %c1021_i32 dim 1 : vector<8x1024xf32>, i32 -> vector<8x1024xf32>
    %c1020_i32 = arith.constant 1020 : i32
    %5 = tpu.dynamic_rotate %1 by %c1020_i32 dim 1 : vector<8x1024xf32>, i32 -> vector<8x1024xf32>
    %c992_i32 = arith.constant 992 : i32
    %6 = tpu.dynamic_rotate %1 by %c992_i32 dim 1 : vector<8x1024xf32>, i32 -> vector<8x1024xf32>
    %c991_i32 = arith.constant 991 : i32
    %7 = tpu.dynamic_rotate %1 by %c991_i32 dim 1 : vector<8x1024xf32>, i32 -> vector<8x1024xf32>
    %c990_i32 = arith.constant 990 : i32
    %8 = tpu.dynamic_rotate %1 by %c990_i32 dim 1 : vector<8x1024xf32>, i32 -> vector<8x1024xf32>
    %c989_i32 = arith.constant 989 : i32
    %9 = tpu.dynamic_rotate %1 by %c989_i32 dim 1 : vector<8x1024xf32>, i32 -> vector<8x1024xf32>
    %c988_i32 = arith.constant 988 : i32
    %10 = tpu.dynamic_rotate %1 by %c988_i32 dim 1 : vector<8x1024xf32>, i32 -> vector<8x1024xf32>
    %c960_i32 = arith.constant 960 : i32
    %11 = tpu.dynamic_rotate %1 by %c960_i32 dim 1 : vector<8x1024xf32>, i32 -> vector<8x1024xf32>
    %c959_i32 = arith.constant 959 : i32
    %12 = tpu.dynamic_rotate %1 by %c959_i32 dim 1 : vector<8x1024xf32>, i32 -> vector<8x1024xf32>
    %c958_i32 = arith.constant 958 : i32
    %13 = tpu.dynamic_rotate %1 by %c958_i32 dim 1 : vector<8x1024xf32>, i32 -> vector<8x1024xf32>
    %c957_i32 = arith.constant 957 : i32
    %14 = tpu.dynamic_rotate %1 by %c957_i32 dim 1 : vector<8x1024xf32>, i32 -> vector<8x1024xf32>
    %c956_i32 = arith.constant 956 : i32
    %15 = tpu.dynamic_rotate %1 by %c956_i32 dim 1 : vector<8x1024xf32>, i32 -> vector<8x1024xf32>
    %c928_i32 = arith.constant 928 : i32
    %16 = tpu.dynamic_rotate %1 by %c928_i32 dim 1 : vector<8x1024xf32>, i32 -> vector<8x1024xf32>
    %c927_i32 = arith.constant 927 : i32
    %17 = tpu.dynamic_rotate %1 by %c927_i32 dim 1 : vector<8x1024xf32>, i32 -> vector<8x1024xf32>
    %c926_i32 = arith.constant 926 : i32
    %18 = tpu.dynamic_rotate %1 by %c926_i32 dim 1 : vector<8x1024xf32>, i32 -> vector<8x1024xf32>
    %c925_i32 = arith.constant 925 : i32
    %19 = tpu.dynamic_rotate %1 by %c925_i32 dim 1 : vector<8x1024xf32>, i32 -> vector<8x1024xf32>
    %c924_i32 = arith.constant 924 : i32
    %20 = tpu.dynamic_rotate %1 by %c924_i32 dim 1 : vector<8x1024xf32>, i32 -> vector<8x1024xf32>
    %c896_i32 = arith.constant 896 : i32
    %21 = tpu.dynamic_rotate %1 by %c896_i32 dim 1 : vector<8x1024xf32>, i32 -> vector<8x1024xf32>
    %c895_i32 = arith.constant 895 : i32
    %22 = tpu.dynamic_rotate %1 by %c895_i32 dim 1 : vector<8x1024xf32>, i32 -> vector<8x1024xf32>
    %c894_i32 = arith.constant 894 : i32
    %23 = tpu.dynamic_rotate %1 by %c894_i32 dim 1 : vector<8x1024xf32>, i32 -> vector<8x1024xf32>
    %c893_i32 = arith.constant 893 : i32
    %24 = tpu.dynamic_rotate %1 by %c893_i32 dim 1 : vector<8x1024xf32>, i32 -> vector<8x1024xf32>
    %c892_i32 = arith.constant 892 : i32
    %25 = tpu.dynamic_rotate %1 by %c892_i32 dim 1 : vector<8x1024xf32>, i32 -> vector<8x1024xf32>
    %26 = tpu.concatenate %1, %2, %3, %4, %5, %6, %7, %8, %9, %10, %11, %12, %13, %14, %15, %16 in 0 : vector<8x1024xf32>, vector<8x1024xf32>, vector<8x1024xf32>, vector<8x1024xf32>, vector<8x1024xf32>, vector<8x1024xf32>, vector<8x1024xf32>, vector<8x1024xf32>, vector<8x1024xf32>, vector<8x1024xf32>, vector<8x1024xf32>, vector<8x1024xf32>, vector<8x1024xf32>, vector<8x1024xf32>, vector<8x1024xf32>, vector<8x1024xf32> -> vector<128x1024xf32>
    %27 = tpu.concatenate %17, %18, %19, %20, %21, %22, %23, %24, %25 in 0 : vector<8x1024xf32>, vector<8x1024xf32>, vector<8x1024xf32>, vector<8x1024xf32>, vector<8x1024xf32>, vector<8x1024xf32>, vector<8x1024xf32>, vector<8x1024xf32>, vector<8x1024xf32> -> vector<72x1024xf32>
    %28 = tpu.concatenate %26, %27 in 0 : vector<128x1024xf32>, vector<72x1024xf32> -> vector<200x1024xf32>
    %c0_2 = arith.constant 0 : index
    %c0_3 = arith.constant 0 : index
    %29 = vector.load %arg2[%c0_2, %c0_3] : memref<8x200xf32, #tpu.memory_space<vmem>>, vector<8x200xf32>
    %cst = arith.constant dense<0.000000e+00> : vector<8x1024xf32>
    %30 = tpu.matmul %29, %28, %cst {dimension_numbers = #tpu.dot_dimension_numbers<[1], [0], [0], [1], [0, 0, 1, 1], [], []>} : vector<8x200xf32>, vector<200x1024xf32>, vector<8x1024xf32> -> vector<8x1024xf32>
    %c0_4 = arith.constant 0 : index
    %c0_5 = arith.constant 0 : index
    %31 = vector.load %arg3[%c0_4, %c0_5] : memref<8x1xf32, #tpu.memory_space<vmem>>, vector<8x1xf32>
    %32 = vector.broadcast %31 : vector<8x1xf32> to vector<8x1024xf32>
    %33 = arith.addf %30, %32 : vector<8x1024xf32>
    %cst_6 = arith.constant 0.000000e+00 : f32
    %34 = vector.broadcast %cst_6 : f32 to vector<8x1024xf32>
    %35 = arith.maximumf %33, %34 : vector<8x1024xf32>
    %c1023_i32_7 = arith.constant 1023 : i32
    %36 = tpu.dynamic_rotate %35 by %c1023_i32_7 dim 1 : vector<8x1024xf32>, i32 -> vector<8x1024xf32>
    %37 = arith.maximumf %35, %36 : vector<8x1024xf32>
    %c992_i32_8 = arith.constant 992 : i32
    %38 = tpu.dynamic_rotate %37 by %c992_i32_8 dim 1 : vector<8x1024xf32>, i32 -> vector<8x1024xf32>
    %39 = arith.maximumf %37, %38 : vector<8x1024xf32>
    %c1022_i32_9 = arith.constant 1022 : i32
    %40 = tpu.dynamic_rotate %39 by %c1022_i32_9 dim 1 : vector<8x1024xf32>, i32 -> vector<8x1024xf32>
    %c1020_i32_10 = arith.constant 1020 : i32
    %41 = tpu.dynamic_rotate %39 by %c1020_i32_10 dim 1 : vector<8x1024xf32>, i32 -> vector<8x1024xf32>
    %c1018_i32 = arith.constant 1018 : i32
    %42 = tpu.dynamic_rotate %39 by %c1018_i32 dim 1 : vector<8x1024xf32>, i32 -> vector<8x1024xf32>
    %c1016_i32 = arith.constant 1016 : i32
    %43 = tpu.dynamic_rotate %39 by %c1016_i32 dim 1 : vector<8x1024xf32>, i32 -> vector<8x1024xf32>
    %c960_i32_11 = arith.constant 960 : i32
    %44 = tpu.dynamic_rotate %39 by %c960_i32_11 dim 1 : vector<8x1024xf32>, i32 -> vector<8x1024xf32>
    %c958_i32_12 = arith.constant 958 : i32
    %45 = tpu.dynamic_rotate %39 by %c958_i32_12 dim 1 : vector<8x1024xf32>, i32 -> vector<8x1024xf32>
    %c956_i32_13 = arith.constant 956 : i32
    %46 = tpu.dynamic_rotate %39 by %c956_i32_13 dim 1 : vector<8x1024xf32>, i32 -> vector<8x1024xf32>
    %c954_i32 = arith.constant 954 : i32
    %47 = tpu.dynamic_rotate %39 by %c954_i32 dim 1 : vector<8x1024xf32>, i32 -> vector<8x1024xf32>
    %c952_i32 = arith.constant 952 : i32
    %48 = tpu.dynamic_rotate %39 by %c952_i32 dim 1 : vector<8x1024xf32>, i32 -> vector<8x1024xf32>
    %c896_i32_14 = arith.constant 896 : i32
    %49 = tpu.dynamic_rotate %39 by %c896_i32_14 dim 1 : vector<8x1024xf32>, i32 -> vector<8x1024xf32>
    %c894_i32_15 = arith.constant 894 : i32
    %50 = tpu.dynamic_rotate %39 by %c894_i32_15 dim 1 : vector<8x1024xf32>, i32 -> vector<8x1024xf32>
    %c892_i32_16 = arith.constant 892 : i32
    %51 = tpu.dynamic_rotate %39 by %c892_i32_16 dim 1 : vector<8x1024xf32>, i32 -> vector<8x1024xf32>
    %c890_i32 = arith.constant 890 : i32
    %52 = tpu.dynamic_rotate %39 by %c890_i32 dim 1 : vector<8x1024xf32>, i32 -> vector<8x1024xf32>
    %c888_i32 = arith.constant 888 : i32
    %53 = tpu.dynamic_rotate %39 by %c888_i32 dim 1 : vector<8x1024xf32>, i32 -> vector<8x1024xf32>
    %c832_i32 = arith.constant 832 : i32
    %54 = tpu.dynamic_rotate %39 by %c832_i32 dim 1 : vector<8x1024xf32>, i32 -> vector<8x1024xf32>
    %c830_i32 = arith.constant 830 : i32
    %55 = tpu.dynamic_rotate %39 by %c830_i32 dim 1 : vector<8x1024xf32>, i32 -> vector<8x1024xf32>
    %c828_i32 = arith.constant 828 : i32
    %56 = tpu.dynamic_rotate %39 by %c828_i32 dim 1 : vector<8x1024xf32>, i32 -> vector<8x1024xf32>
    %c826_i32 = arith.constant 826 : i32
    %57 = tpu.dynamic_rotate %39 by %c826_i32 dim 1 : vector<8x1024xf32>, i32 -> vector<8x1024xf32>
    %c824_i32 = arith.constant 824 : i32
    %58 = tpu.dynamic_rotate %39 by %c824_i32 dim 1 : vector<8x1024xf32>, i32 -> vector<8x1024xf32>
    %c768_i32 = arith.constant 768 : i32
    %59 = tpu.dynamic_rotate %39 by %c768_i32 dim 1 : vector<8x1024xf32>, i32 -> vector<8x1024xf32>
    %c766_i32 = arith.constant 766 : i32
    %60 = tpu.dynamic_rotate %39 by %c766_i32 dim 1 : vector<8x1024xf32>, i32 -> vector<8x1024xf32>
    %c764_i32 = arith.constant 764 : i32
    %61 = tpu.dynamic_rotate %39 by %c764_i32 dim 1 : vector<8x1024xf32>, i32 -> vector<8x1024xf32>
    %c762_i32 = arith.constant 762 : i32
    %62 = tpu.dynamic_rotate %39 by %c762_i32 dim 1 : vector<8x1024xf32>, i32 -> vector<8x1024xf32>
    %c760_i32 = arith.constant 760 : i32
    %63 = tpu.dynamic_rotate %39 by %c760_i32 dim 1 : vector<8x1024xf32>, i32 -> vector<8x1024xf32>
    %64 = tpu.concatenate %39, %40, %41, %42, %43, %44, %45, %46, %47, %48, %49, %50, %51, %52, %53, %54 in 0 : vector<8x1024xf32>, vector<8x1024xf32>, vector<8x1024xf32>, vector<8x1024xf32>, vector<8x1024xf32>, vector<8x1024xf32>, vector<8x1024xf32>, vector<8x1024xf32>, vector<8x1024xf32>, vector<8x1024xf32>, vector<8x1024xf32>, vector<8x1024xf32>, vector<8x1024xf32>, vector<8x1024xf32>, vector<8x1024xf32>, vector<8x1024xf32> -> vector<128x1024xf32>
    %65 = tpu.concatenate %55, %56, %57, %58, %59, %60, %61, %62, %63 in 0 : vector<8x1024xf32>, vector<8x1024xf32>, vector<8x1024xf32>, vector<8x1024xf32>, vector<8x1024xf32>, vector<8x1024xf32>, vector<8x1024xf32>, vector<8x1024xf32>, vector<8x1024xf32> -> vector<72x1024xf32>
    %66 = tpu.concatenate %64, %65 in 0 : vector<128x1024xf32>, vector<72x1024xf32> -> vector<200x1024xf32>
    %c0_17 = arith.constant 0 : index
    %c0_18 = arith.constant 0 : index
    %67 = vector.load %arg4[%c0_17, %c0_18] : memref<16x200xf32, #tpu.memory_space<vmem>>, vector<16x200xf32>
    %cst_19 = arith.constant dense<0.000000e+00> : vector<16x1024xf32>
    %68 = tpu.matmul %67, %66, %cst_19 {dimension_numbers = #tpu.dot_dimension_numbers<[1], [0], [0], [1], [0, 0, 1, 1], [], []>} : vector<16x200xf32>, vector<200x1024xf32>, vector<16x1024xf32> -> vector<16x1024xf32>
    %c0_20 = arith.constant 0 : index
    %c0_21 = arith.constant 0 : index
    %69 = vector.load %arg5[%c0_20, %c0_21] : memref<16x1xf32, #tpu.memory_space<vmem>>, vector<16x1xf32>
    %70 = vector.broadcast %69 : vector<16x1xf32> to vector<16x1024xf32>
    %71 = arith.addf %68, %70 : vector<16x1024xf32>
    %cst_22 = arith.constant 0.000000e+00 : f32
    %72 = vector.broadcast %cst_22 : f32 to vector<16x1024xf32>
    %73 = arith.maximumf %71, %72 : vector<16x1024xf32>
    %c1022_i32_23 = arith.constant 1022 : i32
    %74 = tpu.dynamic_rotate %73 by %c1022_i32_23 dim 1 : vector<16x1024xf32>, i32 -> vector<16x1024xf32>
    %75 = arith.maximumf %73, %74 : vector<16x1024xf32>
    %c960_i32_24 = arith.constant 960 : i32
    %76 = tpu.dynamic_rotate %75 by %c960_i32_24 dim 1 : vector<16x1024xf32>, i32 -> vector<16x1024xf32>
    %77 = arith.maximumf %75, %76 : vector<16x1024xf32>
    %c0_25 = arith.constant 0 : index
    %c0_26 = arith.constant 0 : index
    %78 = vector.load %arg6[%c0_25, %c0_26] : memref<1024x25xf32, #tpu.memory_space<vmem>>, vector<1024x25xf32>
    %cst_27 = arith.constant dense<0.000000e+00> : vector<16x25xf32>
    %79 = tpu.matmul %77, %78, %cst_27 {dimension_numbers = #tpu.dot_dimension_numbers<[1], [0], [0], [1], [0, 0, 1, 1], [], []>} : vector<16x1024xf32>, vector<1024x25xf32>, vector<16x25xf32> -> vector<16x25xf32>
    %80 = vector.extract_strided_slice %79 {offsets = [0, 0], sizes = [1, 25], strides = [1, 1]} : vector<16x25xf32> to vector<1x25xf32>
    %c0_28 = arith.constant 0 : index
    %c0_29 = arith.constant 0 : index
    %81 = vector.load %arg14[%c0_28, %c0_29] : memref<1x400xf32, #tpu.memory_space<vmem>>, vector<1x25xf32>
    tpu.vector_store %arg14[%c0_28, %c0_29], %80 {strides = array<i32>} : memref<1x400xf32, #tpu.memory_space<vmem>>, vector<1x25xf32>,
    %82 = vector.extract_strided_slice %79 {offsets = [1, 0], sizes = [1, 25], strides = [1, 1]} : vector<16x25xf32> to vector<1x25xf32>
    %c0_30 = arith.constant 0 : index
    %c25 = arith.constant 25 : index
    %83 = vector.load %arg14[%c0_30, %c25] : memref<1x400xf32, #tpu.memory_space<vmem>>, vector<1x25xf32>
    tpu.vector_store %arg14[%c0_30, %c25], %82 {strides = array<i32>} : memref<1x400xf32, #tpu.memory_space<vmem>>, vector<1x25xf32>,
    %84 = vector.extract_strided_slice %79 {offsets = [2, 0], sizes = [1, 25], strides = [1, 1]} : vector<16x25xf32> to vector<1x25xf32>
    %c0_31 = arith.constant 0 : index
    %c50 = arith.constant 50 : index
    %85 = vector.load %arg14[%c0_31, %c50] : memref<1x400xf32, #tpu.memory_space<vmem>>, vector<1x25xf32>
    tpu.vector_store %arg14[%c0_31, %c50], %84 {strides = array<i32>} : memref<1x400xf32, #tpu.memory_space<vmem>>, vector<1x25xf32>,
    %86 = vector.extract_strided_slice %79 {offsets = [3, 0], sizes = [1, 25], strides = [1, 1]} : vector<16x25xf32> to vector<1x25xf32>
    %c0_32 = arith.constant 0 : index
    %c75 = arith.constant 75 : index
    %87 = vector.load %arg14[%c0_32, %c75] : memref<1x400xf32, #tpu.memory_space<vmem>>, vector<1x25xf32>
    tpu.vector_store %arg14[%c0_32, %c75], %86 {strides = array<i32>} : memref<1x400xf32, #tpu.memory_space<vmem>>, vector<1x25xf32>,
    %88 = vector.extract_strided_slice %79 {offsets = [4, 0], sizes = [1, 25], strides = [1, 1]} : vector<16x25xf32> to vector<1x25xf32>
    %c0_33 = arith.constant 0 : index
    %c100 = arith.constant 100 : index
    %89 = vector.load %arg14[%c0_33, %c100] : memref<1x400xf32, #tpu.memory_space<vmem>>, vector<1x25xf32>
    tpu.vector_store %arg14[%c0_33, %c100], %88 {strides = array<i32>} : memref<1x400xf32, #tpu.memory_space<vmem>>, vector<1x25xf32>,
    %90 = vector.extract_strided_slice %79 {offsets = [5, 0], sizes = [1, 25], strides = [1, 1]} : vector<16x25xf32> to vector<1x25xf32>
    %c0_34 = arith.constant 0 : index
    %c125 = arith.constant 125 : index
    %91 = vector.load %arg14[%c0_34, %c125] : memref<1x400xf32, #tpu.memory_space<vmem>>, vector<1x25xf32>
    tpu.vector_store %arg14[%c0_34, %c125], %90 {strides = array<i32>} : memref<1x400xf32, #tpu.memory_space<vmem>>, vector<1x25xf32>,
    %92 = vector.extract_strided_slice %79 {offsets = [6, 0], sizes = [1, 25], strides = [1, 1]} : vector<16x25xf32> to vector<1x25xf32>
    %c0_35 = arith.constant 0 : index
    %c150 = arith.constant 150 : index
    %93 = vector.load %arg14[%c0_35, %c150] : memref<1x400xf32, #tpu.memory_space<vmem>>, vector<1x25xf32>
    tpu.vector_store %arg14[%c0_35, %c150], %92 {strides = array<i32>} : memref<1x400xf32, #tpu.memory_space<vmem>>, vector<1x25xf32>,
    %94 = vector.extract_strided_slice %79 {offsets = [7, 0], sizes = [1, 25], strides = [1, 1]} : vector<16x25xf32> to vector<1x25xf32>
    %c0_36 = arith.constant 0 : index
    %c175 = arith.constant 175 : index
    %95 = vector.load %arg14[%c0_36, %c175] : memref<1x400xf32, #tpu.memory_space<vmem>>, vector<1x25xf32>
    tpu.vector_store %arg14[%c0_36, %c175], %94 {strides = array<i32>} : memref<1x400xf32, #tpu.memory_space<vmem>>, vector<1x25xf32>,
    %96 = vector.extract_strided_slice %79 {offsets = [8, 0], sizes = [1, 25], strides = [1, 1]} : vector<16x25xf32> to vector<1x25xf32>
    %c0_37 = arith.constant 0 : index
    %c200 = arith.constant 200 : index
    %97 = vector.load %arg14[%c0_37, %c200] : memref<1x400xf32, #tpu.memory_space<vmem>>, vector<1x25xf32>
    tpu.vector_store %arg14[%c0_37, %c200], %96 {strides = array<i32>} : memref<1x400xf32, #tpu.memory_space<vmem>>, vector<1x25xf32>,
    %98 = vector.extract_strided_slice %79 {offsets = [9, 0], sizes = [1, 25], strides = [1, 1]} : vector<16x25xf32> to vector<1x25xf32>
    %c0_38 = arith.constant 0 : index
    %c225 = arith.constant 225 : index
    %99 = vector.load %arg14[%c0_38, %c225] : memref<1x400xf32, #tpu.memory_space<vmem>>, vector<1x25xf32>
    tpu.vector_store %arg14[%c0_38, %c225], %98 {strides = array<i32>} : memref<1x400xf32, #tpu.memory_space<vmem>>, vector<1x25xf32>,
    %100 = vector.extract_strided_slice %79 {offsets = [10, 0], sizes = [1, 25], strides = [1, 1]} : vector<16x25xf32> to vector<1x25xf32>
    %c0_39 = arith.constant 0 : index
    %c250 = arith.constant 250 : index
    %101 = vector.load %arg14[%c0_39, %c250] : memref<1x400xf32, #tpu.memory_space<vmem>>, vector<1x25xf32>
    tpu.vector_store %arg14[%c0_39, %c250], %100 {strides = array<i32>} : memref<1x400xf32, #tpu.memory_space<vmem>>, vector<1x25xf32>,
    %102 = vector.extract_strided_slice %79 {offsets = [11, 0], sizes = [1, 25], strides = [1, 1]} : vector<16x25xf32> to vector<1x25xf32>
    %c0_40 = arith.constant 0 : index
    %c275 = arith.constant 275 : index
    %103 = vector.load %arg14[%c0_40, %c275] : memref<1x400xf32, #tpu.memory_space<vmem>>, vector<1x25xf32>
    tpu.vector_store %arg14[%c0_40, %c275], %102 {strides = array<i32>} : memref<1x400xf32, #tpu.memory_space<vmem>>, vector<1x25xf32>,
    %104 = vector.extract_strided_slice %79 {offsets = [12, 0], sizes = [1, 25], strides = [1, 1]} : vector<16x25xf32> to vector<1x25xf32>
    %c0_41 = arith.constant 0 : index
    %c300 = arith.constant 300 : index
    %105 = vector.load %arg14[%c0_41, %c300] : memref<1x400xf32, #tpu.memory_space<vmem>>, vector<1x25xf32>
    tpu.vector_store %arg14[%c0_41, %c300], %104 {strides = array<i32>} : memref<1x400xf32, #tpu.memory_space<vmem>>, vector<1x25xf32>,
    %106 = vector.extract_strided_slice %79 {offsets = [13, 0], sizes = [1, 25], strides = [1, 1]} : vector<16x25xf32> to vector<1x25xf32>
    %c0_42 = arith.constant 0 : index
    %c325 = arith.constant 325 : index
    %107 = vector.load %arg14[%c0_42, %c325] : memref<1x400xf32, #tpu.memory_space<vmem>>, vector<1x25xf32>
    tpu.vector_store %arg14[%c0_42, %c325], %106 {strides = array<i32>} : memref<1x400xf32, #tpu.memory_space<vmem>>, vector<1x25xf32>,
    %108 = vector.extract_strided_slice %79 {offsets = [14, 0], sizes = [1, 25], strides = [1, 1]} : vector<16x25xf32> to vector<1x25xf32>
    %c0_43 = arith.constant 0 : index
    %c350 = arith.constant 350 : index
    %109 = vector.load %arg14[%c0_43, %c350] : memref<1x400xf32, #tpu.memory_space<vmem>>, vector<1x25xf32>
    tpu.vector_store %arg14[%c0_43, %c350], %108 {strides = array<i32>} : memref<1x400xf32, #tpu.memory_space<vmem>>, vector<1x25xf32>,
    %110 = vector.extract_strided_slice %79 {offsets = [15, 0], sizes = [1, 25], strides = [1, 1]} : vector<16x25xf32> to vector<1x25xf32>
    %c0_44 = arith.constant 0 : index
    %c375 = arith.constant 375 : index
    %111 = vector.load %arg14[%c0_44, %c375] : memref<1x400xf32, #tpu.memory_space<vmem>>, vector<1x25xf32>
    tpu.vector_store %arg14[%c0_44, %c375], %110 {strides = array<i32>} : memref<1x400xf32, #tpu.memory_space<vmem>>, vector<1x25xf32>,
    %c0_45 = arith.constant 0 : index
    %c0_46 = arith.constant 0 : index
    %112 = vector.load %arg14[%c0_45, %c0_46] : memref<1x400xf32, #tpu.memory_space<vmem>>, vector<1x400xf32>
    %c0_47 = arith.constant 0 : index
    %c0_48 = arith.constant 0 : index
    %113 = vector.load %arg7[%c0_47, %c0_48] : memref<400x120xf32, #tpu.memory_space<vmem>>, vector<400x120xf32>
    %cst_49 = arith.constant dense<0.000000e+00> : vector<1x120xf32>
    %114 = tpu.matmul %112, %113, %cst_49 {dimension_numbers = #tpu.dot_dimension_numbers<[1], [0], [0], [1], [0, 0, 1, 1], [], []>} : vector<1x400xf32>, vector<400x120xf32>, vector<1x120xf32> -> vector<1x120xf32>
    %c0_50 = arith.constant 0 : index
    %c0_51 = arith.constant 0 : index
    %115 = vector.load %arg8[%c0_50, %c0_51] : memref<1x120xf32, #tpu.memory_space<vmem>>, vector<1x120xf32>
    %116 = arith.addf %114, %115 : vector<1x120xf32>
    %cst_52 = arith.constant 0.000000e+00 : f32
    %117 = vector.broadcast %cst_52 : f32 to vector<1x120xf32>
    %118 = arith.maximumf %116, %117 : vector<1x120xf32>
    %c0_53 = arith.constant 0 : index
    %c0_54 = arith.constant 0 : index
    %119 = vector.load %arg9[%c0_53, %c0_54] : memref<120x84xf32, #tpu.memory_space<vmem>>, vector<120x84xf32>
    %cst_55 = arith.constant dense<0.000000e+00> : vector<1x84xf32>
    %120 = tpu.matmul %118, %119, %cst_55 {dimension_numbers = #tpu.dot_dimension_numbers<[1], [0], [0], [1], [0, 0, 1, 1], [], []>} : vector<1x120xf32>, vector<120x84xf32>, vector<1x84xf32> -> vector<1x84xf32>
    %c0_56 = arith.constant 0 : index
    %c0_57 = arith.constant 0 : index
    %121 = vector.load %arg10[%c0_56, %c0_57] : memref<1x84xf32, #tpu.memory_space<vmem>>, vector<1x84xf32>
    %122 = arith.addf %120, %121 : vector<1x84xf32>
    %cst_58 = arith.constant 0.000000e+00 : f32
    %123 = vector.broadcast %cst_58 : f32 to vector<1x84xf32>
    %124 = arith.maximumf %122, %123 : vector<1x84xf32>
    %c0_59 = arith.constant 0 : index
    %c0_60 = arith.constant 0 : index
    %125 = vector.load %arg11[%c0_59, %c0_60] : memref<84x10xf32, #tpu.memory_space<vmem>>, vector<84x10xf32>
    %cst_61 = arith.constant dense<0.000000e+00> : vector<1x10xf32>
    %126 = tpu.matmul %124, %125, %cst_61 {dimension_numbers = #tpu.dot_dimension_numbers<[1], [0], [0], [1], [0, 0, 1, 1], [], []>} : vector<1x84xf32>, vector<84x10xf32>, vector<1x10xf32> -> vector<1x10xf32>
    %c0_62 = arith.constant 0 : index
    %c0_63 = arith.constant 0 : index
    %127 = vector.load %arg12[%c0_62, %c0_63] : memref<1x10xf32, #tpu.memory_space<vmem>>, vector<1x10xf32>
    %128 = arith.addf %126, %127 : vector<1x10xf32>
    %c0_64 = arith.constant 0 : index
    %c0_65 = arith.constant 0 : index
    %c0_66 = arith.constant 0 : index
    %129 = vector.load %arg13[%c0_64, %c0_65, %c0_66] : memref<1x1x10xf32, #tpu.memory_space<vmem>>, vector<1x1x10xf32>
    %130 = vector.shape_cast %129 : vector<1x1x10xf32> to vector<1x10xf32>
    %131 = vector.shape_cast %128 : vector<1x10xf32> to vector<1x1x10xf32>
    tpu.vector_store %arg13[%c0_64, %c0_65, %c0_66], %131 {strides = array<i32>} : memref<1x1x10xf32, #tpu.memory_space<vmem>>, vector<1x1x10xf32>,
    return
  }
  func.func @transform_0(%arg0: i32) -> (i32, i32, i32) {
    %c0_i32 = arith.constant 0 : i32
    %c0_i32_0 = arith.constant 0 : i32
    %c0_i32_1 = arith.constant 0 : i32
    return %arg0, %c0_i32, %c0_i32_0 : i32, i32, i32
  }
  func.func @transform_1(%arg0: i32) -> (i32, i32) {
    %c0_i32 = arith.constant 0 : i32
    %c0_i32_0 = arith.constant 0 : i32
    %c0_i32_1 = arith.constant 0 : i32
    return %c0_i32, %c0_i32_0 : i32, i32
  }
  func.func @transform_2(%arg0: i32) -> (i32, i32) {
    %c0_i32 = arith.constant 0 : i32
    %c0_i32_0 = arith.constant 0 : i32
    %c0_i32_1 = arith.constant 0 : i32
    return %c0_i32, %c0_i32_0 : i32, i32
  }
  func.func @transform_3(%arg0: i32) -> (i32, i32) {
    %c0_i32 = arith.constant 0 : i32
    %c0_i32_0 = arith.constant 0 : i32
    %c0_i32_1 = arith.constant 0 : i32
    return %c0_i32, %c0_i32_0 : i32, i32
  }
  func.func @transform_4(%arg0: i32) -> (i32, i32) {
    %c0_i32 = arith.constant 0 : i32
    %c0_i32_0 = arith.constant 0 : i32
    %c0_i32_1 = arith.constant 0 : i32
    return %c0_i32, %c0_i32_0 : i32, i32
  }
  func.func @transform_5(%arg0: i32) -> (i32, i32) {
    %c0_i32 = arith.constant 0 : i32
    %c0_i32_0 = arith.constant 0 : i32
    %c0_i32_1 = arith.constant 0 : i32
    return %c0_i32, %c0_i32_0 : i32, i32
  }
  func.func @transform_6(%arg0: i32) -> (i32, i32) {
    %c0_i32 = arith.constant 0 : i32
    %c0_i32_0 = arith.constant 0 : i32
    %c0_i32_1 = arith.constant 0 : i32
    return %c0_i32, %c0_i32_0 : i32, i32
  }
  func.func @transform_7(%arg0: i32) -> (i32, i32) {
    %c0_i32 = arith.constant 0 : i32
    %c0_i32_0 = arith.constant 0 : i32
    %c0_i32_1 = arith.constant 0 : i32
    return %c0_i32, %c0_i32_0 : i32, i32
  }
  func.func @transform_8(%arg0: i32) -> (i32, i32) {
    %c0_i32 = arith.constant 0 : i32
    %c0_i32_0 = arith.constant 0 : i32
    %c0_i32_1 = arith.constant 0 : i32
    return %c0_i32, %c0_i32_0 : i32, i32
  }
  func.func @transform_9(%arg0: i32) -> (i32, i32) {
    %c0_i32 = arith.constant 0 : i32
    %c0_i32_0 = arith.constant 0 : i32
    %c0_i32_1 = arith.constant 0 : i32
    return %c0_i32, %c0_i32_0 : i32, i32
  }
  func.func @transform_10(%arg0: i32) -> (i32, i32) {
    %c0_i32 = arith.constant 0 : i32
    %c0_i32_0 = arith.constant 0 : i32
    %c0_i32_1 = arith.constant 0 : i32
    return %c0_i32, %c0_i32_0 : i32, i32
  }
  func.func @transform_11(%arg0: i32) -> (i32, i32) {
    %c0_i32 = arith.constant 0 : i32
    %c0_i32_0 = arith.constant 0 : i32
    %c0_i32_1 = arith.constant 0 : i32
    return %c0_i32, %c0_i32_0 : i32, i32
  }
  func.func @transform_12(%arg0: i32) -> (i32, i32, i32) {
    %c0_i32 = arith.constant 0 : i32
    %c0_i32_0 = arith.constant 0 : i32
    %c0_i32_1 = arith.constant 0 : i32
    return %arg0, %c0_i32, %c0_i32_0 : i32, i32, i32
  }
}

</mosaic_0001>

<llo_original>
// kernel: neural_network_forward.1
$region0: #{neural_network_forward.1}
  #allocation0 [shape = 'u32[]', space=smem, size = 0x4, offset = 0x4, fixed_abs, tag = 'smem constant byte address 0x4 - core index']
  #allocation1 [shape = 'u32[144,128]{1,0:T(1,128)}', space=vmem, size = 0x12000, scoped, tag = 'internal scratch']
  #allocation2 [shape = 'f32[1,400]{1,0:T(1,128)}', space=vmem, size = 0x800, scoped, tag = 'scratch operand']
  %s0 = inlined_call_operand.vmem [shape: f32[2,8,1024], index: 0, kind: input, shape index: {}]
  %s1 = inlined_call_operand.vmem [shape: f32[8,200], index: 1, kind: input, shape index: {}]
  %s2 = inlined_call_operand.vmem [shape: f32[8,1], index: 2, kind: input, shape index: {}]
  %s3 = inlined_call_operand.vmem [shape: f32[16,200], index: 3, kind: input, shape index: {}]
  %s4 = inlined_call_operand.vmem [shape: f32[16,1], index: 4, kind: input, shape index: {}]
  %s5 = inlined_call_operand.vmem [shape: f32[1024,25], index: 5, kind: input, shape index: {}]
  %s6 = inlined_call_operand.vmem [shape: f32[400,120], index: 6, kind: input, shape index: {}]
  %s7 = inlined_call_operand.vmem [shape: f32[1,120], index: 7, kind: input, shape index: {}]
  %s8 = inlined_call_operand.vmem [shape: f32[120,84], index: 8, kind: input, shape index: {}]
  %s9 = inlined_call_operand.vmem [shape: f32[1,84], index: 9, kind: input, shape index: {}]
  %s10 = inlined_call_operand.vmem [shape: f32[84,10], index: 10, kind: input, shape index: {}]
  %s11 = inlined_call_operand.vmem [shape: f32[1,10], index: 11, kind: input, shape index: {}]
  %s12 = inlined_call_operand.hbm [shape: f32[2,1,10], index: 12, kind: output, shape index: {}]
  %s13 = sld [smem:[#allocation0]]
  $region81: #{neural_network_forward.1} parent=0
    _
  %s15 = ssub.s32 1, %s13
  %s16 = scalar_select 0, %s15, %s13
  $region1: #{neural_network_forward.1} parent=0
    #allocation3 [shape = 'u8[1024]{0}', space=vmem, size = 0x400, scoped, tag = 'output window, operand 0']
    #allocation4 [shape = 's32[2]{0}', space=sflag, size = 0x8, scoped, tag = 'scoped memory for neural_network_forward.1']
    %17 = vsyncpa [#allocation4], 0
    %s18 = scalar_lea.sflag [#allocation4], 1
    %19 = vsyncpa %s18, 0
    loop: start=0, step=1, limit=4
    $region2: #{neural_network_forward.1} parent=1 // loop_pre_header
      _
    $region3: #{neural_network_forward.1} parent=1 // loop_header
      %s21 = sphi 0, %s25
      %p22 = scmp.ge.s32.totalorder %s21, 4
      %s31 = sphi 0, %s33
      %s34 = sphi 0, %s31
      %s35 = sphi 0, %s34
      %s51 = sphi 0, %s35
      %s55 = sphi 0, %s55
      %s57 = sphi 0, %s55
      %s58 = sphi 0, %s57
      %s72 = sphi 0, %s58
      %s76 = sphi 0, %s76
      %s78 = sphi 0, %s76
      %s79 = sphi 0, %s78
      %s93 = sphi 0, %s79
      %s97 = sphi 0, %s97
      %s99 = sphi 0, %s97
      %s100 = sphi 0, %s99
      %s114 = sphi 0, %s100
      %s118 = sphi 0, %s118
      %s120 = sphi 0, %s118
      %s121 = sphi 0, %s120
      %s135 = sphi 0, %s121
      %s139 = sphi 0, %s139
      %s141 = sphi 0, %s139
      %s142 = sphi 0, %s141
      %s156 = sphi 0, %s142
      %s160 = sphi 0, %s160
      %s162 = sphi 0, %s160
      %s163 = sphi 0, %s162
      %s177 = sphi 0, %s163
      %s181 = sphi 0, %s181
      %s183 = sphi 0, %s181
      %s184 = sphi 0, %s183
      %s198 = sphi 0, %s184
      %s202 = sphi 0, %s202
      %s204 = sphi 0, %s202
      %s205 = sphi 0, %s204
      %s219 = sphi 0, %s205
      %s223 = sphi 0, %s223
      %s225 = sphi 0, %s223
      %s226 = sphi 0, %s225
      %s240 = sphi 0, %s226
      %s244 = sphi 0, %s244
      %s246 = sphi 0, %s244
      %s247 = sphi 0, %s246
      %s261 = sphi 0, %s247
      %s265 = sphi 0, %s265
      %s267 = sphi 0, %s265
      %s268 = sphi 0, %s267
      %s282 = sphi 0, %s268
      %s288 = sphi 0, %s290
      %s291 = sphi 0, %s288
      %s292 = sphi 0, %s291
      %s308 = sphi 0, %s292
    $region4: #{neural_network_forward.1} parent=1 // loop_header_branch
      %24 = sbr.rel (%p22) target = $region8
    $region5: #{neural_network_forward.1} parent=1 // loop_body
      %s26 = ssub.s32 %s21, 1
      %s27 = ssub.s32 %s21, 2
      %s28 = sadd.s32 %s21, 1
      %s29 = ssub.s32 %s21, %s28
      %p30 = scmp.eq.s32.totalorder %s29, 0
      %s32 = sadd.s32 %s31, 1
      %s33 = scalar_select %p30, %s31, %s32
      %p36 = pneg %p30
      %p37 = scmp.eq.s32.totalorder %s21, 1
      %p38 = por %p36, %p37
      %p39 = scmp.ne.s32.totalorder %s31, %s34
      %p40 = scmp.eq.s32.totalorder %s21, 0
      %p41 = por %p39, %p40
      %p42 = scmp.ne.s32.totalorder %s31, %s34
      %p43 = scmp.eq.s32.totalorder %s26, 1
      %p44 = por %p42, %p43
      %p45 = scmp.ne.s32.totalorder %s34, %s35
      %p46 = scmp.eq.s32.totalorder %s26, 0
      %p47 = por %p45, %p46
      %p48 = scmp.ne.s32.totalorder %s34, %s35
      %p49 = scmp.eq.s32.totalorder %s27, 1
      %p50 = por %p48, %p49
      %p52 = scmp.ne.s32.totalorder %s35, %s51
      %p53 = scmp.eq.s32.totalorder %s27, 0
      %p54 = por %p52, %p53
      %s56 = sadd.s32 %s55, 1
      %p59 = scmp.eq.s32.totalorder %s21, 1
      %p60 = scmp.ne.s32.totalorder %s55, %s57
      %p61 = scmp.eq.s32.totalorder %s21, 0
      %p62 = por %p60, %p61
      %p63 = scmp.ne.s32.totalorder %s55, %s57
      %p64 = scmp.eq.s32.totalorder %s26, 1
      %p65 = por %p63, %p64
      %p66 = scmp.ne.s32.totalorder %s57, %s58
      %p67 = scmp.eq.s32.totalorder %s26, 0
      %p68 = por %p66, %p67
      %p69 = scmp.ne.s32.totalorder %s57, %s58
      %p70 = scmp.eq.s32.totalorder %s27, 1
      %p71 = por %p69, %p70
      %p73 = scmp.ne.s32.totalorder %s58, %s72
      %p74 = scmp.eq.s32.totalorder %s27, 0
      %p75 = por %p73, %p74
      %s77 = sadd.s32 %s76, 1
      %p80 = scmp.eq.s32.totalorder %s21, 1
      %p81 = scmp.ne.s32.totalorder %s76, %s78
      %p82 = scmp.eq.s32.totalorder %s21, 0
      %p83 = por %p81, %p82
      %p84 = scmp.ne.s32.totalorder %s76, %s78
      %p85 = scmp.eq.s32.totalorder %s26, 1
      %p86 = por %p84, %p85
      %p87 = scmp.ne.s32.totalorder %s78, %s79
      %p88 = scmp.eq.s32.totalorder %s26, 0
      %p89 = por %p87, %p88
      %p90 = scmp.ne.s32.totalorder %s78, %s79
      %p91 = scmp.eq.s32.totalorder %s27, 1
      %p92 = por %p90, %p91
      %p94 = scmp.ne.s32.totalorder %s79, %s93
      %p95 = scmp.eq.s32.totalorder %s27, 0
      %p96 = por %p94, %p95
      %s98 = sadd.s32 %s97, 1
      %p101 = scmp.eq.s32.totalorder %s21, 1
      %p102 = scmp.ne.s32.totalorder %s97, %s99
      %p103 = scmp.eq.s32.totalorder %s21, 0
      %p104 = por %p102, %p103
      %p105 = scmp.ne.s32.totalorder %s97, %s99
      %p106 = scmp.eq.s32.totalorder %s26, 1
      %p107 = por %p105, %p106
      %p108 = scmp.ne.s32.totalorder %s99, %s100
      %p109 = scmp.eq.s32.totalorder %s26, 0
      %p110 = por %p108, %p109
      %p111 = scmp.ne.s32.totalorder %s99, %s100
      %p112 = scmp.eq.s32.totalorder %s27, 1
      %p113 = por %p111, %p112
      %p115 = scmp.ne.s32.totalorder %s100, %s114
      %p116 = scmp.eq.s32.totalorder %s27, 0
      %p117 = por %p115, %p116
      %s119 = sadd.s32 %s118, 1
      %p122 = scmp.eq.s32.totalorder %s21, 1
      %p123 = scmp.ne.s32.totalorder %s118, %s120
      %p124 = scmp.eq.s32.totalorder %s21, 0
      %p125 = por %p123, %p124
      %p126 = scmp.ne.s32.totalorder %s118, %s120
      %p127 = scmp.eq.s32.totalorder %s26, 1
      %p128 = por %p126, %p127
      %p129 = scmp.ne.s32.totalorder %s120, %s121
      %p130 = scmp.eq.s32.totalorder %s26, 0
      %p131 = por %p129, %p130
      %p132 = scmp.ne.s32.totalorder %s120, %s121
      %p133 = scmp.eq.s32.totalorder %s27, 1
      %p134 = por %p132, %p133
      %p136 = scmp.ne.s32.totalorder %s121, %s135
      %p137 = scmp.eq.s32.totalorder %s27, 0
      %p138 = por %p136, %p137
      %s140 = sadd.s32 %s139, 1
      %p143 = scmp.eq.s32.totalorder %s21, 1
      %p144 = scmp.ne.s32.totalorder %s139, %s141
      %p145 = scmp.eq.s32.totalorder %s21, 0
      %p146 = por %p144, %p145
      %p147 = scmp.ne.s32.totalorder %s139, %s141
      %p148 = scmp.eq.s32.totalorder %s26, 1
      %p149 = por %p147, %p148
      %p150 = scmp.ne.s32.totalorder %s141, %s142
      %p151 = scmp.eq.s32.totalorder %s26, 0
      %p152 = por %p150, %p151
      %p153 = scmp.ne.s32.totalorder %s141, %s142
      %p154 = scmp.eq.s32.totalorder %s27, 1
      %p155 = por %p153, %p154
      %p157 = scmp.ne.s32.totalorder %s142, %s156
      %p158 = scmp.eq.s32.totalorder %s27, 0
      %p159 = por %p157, %p158
      %s161 = sadd.s32 %s160, 1
      %p164 = scmp.eq.s32.totalorder %s21, 1
      %p165 = scmp.ne.s32.totalorder %s160, %s162
      %p166 = scmp.eq.s32.totalorder %s21, 0
      %p167 = por %p165, %p166
      %p168 = scmp.ne.s32.totalorder %s160, %s162
      %p169 = scmp.eq.s32.totalorder %s26, 1
      %p170 = por %p168, %p169
      %p171 = scmp.ne.s32.totalorder %s162, %s163
      %p172 = scmp.eq.s32.totalorder %s26, 0
      %p173 = por %p171, %p172
      %p174 = scmp.ne.s32.totalorder %s162, %s163
      %p175 = scmp.eq.s32.totalorder %s27, 1
      %p176 = por %p174, %p175
      %p178 = scmp.ne.s32.totalorder %s163, %s177
      %p179 = scmp.eq.s32.totalorder %s27, 0
      %p180 = por %p178, %p179
      %s182 = sadd.s32 %s181, 1
      %p185 = scmp.eq.s32.totalorder %s21, 1
      %p186 = scmp.ne.s32.totalorder %s181, %s183
      %p187 = scmp.eq.s32.totalorder %s21, 0
      %p188 = por %p186, %p187
      %p189 = scmp.ne.s32.totalorder %s181, %s183
      %p190 = scmp.eq.s32.totalorder %s26, 1
      %p191 = por %p189, %p190
      %p192 = scmp.ne.s32.totalorder %s183, %s184
      %p193 = scmp.eq.s32.totalorder %s26, 0
      %p194 = por %p192, %p193
      %p195 = scmp.ne.s32.totalorder %s183, %s184
      %p196 = scmp.eq.s32.totalorder %s27, 1
      %p197 = por %p195, %p196
      %p199 = scmp.ne.s32.totalorder %s184, %s198
      %p200 = scmp.eq.s32.totalorder %s27, 0
      %p201 = por %p199, %p200
      %s203 = sadd.s32 %s202, 1
      %p206 = scmp.eq.s32.totalorder %s21, 1
      %p207 = scmp.ne.s32.totalorder %s202, %s204
      %p208 = scmp.eq.s32.totalorder %s21, 0
      %p209 = por %p207, %p208
      %p210 = scmp.ne.s32.totalorder %s202, %s204
      %p211 = scmp.eq.s32.totalorder %s26, 1
      %p212 = por %p210, %p211
      %p213 = scmp.ne.s32.totalorder %s204, %s205
      %p214 = scmp.eq.s32.totalorder %s26, 0
      %p215 = por %p213, %p214
      %p216 = scmp.ne.s32.totalorder %s204, %s205
      %p217 = scmp.eq.s32.totalorder %s27, 1
      %p218 = por %p216, %p217
      %p220 = scmp.ne.s32.totalorder %s205, %s219
      %p221 = scmp.eq.s32.totalorder %s27, 0
      %p222 = por %p220, %p221
      %s224 = sadd.s32 %s223, 1
      %p227 = scmp.eq.s32.totalorder %s21, 1
      %p228 = scmp.ne.s32.totalorder %s223, %s225
      %p229 = scmp.eq.s32.totalorder %s21, 0
      %p230 = por %p228, %p229
      %p231 = scmp.ne.s32.totalorder %s223, %s225
      %p232 = scmp.eq.s32.totalorder %s26, 1
      %p233 = por %p231, %p232
      %p234 = scmp.ne.s32.totalorder %s225, %s226
      %p235 = scmp.eq.s32.totalorder %s26, 0
      %p236 = por %p234, %p235
      %p237 = scmp.ne.s32.totalorder %s225, %s226
      %p238 = scmp.eq.s32.totalorder %s27, 1
      %p239 = por %p237, %p238
      %p241 = scmp.ne.s32.totalorder %s226, %s240
      %p242 = scmp.eq.s32.totalorder %s27, 0
      %p243 = por %p241, %p242
      %s245 = sadd.s32 %s244, 1
      %p248 = scmp.eq.s32.totalorder %s21, 1
      %p249 = scmp.ne.s32.totalorder %s244, %s246
      %p250 = scmp.eq.s32.totalorder %s21, 0
      %p251 = por %p249, %p250
      %p252 = scmp.ne.s32.totalorder %s244, %s246
      %p253 = scmp.eq.s32.totalorder %s26, 1
      %p254 = por %p252, %p253
      %p255 = scmp.ne.s32.totalorder %s246, %s247
      %p256 = scmp.eq.s32.totalorder %s26, 0
      %p257 = por %p255, %p256
      %p258 = scmp.ne.s32.totalorder %s246, %s247
      %p259 = scmp.eq.s32.totalorder %s27, 1
      %p260 = por %p258, %p259
      %p262 = scmp.ne.s32.totalorder %s247, %s261
      %p263 = scmp.eq.s32.totalorder %s27, 0
      %p264 = por %p262, %p263
      %s266 = sadd.s32 %s265, 1
      %p269 = scmp.eq.s32.totalorder %s21, 1
      %p270 = scmp.ne.s32.totalorder %s265, %s267
      %p271 = scmp.eq.s32.totalorder %s21, 0
      %p272 = por %p270, %p271
      %p273 = scmp.ne.s32.totalorder %s265, %s267
      %p274 = scmp.eq.s32.totalorder %s26, 1
      %p275 = por %p273, %p274
      %p276 = scmp.ne.s32.totalorder %s267, %s268
      %p277 = scmp.eq.s32.totalorder %s26, 0
      %p278 = por %p276, %p277
      %p279 = scmp.ne.s32.totalorder %s267, %s268
      %p280 = scmp.eq.s32.totalorder %s27, 1
      %p281 = por %p279, %p280
      %p283 = scmp.ne.s32.totalorder %s268, %s282
      %p284 = scmp.eq.s32.totalorder %s27, 0
      %p285 = por %p283, %p284
      %s286 = ssub.s32 %s21, %s28
      %p287 = scmp.eq.s32.totalorder %s286, 0
      %s289 = sadd.s32 %s288, 1
      %s290 = scalar_select %p287, %s288, %s289
      %p293 = pneg %p287
      %p294 = scmp.eq.s32.totalorder %s21, 1
      %p295 = por %p293, %p294
      %p296 = scmp.ne.s32.totalorder %s288, %s291
      %p297 = scmp.eq.s32.totalorder %s21, 0
      %p298 = por %p296, %p297
      %p299 = scmp.ne.s32.totalorder %s288, %s291
      %p300 = scmp.eq.s32.totalorder %s26, 1
      %p301 = por %p299, %p300
      %p302 = scmp.ne.s32.totalorder %s291, %s292
      %p303 = scmp.eq.s32.totalorder %s26, 0
      %p304 = por %p302, %p303
      %p305 = scmp.ne.s32.totalorder %s291, %s292
      %p306 = scmp.eq.s32.totalorder %s27, 1
      %p307 = por %p305, %p306
      %p309 = scmp.ne.s32.totalorder %s292, %s308
      %p310 = scmp.eq.s32.totalorder %s27, 0
      %p311 = por %p309, %p310
      %p312 = scmp.le.s32.totalorder 1, %s21
      %p313 = scmp.lt.s32.totalorder %s21, 3
      %p314 = pnand %p312, %p313
      %p315 = pneg %p314
      // Predicated region
      $region9: #{neural_network_forward.1} parent=5 // pred_check
        _
      $region10: #{neural_network_forward.1} parent=5 // pred_check_branch
        %317 = sbr.rel (%p314) target = $region12
      $region11: #{neural_network_forward.1} parent=5 // pred_region
        %s318 = ssub.s32 %s21, 1
        // Predicated region
        $region13: #{neural_network_forward.1} parent=11 // pred_check
          %p319 = pneg %p68
        $region14: #{neural_network_forward.1} parent=11 // pred_check_branch
          %321 = sbr.rel (%p319) target = $region16
        $region15: #{neural_network_forward.1} parent=11 // pred_region
          _
        $region16: #{neural_network_forward.1} parent=11 // pred_fallthru
          _
        // Predicated region
        $region17: #{neural_network_forward.1} parent=11 // pred_check
          %p322 = pneg %p89
        $region18: #{neural_network_forward.1} parent=11 // pred_check_branch
          %324 = sbr.rel (%p322) target = $region20
        $region19: #{neural_network_forward.1} parent=11 // pred_region
          _
        $region20: #{neural_network_forward.1} parent=11 // pred_fallthru
          _
        // Predicated region
        $region21: #{neural_network_forward.1} parent=11 // pred_check
          %p325 = pneg %p110
        $region22: #{neural_network_forward.1} parent=11 // pred_check_branch
          %327 = sbr.rel (%p325) target = $region24
        $region23: #{neural_network_forward.1} parent=11 // pred_region
          _
        $region24: #{neural_network_forward.1} parent=11 // pred_fallthru
          _
        // Predicated region
        $region25: #{neural_network_forward.1} parent=11 // pred_check
          %p328 = pneg %p131
        $region26: #{neural_network_forward.1} parent=11 // pred_check_branch
          %330 = sbr.rel (%p328) target = $region28
        $region27: #{neural_network_forward.1} parent=11 // pred_region
          _
        $region28: #{neural_network_forward.1} parent=11 // pred_fallthru
          _
        // Predicated region
        $region29: #{neural_network_forward.1} parent=11 // pred_check
          %p331 = pneg %p152
        $region30: #{neural_network_forward.1} parent=11 // pred_check_branch
          %333 = sbr.rel (%p331) target = $region32
        $region31: #{neural_network_forward.1} parent=11 // pred_region
          _
        $region32: #{neural_network_forward.1} parent=11 // pred_fallthru
          _
        // Predicated region
        $region33: #{neural_network_forward.1} parent=11 // pred_check
          %p334 = pneg %p173
        $region34: #{neural_network_forward.1} parent=11 // pred_check_branch
          %336 = sbr.rel (%p334) target = $region36
        $region35: #{neural_network_forward.1} parent=11 // pred_region
          _
        $region36: #{neural_network_forward.1} parent=11 // pred_fallthru
          _
        // Predicated region
        $region37: #{neural_network_forward.1} parent=11 // pred_check
          %p337 = pneg %p194
        $region38: #{neural_network_forward.1} parent=11 // pred_check_branch
          %339 = sbr.rel (%p337) target = $region40
        $region39: #{neural_network_forward.1} parent=11 // pred_region
          _
        $region40: #{neural_network_forward.1} parent=11 // pred_fallthru
          _
        // Predicated region
        $region41: #{neural_network_forward.1} parent=11 // pred_check
          %p340 = pneg %p215
        $region42: #{neural_network_forward.1} parent=11 // pred_check_branch
          %342 = sbr.rel (%p340) target = $region44
        $region43: #{neural_network_forward.1} parent=11 // pred_region
          _
        $region44: #{neural_network_forward.1} parent=11 // pred_fallthru
          _
        // Predicated region
        $region45: #{neural_network_forward.1} parent=11 // pred_check
          %p343 = pneg %p236
        $region46: #{neural_network_forward.1} parent=11 // pred_check_branch
          %345 = sbr.rel (%p343) target = $region48
        $region47: #{neural_network_forward.1} parent=11 // pred_region
          _
        $region48: #{neural_network_forward.1} parent=11 // pred_fallthru
          _
        // Predicated region
        $region49: #{neural_network_forward.1} parent=11 // pred_check
          %p346 = pneg %p257
        $region50: #{neural_network_forward.1} parent=11 // pred_check_branch
          %348 = sbr.rel (%p346) target = $region52
        $region51: #{neural_network_forward.1} parent=11 // pred_region
          _
        $region52: #{neural_network_forward.1} parent=11 // pred_fallthru
          _
        // Predicated region
        $region53: #{neural_network_forward.1} parent=11 // pred_check
          %p349 = pneg %p278
        $region54: #{neural_network_forward.1} parent=11 // pred_check_branch
          %351 = sbr.rel (%p349) target = $region56
        $region55: #{neural_network_forward.1} parent=11 // pred_region
          _
        $region56: #{neural_network_forward.1} parent=11 // pred_fallthru
          _
      $region12: #{neural_network_forward.1} parent=5 // pred_fallthru
        _
      %p352 = scmp.lt.s32.totalorder %s21, 2
      // Predicated region
      $region57: #{neural_network_forward.1} parent=5 // pred_check
        %p353 = pneg %p352
      $region58: #{neural_network_forward.1} parent=5 // pred_check_branch
        %355 = sbr.rel (%p353) target = $region60
      $region59: #{neural_network_forward.1} parent=5 // pred_region
        // Predicated region
        $region61: #{neural_network_forward.1} parent=59 // pred_check
          %p356 = pneg %p41
        $region62: #{neural_network_forward.1} parent=59 // pred_check_branch
          %358 = sbr.rel (%p356) target = $region64
        $region63: #{neural_network_forward.1} parent=59 // pred_region
          %p359 = scmp.lt.s32.totalorder %s21, 1
          %s360 = scalar_select %p359, %s21, 1
          %s361 = smul.addr %s360, 8
          %s362 = smul.addr %s361, 8
          %s363 = scalar_lea.vmem %s0, %s362
        $region64: #{neural_network_forward.1} parent=59 // pred_fallthru
          _
      $region60: #{neural_network_forward.1} parent=5 // pred_fallthru
        _
      %p364 = scmp.le.s32.totalorder 1, %s21
      %p365 = scmp.lt.s32.totalorder %s21, 3
      %p366 = pnand %p364, %p365
      %p367 = pneg %p366
      // Predicated region
      $region65: #{neural_network_forward.1} parent=5 // pred_check
        _
      $region66: #{neural_network_forward.1} parent=5 // pred_check_branch
        %369 = sbr.rel (%p366) target = $region68
      $region67: #{neural_network_forward.1} parent=5 // pred_region
        %s370 = ssub.s32 %s21, 1
        %p371 = scmp.lt.s32.totalorder %s26, 1
        %s372 = scalar_select %p371, %s26, 1
        %s373 = smul.addr %s372, 8
        %s374 = smul.addr %s373, 8
        %s375 = scalar_lea.vmem %s0, %s374
        %p376 = pneg %p47
        %p377 = pneg %p44
        %p378 = pneg %p68
        %p379 = pneg %p65
        %p380 = pneg %p89
        %p381 = pneg %p86
        %p382 = pneg %p110
        %p383 = pneg %p107
        %p384 = pneg %p131
        %p385 = pneg %p128
        %p386 = pneg %p152
        %p387 = pneg %p149
        %p388 = pneg %p173
        %p389 = pneg %p170
        %p390 = pneg %p194
        %p391 = pneg %p191
        %p392 = pneg %p215
        %p393 = pneg %p212
        %p394 = pneg %p236
        %p395 = pneg %p233
        %p396 = pneg %p257
        %p397 = pneg %p254
        %p398 = pneg %p278
        %p399 = pneg %p275
        %p400 = pneg %p304
        %p401 = pneg %p301
        %s402 = sand.u32 %s291, 1
        %s403 = scalar_lea.sflag [#allocation4], %s402
        %s404 = sand.u32 %s291, 1
        %s405 = scalar_lea.vmem [#allocation3], %s404
        %p406 = scmp.lt.s32.totalorder %s26, 1
        %s407 = scalar_select %p406, %s26, 1
        %s408 = smul.addr %s407, 8
        %s409 = smul.addr %s408, 8
        %s410 = scalar_lea.vmem %s0, %s409
        %v411 = vld [vmem:[%s410] sm:$0xff]
        %v412 = vld [vmem:[%s410 + $0x8] sm:$0xff]
        %v413 = vld [vmem:[%s410 + $0x10] sm:$0xff]
        %v414 = vld [vmem:[%s410 + $0x18] sm:$0xff]
        %v415 = vld [vmem:[%s410 + $0x20] sm:$0xff]
        %v416 = vld [vmem:[%s410 + $0x28] sm:$0xff]
        %v417 = vld [vmem:[%s410 + $0x30] sm:$0xff]
        %v418 = vld [vmem:[%s410 + $0x38] sm:$0xff]
        %419 = vrot.lane.b32.xlu0 %v411, 127
        %v420 = vpop.permute.xlu0 %419
        %421 = vrot.lane.b32.xlu0 %v412, 127
        %v422 = vpop.permute.xlu0 %421
        %423 = vrot.lane.b32.xlu0 %v413, 127
        %v424 = vpop.permute.xlu0 %423
        %425 = vrot.lane.b32.xlu0 %v414, 127
        %v426 = vpop.permute.xlu0 %425
        %427 = vrot.lane.b32.xlu0 %v415, 127
        %v428 = vpop.permute.xlu0 %427
        %429 = vrot.lane.b32.xlu0 %v416, 127
        %v430 = vpop.permute.xlu0 %429
        %431 = vrot.lane.b32.xlu0 %v417, 127
        %v432 = vpop.permute.xlu0 %431
        %433 = vrot.lane.b32.xlu0 %v418, 127
        %v434 = vpop.permute.xlu0 %433
        %v435 = vlaneseq
        %v436 = vand.u32 %v435, 127
        %vm437 = vcmp.lt.s32.totalorder %v436, 127
        %v438 = vsel %vm437, %v432, %v434
        %v439 = vsel %vm437, %v430, %v432
        %v440 = vsel %vm437, %v428, %v430
        %v441 = vsel %vm437, %v426, %v428
        %v442 = vsel %vm437, %v424, %v426
        %v443 = vsel %vm437, %v422, %v424
        %v444 = vsel %vm437, %v420, %v422
        %v445 = vsel %vm437, %v434, %v420
        %446 = vrot.lane.b32.xlu0 %v411, 126
        %v447 = vpop.permute.xlu0 %446
        %448 = vrot.lane.b32.xlu0 %v412, 126
        %v449 = vpop.permute.xlu0 %448
        %450 = vrot.lane.b32.xlu0 %v413, 126
        %v451 = vpop.permute.xlu0 %450
        %452 = vrot.lane.b32.xlu0 %v414, 126
        %v453 = vpop.permute.xlu0 %452
        %454 = vrot.lane.b32.xlu0 %v415, 126
        %v455 = vpop.permute.xlu0 %454
        %456 = vrot.lane.b32.xlu0 %v416, 126
        %v457 = vpop.permute.xlu0 %456
        %458 = vrot.lane.b32.xlu0 %v417, 126
        %v459 = vpop.permute.xlu0 %458
        %460 = vrot.lane.b32.xlu0 %v418, 126
        %v461 = vpop.permute.xlu0 %460
        %vm462 = vcmp.lt.s32.totalorder %v436, 126
        %v463 = vsel %vm462, %v459, %v461
        %v464 = vsel %vm462, %v457, %v459
        %v465 = vsel %vm462, %v455, %v457
        %v466 = vsel %vm462, %v453, %v455
        %v467 = vsel %vm462, %v451, %v453
        %v468 = vsel %vm462, %v449, %v451
        %v469 = vsel %vm462, %v447, %v449
        %v470 = vsel %vm462, %v461, %v447
        %471 = vrot.lane.b32.xlu0 %v411, 125
        %v472 = vpop.permute.xlu0 %471
        %473 = vrot.lane.b32.xlu0 %v412, 125
        %v474 = vpop.permute.xlu0 %473
        %475 = vrot.lane.b32.xlu0 %v413, 125
        %v476 = vpop.permute.xlu0 %475
        %477 = vrot.lane.b32.xlu0 %v414, 125
        %v478 = vpop.permute.xlu0 %477
        %479 = vrot.lane.b32.xlu0 %v415, 125
        %v480 = vpop.permute.xlu0 %479
        %481 = vrot.lane.b32.xlu0 %v416, 125
        %v482 = vpop.permute.xlu0 %481
        %483 = vrot.lane.b32.xlu0 %v417, 125
        %v484 = vpop.permute.xlu0 %483
        %485 = vrot.lane.b32.xlu0 %v418, 125
        %v486 = vpop.permute.xlu0 %485
        %vm487 = vcmp.lt.s32.totalorder %v436, 125
        %v488 = vsel %vm487, %v484, %v486
        %v489 = vsel %vm487, %v482, %v484
        %v490 = vsel %vm487, %v480, %v482
        %v491 = vsel %vm487, %v478, %v480
        %v492 = vsel %vm487, %v476, %v478
        %v493 = vsel %vm487, %v474, %v476
        %v494 = vsel %vm487, %v472, %v474
        %v495 = vsel %vm487, %v486, %v472
        %496 = vrot.lane.b32.xlu0 %v411, 124
        %v497 = vpop.permute.xlu0 %496
        %498 = vrot.lane.b32.xlu0 %v412, 124
        %v499 = vpop.permute.xlu0 %498
        %500 = vrot.lane.b32.xlu0 %v413, 124
        %v501 = vpop.permute.xlu0 %500
        %502 = vrot.lane.b32.xlu0 %v414, 124
        %v503 = vpop.permute.xlu0 %502
        %504 = vrot.lane.b32.xlu0 %v415, 124
        %v505 = vpop.permute.xlu0 %504
        %506 = vrot.lane.b32.xlu0 %v416, 124
        %v507 = vpop.permute.xlu0 %506
        %508 = vrot.lane.b32.xlu0 %v417, 124
        %v509 = vpop.permute.xlu0 %508
        %510 = vrot.lane.b32.xlu0 %v418, 124
        %v511 = vpop.permute.xlu0 %510
        %vm512 = vcmp.lt.s32.totalorder %v436, 124
        %v513 = vsel %vm512, %v509, %v511
        %v514 = vsel %vm512, %v507, %v509
        %v515 = vsel %vm512, %v505, %v507
        %v516 = vsel %vm512, %v503, %v505
        %v517 = vsel %vm512, %v501, %v503
        %v518 = vsel %vm512, %v499, %v501
        %v519 = vsel %vm512, %v497, %v499
        %v520 = vsel %vm512, %v511, %v497
        %521 = vrot.lane.b32.xlu0 %v411, 96
        %v522 = vpop.permute.xlu0 %521
        %523 = vrot.lane.b32.xlu0 %v412, 96
        %v524 = vpop.permute.xlu0 %523
        %525 = vrot.lane.b32.xlu0 %v413, 96
        %v526 = vpop.permute.xlu0 %525
        %527 = vrot.lane.b32.xlu0 %v414, 96
        %v528 = vpop.permute.xlu0 %527
        %529 = vrot.lane.b32.xlu0 %v415, 96
        %v530 = vpop.permute.xlu0 %529
        %531 = vrot.lane.b32.xlu0 %v416, 96
        %v532 = vpop.permute.xlu0 %531
        %533 = vrot.lane.b32.xlu0 %v417, 96
        %v534 = vpop.permute.xlu0 %533
        %535 = vrot.lane.b32.xlu0 %v418, 96
        %v536 = vpop.permute.xlu0 %535
        %vm537 = vcmp.lt.s32.totalorder %v436, 96
        %v538 = vsel %vm537, %v534, %v536
        %v539 = vsel %vm537, %v532, %v534
        %v540 = vsel %vm537, %v530, %v532
        %v541 = vsel %vm537, %v528, %v530
        %v542 = vsel %vm537, %v526, %v528
        %v543 = vsel %vm537, %v524, %v526
        %v544 = vsel %vm537, %v522, %v524
        %v545 = vsel %vm537, %v536, %v522
        %546 = vrot.lane.b32.xlu0 %v411, 95
        %v547 = vpop.permute.xlu0 %546
        %548 = vrot.lane.b32.xlu0 %v412, 95
        %v549 = vpop.permute.xlu0 %548
        %550 = vrot.lane.b32.xlu0 %v413, 95
        %v551 = vpop.permute.xlu0 %550
        %552 = vrot.lane.b32.xlu0 %v414, 95
        %v553 = vpop.permute.xlu0 %552
        %554 = vrot.lane.b32.xlu0 %v415, 95
        %v555 = vpop.permute.xlu0 %554
        %556 = vrot.lane.b32.xlu0 %v416, 95
        %v557 = vpop.permute.xlu0 %556
        %558 = vrot.lane.b32.xlu0 %v417, 95
        %v559 = vpop.permute.xlu0 %558
        %560 = vrot.lane.b32.xlu0 %v418, 95
        %v561 = vpop.permute.xlu0 %560
        %vm562 = vcmp.lt.s32.totalorder %v436, 95
        %v563 = vsel %vm562, %v559, %v561
        %v564 = vsel %vm562, %v557, %v559
        %v565 = vsel %vm562, %v555, %v557
        %v566 = vsel %vm562, %v553, %v555
        %v567 = vsel %vm562, %v551, %v553
        %v568 = vsel %vm562, %v549, %v551
        %v569 = vsel %vm562, %v547, %v549
        %v570 = vsel %vm562, %v561, %v547
        %571 = vrot.lane.b32.xlu0 %v411, 94
        %v572 = vpop.permute.xlu0 %571
        %573 = vrot.lane.b32.xlu0 %v412, 94
        %v574 = vpop.permute.xlu0 %573
        %575 = vrot.lane.b32.xlu0 %v413, 94
        %v576 = vpop.permute.xlu0 %575
        %577 = vrot.lane.b32.xlu0 %v414, 94
        %v578 = vpop.permute.xlu0 %577
        %579 = vrot.lane.b32.xlu0 %v415, 94
        %v580 = vpop.permute.xlu0 %579
        %581 = vrot.lane.b32.xlu0 %v416, 94
        %v582 = vpop.permute.xlu0 %581
        %583 = vrot.lane.b32.xlu0 %v417, 94
        %v584 = vpop.permute.xlu0 %583
        %585 = vrot.lane.b32.xlu0 %v418, 94
        %v586 = vpop.permute.xlu0 %585
        %vm587 = vcmp.lt.s32.totalorder %v436, 94
        %v588 = vsel %vm587, %v584, %v586
        %v589 = vsel %vm587, %v582, %v584
        %v590 = vsel %vm587, %v580, %v582
        %v591 = vsel %vm587, %v578, %v580
        %v592 = vsel %vm587, %v576, %v578
        %v593 = vsel %vm587, %v574, %v576
        %v594 = vsel %vm587, %v572, %v574
        %v595 = vsel %vm587, %v586, %v572
        %596 = vrot.lane.b32.xlu0 %v411, 93
        %v597 = vpop.permute.xlu0 %596
        %598 = vrot.lane.b32.xlu0 %v412, 93
        %v599 = vpop.permute.xlu0 %598
        %600 = vrot.lane.b32.xlu0 %v413, 93
        %v601 = vpop.permute.xlu0 %600
        %602 = vrot.lane.b32.xlu0 %v414, 93
        %v603 = vpop.permute.xlu0 %602
        %604 = vrot.lane.b32.xlu0 %v415, 93
        %v605 = vpop.permute.xlu0 %604
        %606 = vrot.lane.b32.xlu0 %v416, 93
        %v607 = vpop.permute.xlu0 %606
        %608 = vrot.lane.b32.xlu0 %v417, 93
        %v609 = vpop.permute.xlu0 %608
        %610 = vrot.lane.b32.xlu0 %v418, 93
        %v611 = vpop.permute.xlu0 %610
        %vm612 = vcmp.lt.s32.totalorder %v436, 93
        %v613 = vsel %vm612, %v609, %v611
        %v614 = vsel %vm612, %v607, %v609
        %v615 = vsel %vm612, %v605, %v607
        %v616 = vsel %vm612, %v603, %v605
        %v617 = vsel %vm612, %v601, %v603
        %v618 = vsel %vm612, %v599, %v601
        %v619 = vsel %vm612, %v597, %v599
        %v620 = vsel %vm612, %v611, %v597
        %621 = vrot.lane.b32.xlu0 %v411, 92
        %v622 = vpop.permute.xlu0 %621
        %623 = vrot.lane.b32.xlu0 %v412, 92
        %v624 = vpop.permute.xlu0 %623
        %625 = vrot.lane.b32.xlu0 %v413, 92
        %v626 = vpop.permute.xlu0 %625
        %627 = vrot.lane.b32.xlu0 %v414, 92
        %v628 = vpop.permute.xlu0 %627
        %629 = vrot.lane.b32.xlu0 %v415, 92
        %v630 = vpop.permute.xlu0 %629
        %631 = vrot.lane.b32.xlu0 %v416, 92
        %v632 = vpop.permute.xlu0 %631
        %633 = vrot.lane.b32.xlu0 %v417, 92
        %v634 = vpop.permute.xlu0 %633
        %635 = vrot.lane.b32.xlu0 %v418, 92
        %v636 = vpop.permute.xlu0 %635
        %vm637 = vcmp.lt.s32.totalorder %v436, 92
        %v638 = vsel %vm637, %v634, %v636
        %v639 = vsel %vm637, %v632, %v634
        %v640 = vsel %vm637, %v630, %v632
        %v641 = vsel %vm637, %v628, %v630
        %v642 = vsel %vm637, %v626, %v628
        %v643 = vsel %vm637, %v624, %v626
        %v644 = vsel %vm637, %v622, %v624
        %v645 = vsel %vm637, %v636, %v622
        %646 = vrot.lane.b32.xlu0 %v411, 64
        %v647 = vpop.permute.xlu0 %646
        %648 = vrot.lane.b32.xlu0 %v412, 64
        %v649 = vpop.permute.xlu0 %648
        %650 = vrot.lane.b32.xlu0 %v413, 64
        %v651 = vpop.permute.xlu0 %650
        %652 = vrot.lane.b32.xlu0 %v414, 64
        %v653 = vpop.permute.xlu0 %652
        %654 = vrot.lane.b32.xlu0 %v415, 64
        %v655 = vpop.permute.xlu0 %654
        %656 = vrot.lane.b32.xlu0 %v416, 64
        %v657 = vpop.permute.xlu0 %656
        %658 = vrot.lane.b32.xlu0 %v417, 64
        %v659 = vpop.permute.xlu0 %658
        %660 = vrot.lane.b32.xlu0 %v418, 64
        %v661 = vpop.permute.xlu0 %660
        %vm662 = vcmp.lt.s32.totalorder %v436, 64
        %v663 = vsel %vm662, %v659, %v661
        %v664 = vsel %vm662, %v657, %v659
        %v665 = vsel %vm662, %v655, %v657
        %v666 = vsel %vm662, %v653, %v655
        %v667 = vsel %vm662, %v651, %v653
        %v668 = vsel %vm662, %v649, %v651
        %v669 = vsel %vm662, %v647, %v649
        %v670 = vsel %vm662, %v661, %v647
        %671 = vrot.lane.b32.xlu0 %v411, 63
        %v672 = vpop.permute.xlu0 %671
        %673 = vrot.lane.b32.xlu0 %v412, 63
        %v674 = vpop.permute.xlu0 %673
        %675 = vrot.lane.b32.xlu0 %v413, 63
        %v676 = vpop.permute.xlu0 %675
        %677 = vrot.lane.b32.xlu0 %v414, 63
        %v678 = vpop.permute.xlu0 %677
        %679 = vrot.lane.b32.xlu0 %v415, 63
        %v680 = vpop.permute.xlu0 %679
        %681 = vrot.lane.b32.xlu0 %v416, 63
        %v682 = vpop.permute.xlu0 %681
        %683 = vrot.lane.b32.xlu0 %v417, 63
        %v684 = vpop.permute.xlu0 %683
        %685 = vrot.lane.b32.xlu0 %v418, 63
        %v686 = vpop.permute.xlu0 %685
        %vm687 = vcmp.lt.s32.totalorder %v436, 63
        %v688 = vsel %vm687, %v684, %v686
        %v689 = vsel %vm687, %v682, %v684
        %v690 = vsel %vm687, %v680, %v682
        %v691 = vsel %vm687, %v678, %v680
        %v692 = vsel %vm687, %v676, %v678
        %v693 = vsel %vm687, %v674, %v676
        %v694 = vsel %vm687, %v672, %v674
        %v695 = vsel %vm687, %v686, %v672
        %696 = vrot.lane.b32.xlu0 %v411, 62
        %v697 = vpop.permute.xlu0 %696
        %698 = vrot.lane.b32.xlu0 %v412, 62
        %v699 = vpop.permute.xlu0 %698
        %700 = vrot.lane.b32.xlu0 %v413, 62
        %v701 = vpop.permute.xlu0 %700
        %702 = vrot.lane.b32.xlu0 %v414, 62
        %v703 = vpop.permute.xlu0 %702
        %704 = vrot.lane.b32.xlu0 %v415, 62
        %v705 = vpop.permute.xlu0 %704
        %706 = vrot.lane.b32.xlu0 %v416, 62
        %v707 = vpop.permute.xlu0 %706
        %708 = vrot.lane.b32.xlu0 %v417, 62
        %v709 = vpop.permute.xlu0 %708
        %710 = vrot.lane.b32.xlu0 %v418, 62
        %v711 = vpop.permute.xlu0 %710
        %vm712 = vcmp.lt.s32.totalorder %v436, 62
        %v713 = vsel %vm712, %v709, %v711
        %v714 = vsel %vm712, %v707, %v709
        %v715 = vsel %vm712, %v705, %v707
        %v716 = vsel %vm712, %v703, %v705
        %v717 = vsel %vm712, %v701, %v703
        %v718 = vsel %vm712, %v699, %v701
        %v719 = vsel %vm712, %v697, %v699
        %v720 = vsel %vm712, %v711, %v697
        %721 = vrot.lane.b32.xlu0 %v411, 61
        %v722 = vpop.permute.xlu0 %721
        %723 = vrot.lane.b32.xlu0 %v412, 61
        %v724 = vpop.permute.xlu0 %723
        %725 = vrot.lane.b32.xlu0 %v413, 61
        %v726 = vpop.permute.xlu0 %725
        %727 = vrot.lane.b32.xlu0 %v414, 61
        %v728 = vpop.permute.xlu0 %727
        %729 = vrot.lane.b32.xlu0 %v415, 61
        %v730 = vpop.permute.xlu0 %729
        %731 = vrot.lane.b32.xlu0 %v416, 61
        %v732 = vpop.permute.xlu0 %731
        %733 = vrot.lane.b32.xlu0 %v417, 61
        %v734 = vpop.permute.xlu0 %733
        %735 = vrot.lane.b32.xlu0 %v418, 61
        %v736 = vpop.permute.xlu0 %735
        %vm737 = vcmp.lt.s32.totalorder %v436, 61
        %v738 = vsel %vm737, %v734, %v736
        %v739 = vsel %vm737, %v732, %v734
        %v740 = vsel %vm737, %v730, %v732
        %v741 = vsel %vm737, %v728, %v730
        %v742 = vsel %vm737, %v726, %v728
        %v743 = vsel %vm737, %v724, %v726
        %v744 = vsel %vm737, %v722, %v724
        %v745 = vsel %vm737, %v736, %v722
        %746 = vrot.lane.b32.xlu0 %v411, 60
        %v747 = vpop.permute.xlu0 %746
        %748 = vrot.lane.b32.xlu0 %v412, 60
        %v749 = vpop.permute.xlu0 %748
        %750 = vrot.lane.b32.xlu0 %v413, 60
        %v751 = vpop.permute.xlu0 %750
        %752 = vrot.lane.b32.xlu0 %v414, 60
        %v753 = vpop.permute.xlu0 %752
        %754 = vrot.lane.b32.xlu0 %v415, 60
        %v755 = vpop.permute.xlu0 %754
        %756 = vrot.lane.b32.xlu0 %v416, 60
        %v757 = vpop.permute.xlu0 %756
        %758 = vrot.lane.b32.xlu0 %v417, 60
        %v759 = vpop.permute.xlu0 %758
        %760 = vrot.lane.b32.xlu0 %v418, 60
        %v761 = vpop.permute.xlu0 %760
        %vm762 = vcmp.lt.s32.totalorder %v436, 60
        %v763 = vsel %vm762, %v759, %v761
        %v764 = vsel %vm762, %v757, %v759
        %v765 = vsel %vm762, %v755, %v757
        %v766 = vsel %vm762, %v753, %v755
        %v767 = vsel %vm762, %v751, %v753
        %v768 = vsel %vm762, %v749, %v751
        %v769 = vsel %vm762, %v747, %v749
        %v770 = vsel %vm762, %v761, %v747
        %771 = vrot.lane.b32.xlu0 %v411, 32
        %v772 = vpop.permute.xlu0 %771
        %773 = vrot.lane.b32.xlu0 %v412, 32
        %v774 = vpop.permute.xlu0 %773
        %775 = vrot.lane.b32.xlu0 %v413, 32
        %v776 = vpop.permute.xlu0 %775
        %777 = vrot.lane.b32.xlu0 %v414, 32
        %v778 = vpop.permute.xlu0 %777
        %779 = vrot.lane.b32.xlu0 %v415, 32
        %v780 = vpop.permute.xlu0 %779
        %781 = vrot.lane.b32.xlu0 %v416, 32
        %v782 = vpop.permute.xlu0 %781
        %783 = vrot.lane.b32.xlu0 %v417, 32
        %v784 = vpop.permute.xlu0 %783
        %785 = vrot.lane.b32.xlu0 %v418, 32
        %v786 = vpop.permute.xlu0 %785
        %vm787 = vcmp.lt.s32.totalorder %v436, 32
        %v788 = vsel %vm787, %v784, %v786
        %v789 = vsel %vm787, %v782, %v784
        %v790 = vsel %vm787, %v780, %v782
        %v791 = vsel %vm787, %v778, %v780
        %v792 = vsel %vm787, %v776, %v778
        %v793 = vsel %vm787, %v774, %v776
        %v794 = vsel %vm787, %v772, %v774
        %v795 = vsel %vm787, %v786, %v772
        %796 = vrot.lane.b32.xlu0 %v411, 31
        %v797 = vpop.permute.xlu0 %796
        %798 = vrot.lane.b32.xlu0 %v412, 31
        %v799 = vpop.permute.xlu0 %798
        %800 = vrot.lane.b32.xlu0 %v413, 31
        %v801 = vpop.permute.xlu0 %800
        %802 = vrot.lane.b32.xlu0 %v414, 31
        %v803 = vpop.permute.xlu0 %802
        %804 = vrot.lane.b32.xlu0 %v415, 31
        %v805 = vpop.permute.xlu0 %804
        %806 = vrot.lane.b32.xlu0 %v416, 31
        %v807 = vpop.permute.xlu0 %806
        %808 = vrot.lane.b32.xlu0 %v417, 31
        %v809 = vpop.permute.xlu0 %808
        %810 = vrot.lane.b32.xlu0 %v418, 31
        %v811 = vpop.permute.xlu0 %810
        %vm812 = vcmp.lt.s32.totalorder %v436, 31
        %v813 = vsel %vm812, %v809, %v811
        %v814 = vsel %vm812, %v807, %v809
        %v815 = vsel %vm812, %v805, %v807
        %v816 = vsel %vm812, %v803, %v805
        %v817 = vsel %vm812, %v801, %v803
        %v818 = vsel %vm812, %v799, %v801
        %v819 = vsel %vm812, %v797, %v799
        %v820 = vsel %vm812, %v811, %v797
        %821 = vrot.lane.b32.xlu0 %v411, 30
        %v822 = vpop.permute.xlu0 %821
        %823 = vrot.lane.b32.xlu0 %v412, 30
        %v824 = vpop.permute.xlu0 %823
        %825 = vrot.lane.b32.xlu0 %v413, 30
        %v826 = vpop.permute.xlu0 %825
        %827 = vrot.lane.b32.xlu0 %v414, 30
        %v828 = vpop.permute.xlu0 %827
        %829 = vrot.lane.b32.xlu0 %v415, 30
        %v830 = vpop.permute.xlu0 %829
        %831 = vrot.lane.b32.xlu0 %v416, 30
        %v832 = vpop.permute.xlu0 %831
        %833 = vrot.lane.b32.xlu0 %v417, 30
        %v834 = vpop.permute.xlu0 %833
        %835 = vrot.lane.b32.xlu0 %v418, 30
        %v836 = vpop.permute.xlu0 %835
        %vm837 = vcmp.lt.s32.totalorder %v436, 30
        %v838 = vsel %vm837, %v834, %v836
        %v839 = vsel %vm837, %v832, %v834
        %v840 = vsel %vm837, %v830, %v832
        %v841 = vsel %vm837, %v828, %v830
        %v842 = vsel %vm837, %v826, %v828
        %v843 = vsel %vm837, %v824, %v826
        %v844 = vsel %vm837, %v822, %v824
        %v845 = vsel %vm837, %v836, %v822
        %846 = vrot.lane.b32.xlu0 %v411, 29
        %v847 = vpop.permute.xlu0 %846
        %848 = vrot.lane.b32.xlu0 %v412, 29
        %v849 = vpop.permute.xlu0 %848
        %850 = vrot.lane.b32.xlu0 %v413, 29
        %v851 = vpop.permute.xlu0 %850
        %852 = vrot.lane.b32.xlu0 %v414, 29
        %v853 = vpop.permute.xlu0 %852
        %854 = vrot.lane.b32.xlu0 %v415, 29
        %v855 = vpop.permute.xlu0 %854
        %856 = vrot.lane.b32.xlu0 %v416, 29
        %v857 = vpop.permute.xlu0 %856
        %858 = vrot.lane.b32.xlu0 %v417, 29
        %v859 = vpop.permute.xlu0 %858
        %860 = vrot.lane.b32.xlu0 %v418, 29
        %v861 = vpop.permute.xlu0 %860
        %vm862 = vcmp.lt.s32.totalorder %v436, 29
        %v863 = vsel %vm862, %v859, %v861
        %v864 = vsel %vm862, %v857, %v859
        %v865 = vsel %vm862, %v855, %v857
        %v866 = vsel %vm862, %v853, %v855
        %v867 = vsel %vm862, %v851, %v853
        %v868 = vsel %vm862, %v849, %v851
        %v869 = vsel %vm862, %v847, %v849
        %v870 = vsel %vm862, %v861, %v847
        %871 = vrot.lane.b32.xlu0 %v411, 28
        %v872 = vpop.permute.xlu0 %871
        %873 = vrot.lane.b32.xlu0 %v412, 28
        %v874 = vpop.permute.xlu0 %873
        %875 = vrot.lane.b32.xlu0 %v413, 28
        %v876 = vpop.permute.xlu0 %875
        %877 = vrot.lane.b32.xlu0 %v414, 28
        %v878 = vpop.permute.xlu0 %877
        %879 = vrot.lane.b32.xlu0 %v415, 28
        %v880 = vpop.permute.xlu0 %879
        %881 = vrot.lane.b32.xlu0 %v416, 28
        %v882 = vpop.permute.xlu0 %881
        %883 = vrot.lane.b32.xlu0 %v417, 28
        %v884 = vpop.permute.xlu0 %883
        %885 = vrot.lane.b32.xlu0 %v418, 28
        %v886 = vpop.permute.xlu0 %885
        %vm887 = vcmp.lt.s32.totalorder %v436, 28
        %v888 = vsel %vm887, %v884, %v886
        %v889 = vsel %vm887, %v882, %v884
        %v890 = vsel %vm887, %v880, %v882
        %v891 = vsel %vm887, %v878, %v880
        %v892 = vsel %vm887, %v876, %v878
        %v893 = vsel %vm887, %v874, %v876
        %v894 = vsel %vm887, %v872, %v874
        %v895 = vsel %vm887, %v886, %v872
        %v896 = vld [vmem:[%s1] sm:$0xff]
        %v897 = vld [vmem:[%s1 + $0x8] sm:$0xff]
        %v898 = vld [vmem:[%s2] sm:$0xff]
        %900 = vset.pattern.permute.xlu0 0
        %901 = vperm.xlu0 %900, %v898
        %v902 = vpop.permute.xlu0 %901
        %vm904 = vcmask 588800
        %v906 = vsel %vm904, %v897, 0
        %908 = vmatprep.subr.mxu0 %v412
        %909 = vmatpush1.msra.mxu0 %v411
        %910 = vmatprep.subr.mxu0 %v443
        %911 = vmatpush1.msra.mxu0 %v444
        %912 = vmatprep.subr.mxu0 %v468
        %913 = vmatpush1.msra.mxu0 %v469
        %914 = vmatprep.subr.mxu0 %v493
        %915 = vmatpush1.msra.mxu0 %v494
        %916 = vmatprep.subr.mxu0 %v518
        %917 = vmatpush1.msra.mxu0 %v519
        %918 = vmatprep.subr.mxu0 %v543
        %919 = vmatpush1.msra.mxu0 %v544
        %920 = vmatprep.subr.mxu0 %v568
        %921 = vmatpush1.msra.mxu0 %v569
        %922 = vmatprep.subr.mxu0 %v593
        %923 = vmatpush1.msra.mxu0 %v594
        %924 = vmatprep.subr.mxu0 %v618
        %925 = vmatpush1.msra.mxu0 %v619
        %926 = vmatprep.subr.mxu0 %v643
        %927 = vmatpush1.msra.mxu0 %v644
        %928 = vmatprep.subr.mxu0 %v668
        %929 = vmatpush1.msra.mxu0 %v669
        %930 = vmatprep.subr.mxu0 %v693
        %931 = vmatpush1.msra.mxu0 %v694
        %932 = vmatprep.subr.mxu0 %v718
        %933 = vmatpush1.msra.mxu0 %v719
        %934 = vmatprep.subr.mxu0 %v743
        %935 = vmatpush1.msra.mxu0 %v744
        %936 = vmatprep.subr.mxu0 %v768
        %937 = vmatpush1.msra.mxu0 %v769
        %938 = vmatprep.subr.mxu0 %v793
        %939 = vmatpush1.msra.mxu0 %v794
        %940 = vmatprep.subr.mxu0 %v818
        %941 = vmatpush1.msra.mxu0 %v819
        %942 = vmatprep.subr.mxu0 %v843
        %943 = vmatpush1.msra.mxu0 %v844
        %944 = vmatprep.subr.mxu0 %v868
        %945 = vmatpush1.msra.mxu0 %v869
        %946 = vmatprep.subr.mxu0 %v893
        %947 = vmatpush1.msra.mxu0 %v894
        %948 = vmatprep.subr.mxu0 %v413
        %949 = vmatpush1.msra.mxu0 %v412
        %950 = vmatprep.subr.mxu0 %v442
        %951 = vmatpush1.msra.mxu0 %v443
        %952 = vmatprep.subr.mxu0 %v467
        %953 = vmatpush1.msra.mxu0 %v468
        %954 = vmatprep.subr.mxu0 %v492
        %955 = vmatpush1.msra.mxu0 %v493
        %956 = vmatprep.subr.mxu0 %v517
        %957 = vmatpush1.msra.mxu0 %v518
        %958 = vmatprep.subr.mxu0 0.0
        %959 = vmatpush1.msra.mxu0 0.0
        %960 = vmatprep.subr.mxu0 0.0
        %961 = vmatpush1.msra.mxu0 0.0
        %962 = vmatprep.subr.mxu0 0.0
        %963 = vmatpush1.msra.mxu0 0.0
        %964 = vmatprep.subr.mxu0 0.0
        %965 = vmatpush1.msra.mxu0 0.0
        %966 = vmatprep.subr.mxu0 0.0
        %967 = vmatpush1.msra.mxu0 0.0
        %968 = vmatprep.subr.mxu0 0.0
        %969 = vmatpush1.msra.mxu0 0.0
        %970 = vmatprep.subr.mxu0 0.0
        %971 = vmatpush1.msra.mxu0 0.0
        %972 = vmatprep.mubr.f32.mxu0 %v906
        %973 = vmatmul.mubr.f32.gmra.mrb[0].mxu0 %v896
        %v974 = vpop.f32.mrb[0].mxu0
        %v975 = vadd.f32 %v902, %v974
        %v976 = vpop.f32.mrb[0].mxu0
        %v977 = vadd.f32 %v902, %v976
        %978 = vdwg.mxu0
        %979 = vmatprep.subr.mxu0 %v414
        %980 = vmatpush1.msra.mxu0 %v413
        %981 = vmatprep.subr.mxu0 %v441
        %982 = vmatpush1.msra.mxu0 %v442
        %983 = vmatprep.subr.mxu0 %v466
        %984 = vmatpush1.msra.mxu0 %v467
        %985 = vmatprep.subr.mxu0 %v491
        %986 = vmatpush1.msra.mxu0 %v492
        %987 = vmatprep.subr.mxu0 %v516
        %988 = vmatpush1.msra.mxu0 %v517
        %989 = vmatprep.subr.mxu0 %v541
        %990 = vmatpush1.msra.mxu0 %v542
        %991 = vmatprep.subr.mxu0 %v566
        %992 = vmatpush1.msra.mxu0 %v567
        %993 = vmatprep.subr.mxu0 %v591
        %994 = vmatpush1.msra.mxu0 %v592
        %995 = vmatprep.subr.mxu0 %v616
        %996 = vmatpush1.msra.mxu0 %v617
        %997 = vmatprep.subr.mxu0 %v641
        %998 = vmatpush1.msra.mxu0 %v642
        %999 = vmatprep.subr.mxu0 %v666
        %1000 = vmatpush1.msra.mxu0 %v667
        %1001 = vmatprep.subr.mxu0 %v691
        %1002 = vmatpush1.msra.mxu0 %v692
        %1003 = vmatprep.subr.mxu0 %v716
        %1004 = vmatpush1.msra.mxu0 %v717
        %1005 = vmatprep.subr.mxu0 %v741
        %1006 = vmatpush1.msra.mxu0 %v742
        %1007 = vmatprep.subr.mxu0 %v766
        %1008 = vmatpush1.msra.mxu0 %v767
        %1009 = vmatprep.subr.mxu0 %v791
        %1010 = vmatpush1.msra.mxu0 %v792
        %1011 = vmatprep.subr.mxu0 %v816
        %1012 = vmatpush1.msra.mxu0 %v817
        %1013 = vmatprep.subr.mxu0 %v841
        %1014 = vmatpush1.msra.mxu0 %v842
        %1015 = vmatprep.subr.mxu0 %v866
        %1016 = vmatpush1.msra.mxu0 %v867
        %1017 = vmatprep.subr.mxu0 %v891
        %1018 = vmatpush1.msra.mxu0 %v892
        %1019 = vmatprep.subr.mxu0 %v415
        %1020 = vmatpush1.msra.mxu0 %v414
        %1021 = vmatprep.subr.mxu0 %v440
        %1022 = vmatpush1.msra.mxu0 %v441
        %1023 = vmatprep.subr.mxu0 %v465
        %1024 = vmatpush1.msra.mxu0 %v466
        %1025 = vmatprep.subr.mxu0 %v490
        %1026 = vmatpush1.msra.mxu0 %v491
        %1027 = vmatprep.subr.mxu0 %v515
        %1028 = vmatpush1.msra.mxu0 %v516
        %1029 = vmatprep.subr.mxu0 0.0
        %1030 = vmatpush1.msra.mxu0 0.0
        %1031 = vmatprep.subr.mxu0 0.0
        %1032 = vmatpush1.msra.mxu0 0.0
        %1033 = vmatprep.subr.mxu0 0.0
        %1034 = vmatpush1.msra.mxu0 0.0
        %1035 = vmatprep.subr.mxu0 0.0
        %1036 = vmatpush1.msra.mxu0 0.0
        %1037 = vmatprep.subr.mxu0 0.0
        %1038 = vmatpush1.msra.mxu0 0.0
        %1039 = vmatprep.subr.mxu0 0.0
        %1040 = vmatpush1.msra.mxu0 0.0
        %1041 = vmatprep.subr.mxu0 0.0
        %1042 = vmatpush1.msra.mxu0 0.0
        %1043 = vmatprep.mubr.f32.mxu0 %v906
        %1044 = vmatmul.mubr.f32.gmra.mrb[0].mxu0 %v896
        %v1045 = vpop.f32.mrb[0].mxu0
        %v1046 = vadd.f32 %v902, %v1045
        %v1047 = vpop.f32.mrb[0].mxu0
        %v1048 = vadd.f32 %v902, %v1047
        %1049 = vdwg.mxu0
        %1050 = vmatprep.subr.mxu0 %v416
        %1051 = vmatpush1.msra.mxu0 %v415
        %1052 = vmatprep.subr.mxu0 %v439
        %1053 = vmatpush1.msra.mxu0 %v440
        %1054 = vmatprep.subr.mxu0 %v464
        %1055 = vmatpush1.msra.mxu0 %v465
        %1056 = vmatprep.subr.mxu0 %v489
        %1057 = vmatpush1.msra.mxu0 %v490
        %1058 = vmatprep.subr.mxu0 %v514
        %1059 = vmatpush1.msra.mxu0 %v515
        %1060 = vmatprep.subr.mxu0 %v539
        %1061 = vmatpush1.msra.mxu0 %v540
        %1062 = vmatprep.subr.mxu0 %v564
        %1063 = vmatpush1.msra.mxu0 %v565
        %1064 = vmatprep.subr.mxu0 %v589
        %1065 = vmatpush1.msra.mxu0 %v590
        %1066 = vmatprep.subr.mxu0 %v614
        %1067 = vmatpush1.msra.mxu0 %v615
        %1068 = vmatprep.subr.mxu0 %v639
        %1069 = vmatpush1.msra.mxu0 %v640
        %1070 = vmatprep.subr.mxu0 %v664
        %1071 = vmatpush1.msra.mxu0 %v665
        %1072 = vmatprep.subr.mxu0 %v689
        %1073 = vmatpush1.msra.mxu0 %v690
        %1074 = vmatprep.subr.mxu0 %v714
        %1075 = vmatpush1.msra.mxu0 %v715
        %1076 = vmatprep.subr.mxu0 %v739
        %1077 = vmatpush1.msra.mxu0 %v740
        %1078 = vmatprep.subr.mxu0 %v764
        %1079 = vmatpush1.msra.mxu0 %v765
        %1080 = vmatprep.subr.mxu0 %v789
        %1081 = vmatpush1.msra.mxu0 %v790
        %1082 = vmatprep.subr.mxu0 %v814
        %1083 = vmatpush1.msra.mxu0 %v815
        %1084 = vmatprep.subr.mxu0 %v839
        %1085 = vmatpush1.msra.mxu0 %v840
        %1086 = vmatprep.subr.mxu0 %v864
        %1087 = vmatpush1.msra.mxu0 %v865
        %1088 = vmatprep.subr.mxu0 %v889
        %1089 = vmatpush1.msra.mxu0 %v890
        %1090 = vmatprep.subr.mxu0 %v417
        %1091 = vmatpush1.msra.mxu0 %v416
        %1092 = vmatprep.subr.mxu0 %v438
        %1093 = vmatpush1.msra.mxu0 %v439
        %1094 = vmatprep.subr.mxu0 %v463
        %1095 = vmatpush1.msra.mxu0 %v464
        %1096 = vmatprep.subr.mxu0 %v488
        %1097 = vmatpush1.msra.mxu0 %v489
        %1098 = vmatprep.subr.mxu0 %v513
        %1099 = vmatpush1.msra.mxu0 %v514
        %1100 = vmatprep.subr.mxu0 0.0
        %1101 = vmatpush1.msra.mxu0 0.0
        %1102 = vmatprep.subr.mxu0 0.0
        %1103 = vmatpush1.msra.mxu0 0.0
        %1104 = vmatprep.subr.mxu0 0.0
        %1105 = vmatpush1.msra.mxu0 0.0
        %1106 = vmatprep.subr.mxu0 0.0
        %1107 = vmatpush1.msra.mxu0 0.0
        %1108 = vmatprep.subr.mxu0 0.0
        %1109 = vmatpush1.msra.mxu0 0.0
        %1110 = vmatprep.subr.mxu0 0.0
        %1111 = vmatpush1.msra.mxu0 0.0
        %1112 = vmatprep.subr.mxu0 0.0
        %1113 = vmatpush1.msra.mxu0 0.0
        %1114 = vmatprep.mubr.f32.mxu0 %v906
        %1115 = vmatmul.mubr.f32.gmra.mrb[0].mxu0 %v896
        %v1116 = vpop.f32.mrb[0].mxu0
        %v1117 = vadd.f32 %v902, %v1116
        %v1118 = vpop.f32.mrb[0].mxu0
        %v1119 = vadd.f32 %v902, %v1118
        %1120 = vdwg.mxu0
        %1121 = vmatprep.subr.mxu0 %v418
        %1122 = vmatpush1.msra.mxu0 %v417
        %1123 = vmatprep.subr.mxu0 %v445
        %1124 = vmatpush1.msra.mxu0 %v438
        %1125 = vmatprep.subr.mxu0 %v470
        %1126 = vmatpush1.msra.mxu0 %v463
        %1127 = vmatprep.subr.mxu0 %v495
        %1128 = vmatpush1.msra.mxu0 %v488
        %1129 = vmatprep.subr.mxu0 %v520
        %1130 = vmatpush1.msra.mxu0 %v513
        %1131 = vmatprep.subr.mxu0 %v545
        %1132 = vmatpush1.msra.mxu0 %v538
        %1133 = vmatprep.subr.mxu0 %v570
        %1134 = vmatpush1.msra.mxu0 %v563
        %1135 = vmatprep.subr.mxu0 %v595
        %1136 = vmatpush1.msra.mxu0 %v588
        %1137 = vmatprep.subr.mxu0 %v620
        %1138 = vmatpush1.msra.mxu0 %v613
        %1139 = vmatprep.subr.mxu0 %v645
        %1140 = vmatpush1.msra.mxu0 %v638
        %1141 = vmatprep.subr.mxu0 %v670
        %1142 = vmatpush1.msra.mxu0 %v663
        %1143 = vmatprep.subr.mxu0 %v695
        %1144 = vmatpush1.msra.mxu0 %v688
        %1145 = vmatprep.subr.mxu0 %v720
        %1146 = vmatpush1.msra.mxu0 %v713
        %1147 = vmatprep.subr.mxu0 %v745
        %1148 = vmatpush1.msra.mxu0 %v738
        %1149 = vmatprep.subr.mxu0 %v770
        %1150 = vmatpush1.msra.mxu0 %v763
        %1151 = vmatprep.subr.mxu0 %v795
        %1152 = vmatpush1.msra.mxu0 %v788
        %1153 = vmatprep.subr.mxu0 %v820
        %1154 = vmatpush1.msra.mxu0 %v813
        %1155 = vmatprep.subr.mxu0 %v845
        %1156 = vmatpush1.msra.mxu0 %v838
        %1157 = vmatprep.subr.mxu0 %v870
        %1158 = vmatpush1.msra.mxu0 %v863
        %1159 = vmatprep.subr.mxu0 %v895
        %1160 = vmatpush1.msra.mxu0 %v888
        %1161 = vmatprep.subr.mxu0 %v411
        %1162 = vmatpush1.msra.mxu0 %v418
        %1163 = vmatprep.subr.mxu0 %v444
        %1164 = vmatpush1.msra.mxu0 %v445
        %1165 = vmatprep.subr.mxu0 %v469
        %1166 = vmatpush1.msra.mxu0 %v470
        %1167 = vmatprep.subr.mxu0 %v494
        %1168 = vmatpush1.msra.mxu0 %v495
        %1169 = vmatprep.subr.mxu0 %v519
        %1170 = vmatpush1.msra.mxu0 %v520
        %1171 = vmatprep.subr.mxu0 0.0
        %1172 = vmatpush1.msra.mxu0 0.0
        %1173 = vmatprep.subr.mxu0 0.0
        %1174 = vmatpush1.msra.mxu0 0.0
        %1175 = vmatprep.subr.mxu0 0.0
        %1176 = vmatpush1.msra.mxu0 0.0
        %1177 = vmatprep.subr.mxu0 0.0
        %1178 = vmatpush1.msra.mxu0 0.0
        %1179 = vmatprep.subr.mxu0 0.0
        %1180 = vmatpush1.msra.mxu0 0.0
        %1181 = vmatprep.subr.mxu0 0.0
        %1182 = vmatpush1.msra.mxu0 0.0
        %1183 = vmatprep.subr.mxu0 0.0
        %1184 = vmatpush1.msra.mxu0 0.0
        %1185 = vmatprep.mubr.f32.mxu0 %v906
        %1186 = vmatmul.mubr.f32.gmra.mrb[0].mxu0 %v896
        %v1187 = vpop.f32.mrb[0].mxu0
        %v1188 = vadd.f32 %v902, %v1187
        %v1189 = vpop.f32.mrb[0].mxu0
        %v1190 = vadd.f32 %v902, %v1189
        %1191 = vdwg.mxu0
        %v1192 = vmax.f32 %v975, 0.0
        %v1193 = vmax.f32 %v977, 0.0
        %v1194 = vmax.f32 %v1046, 0.0
        %v1195 = vmax.f32 %v1048, 0.0
        %v1196 = vmax.f32 %v1117, 0.0
        %v1197 = vmax.f32 %v1119, 0.0
        %v1198 = vmax.f32 %v1188, 0.0
        %v1199 = vmax.f32 %v1190, 0.0
        %1200 = vrot.lane.b32.xlu0 %v1192, 127
        %v1201 = vpop.permute.xlu0 %1200
        %1202 = vrot.lane.b32.xlu0 %v1193, 127
        %v1203 = vpop.permute.xlu0 %1202
        %1204 = vrot.lane.b32.xlu0 %v1194, 127
        %v1205 = vpop.permute.xlu0 %1204
        %1206 = vrot.lane.b32.xlu0 %v1195, 127
        %v1207 = vpop.permute.xlu0 %1206
        %1208 = vrot.lane.b32.xlu0 %v1196, 127
        %v1209 = vpop.permute.xlu0 %1208
        %1210 = vrot.lane.b32.xlu0 %v1197, 127
        %v1211 = vpop.permute.xlu0 %1210
        %1212 = vrot.lane.b32.xlu0 %v1198, 127
        %v1213 = vpop.permute.xlu0 %1212
        %1214 = vrot.lane.b32.xlu0 %v1199, 127
        %v1215 = vpop.permute.xlu0 %1214
        %v1216 = vsel %vm437, %v1213, %v1215
        %v1217 = vsel %vm437, %v1211, %v1213
        %v1218 = vsel %vm437, %v1209, %v1211
        %v1219 = vsel %vm437, %v1207, %v1209
        %v1220 = vsel %vm437, %v1205, %v1207
        %v1221 = vsel %vm437, %v1203, %v1205
        %v1222 = vsel %vm437, %v1201, %v1203
        %v1223 = vsel %vm437, %v1215, %v1201
        %v1224 = vmax.f32 %v1192, %v1222
        %v1225 = vmax.f32 %v1193, %v1221
        %v1226 = vmax.f32 %v1194, %v1220
        %v1227 = vmax.f32 %v1195, %v1219
        %v1228 = vmax.f32 %v1196, %v1218
        %v1229 = vmax.f32 %v1197, %v1217
        %v1230 = vmax.f32 %v1198, %v1216
        %v1231 = vmax.f32 %v1199, %v1223
        %1232 = vrot.lane.b32.xlu0 %v1224, 96
        %v1233 = vpop.permute.xlu0 %1232
        %1234 = vrot.lane.b32.xlu0 %v1225, 96
        %v1235 = vpop.permute.xlu0 %1234
        %1236 = vrot.lane.b32.xlu0 %v1226, 96
        %v1237 = vpop.permute.xlu0 %1236
        %1238 = vrot.lane.b32.xlu0 %v1227, 96
        %v1239 = vpop.permute.xlu0 %1238
        %1240 = vrot.lane.b32.xlu0 %v1228, 96
        %v1241 = vpop.permute.xlu0 %1240
        %1242 = vrot.lane.b32.xlu0 %v1229, 96
        %v1243 = vpop.permute.xlu0 %1242
        %1244 = vrot.lane.b32.xlu0 %v1230, 96
        %v1245 = vpop.permute.xlu0 %1244
        %1246 = vrot.lane.b32.xlu0 %v1231, 96
        %v1247 = vpop.permute.xlu0 %1246
        %v1248 = vsel %vm537, %v1245, %v1247
        %v1249 = vsel %vm537, %v1243, %v1245
        %v1250 = vsel %vm537, %v1241, %v1243
        %v1251 = vsel %vm537, %v1239, %v1241
        %v1252 = vsel %vm537, %v1237, %v1239
        %v1253 = vsel %vm537, %v1235, %v1237
        %v1254 = vsel %vm537, %v1233, %v1235
        %v1255 = vsel %vm537, %v1247, %v1233
        %v1256 = vmax.f32 %v1224, %v1254
        %v1257 = vmax.f32 %v1225, %v1253
        %v1258 = vmax.f32 %v1226, %v1252
        %v1259 = vmax.f32 %v1227, %v1251
        %v1260 = vmax.f32 %v1228, %v1250
        %v1261 = vmax.f32 %v1229, %v1249
        %v1262 = vmax.f32 %v1230, %v1248
        %v1263 = vmax.f32 %v1231, %v1255
        %1264 = vrot.lane.b32.xlu0 %v1256, 126
        %v1265 = vpop.permute.xlu0 %1264
        %1266 = vrot.lane.b32.xlu0 %v1257, 126
        %v1267 = vpop.permute.xlu0 %1266
        %1268 = vrot.lane.b32.xlu0 %v1258, 126
        %v1269 = vpop.permute.xlu0 %1268
        %1270 = vrot.lane.b32.xlu0 %v1259, 126
        %v1271 = vpop.permute.xlu0 %1270
        %1272 = vrot.lane.b32.xlu0 %v1260, 126
        %v1273 = vpop.permute.xlu0 %1272
        %1274 = vrot.lane.b32.xlu0 %v1261, 126
        %v1275 = vpop.permute.xlu0 %1274
        %1276 = vrot.lane.b32.xlu0 %v1262, 126
        %v1277 = vpop.permute.xlu0 %1276
        %1278 = vrot.lane.b32.xlu0 %v1263, 126
        %v1279 = vpop.permute.xlu0 %1278
        %v1280 = vsel %vm462, %v1277, %v1279
        %v1281 = vsel %vm462, %v1275, %v1277
        %v1282 = vsel %vm462, %v1273, %v1275
        %v1283 = vsel %vm462, %v1271, %v1273
        %v1284 = vsel %vm462, %v1269, %v1271
        %v1285 = vsel %vm462, %v1267, %v1269
        %v1286 = vsel %vm462, %v1265, %v1267
        %v1287 = vsel %vm462, %v1279, %v1265
        %1288 = vrot.lane.b32.xlu0 %v1256, 124
        %v1289 = vpop.permute.xlu0 %1288
        %1290 = vrot.lane.b32.xlu0 %v1257, 124
        %v1291 = vpop.permute.xlu0 %1290
        %1292 = vrot.lane.b32.xlu0 %v1258, 124
        %v1293 = vpop.permute.xlu0 %1292
        %1294 = vrot.lane.b32.xlu0 %v1259, 124
        %v1295 = vpop.permute.xlu0 %1294
        %1296 = vrot.lane.b32.xlu0 %v1260, 124
        %v1297 = vpop.permute.xlu0 %1296
        %1298 = vrot.lane.b32.xlu0 %v1261, 124
        %v1299 = vpop.permute.xlu0 %1298
        %1300 = vrot.lane.b32.xlu0 %v1262, 124
        %v1301 = vpop.permute.xlu0 %1300
        %1302 = vrot.lane.b32.xlu0 %v1263, 124
        %v1303 = vpop.permute.xlu0 %1302
        %v1304 = vsel %vm512, %v1301, %v1303
        %v1305 = vsel %vm512, %v1299, %v1301
        %v1306 = vsel %vm512, %v1297, %v1299
        %v1307 = vsel %vm512, %v1295, %v1297
        %v1308 = vsel %vm512, %v1293, %v1295
        %v1309 = vsel %vm512, %v1291, %v1293
        %v1310 = vsel %vm512, %v1289, %v1291
        %v1311 = vsel %vm512, %v1303, %v1289
        %1312 = vrot.lane.b32.xlu0 %v1256, 122
        %v1313 = vpop.permute.xlu0 %1312
        %1314 = vrot.lane.b32.xlu0 %v1257, 122
        %v1315 = vpop.permute.xlu0 %1314
        %1316 = vrot.lane.b32.xlu0 %v1258, 122
        %v1317 = vpop.permute.xlu0 %1316
        %1318 = vrot.lane.b32.xlu0 %v1259, 122
        %v1319 = vpop.permute.xlu0 %1318
        %1320 = vrot.lane.b32.xlu0 %v1260, 122
        %v1321 = vpop.permute.xlu0 %1320
        %1322 = vrot.lane.b32.xlu0 %v1261, 122
        %v1323 = vpop.permute.xlu0 %1322
        %1324 = vrot.lane.b32.xlu0 %v1262, 122
        %v1325 = vpop.permute.xlu0 %1324
        %1326 = vrot.lane.b32.xlu0 %v1263, 122
        %v1327 = vpop.permute.xlu0 %1326
        %vm1328 = vcmp.lt.s32.totalorder %v436, 122
        %v1329 = vsel %vm1328, %v1325, %v1327
        %v1330 = vsel %vm1328, %v1323, %v1325
        %v1331 = vsel %vm1328, %v1321, %v1323
        %v1332 = vsel %vm1328, %v1319, %v1321
        %v1333 = vsel %vm1328, %v1317, %v1319
        %v1334 = vsel %vm1328, %v1315, %v1317
        %v1335 = vsel %vm1328, %v1313, %v1315
        %v1336 = vsel %vm1328, %v1327, %v1313
        %1337 = vrot.lane.b32.xlu0 %v1256, 120
        %v1338 = vpop.permute.xlu0 %1337
        %1339 = vrot.lane.b32.xlu0 %v1257, 120
        %v1340 = vpop.permute.xlu0 %1339
        %1341 = vrot.lane.b32.xlu0 %v1258, 120
        %v1342 = vpop.permute.xlu0 %1341
        %1343 = vrot.lane.b32.xlu0 %v1259, 120
        %v1344 = vpop.permute.xlu0 %1343
        %1345 = vrot.lane.b32.xlu0 %v1260, 120
        %v1346 = vpop.permute.xlu0 %1345
        %1347 = vrot.lane.b32.xlu0 %v1261, 120
        %v1348 = vpop.permute.xlu0 %1347
        %1349 = vrot.lane.b32.xlu0 %v1262, 120
        %v1350 = vpop.permute.xlu0 %1349
        %1351 = vrot.lane.b32.xlu0 %v1263, 120
        %v1352 = vpop.permute.xlu0 %1351
        %vm1353 = vcmp.lt.s32.totalorder %v436, 120
        %v1354 = vsel %vm1353, %v1350, %v1352
        %v1355 = vsel %vm1353, %v1348, %v1350
        %v1356 = vsel %vm1353, %v1346, %v1348
        %v1357 = vsel %vm1353, %v1344, %v1346
        %v1358 = vsel %vm1353, %v1342, %v1344
        %v1359 = vsel %vm1353, %v1340, %v1342
        %v1360 = vsel %vm1353, %v1338, %v1340
        %v1361 = vsel %vm1353, %v1352, %v1338
        %1362 = vrot.lane.b32.xlu0 %v1256, 64
        %v1363 = vpop.permute.xlu0 %1362
        %1364 = vrot.lane.b32.xlu0 %v1257, 64
        %v1365 = vpop.permute.xlu0 %1364
        %1366 = vrot.lane.b32.xlu0 %v1258, 64
        %v1367 = vpop.permute.xlu0 %1366
        %1368 = vrot.lane.b32.xlu0 %v1259, 64
        %v1369 = vpop.permute.xlu0 %1368
        %1370 = vrot.lane.b32.xlu0 %v1260, 64
        %v1371 = vpop.permute.xlu0 %1370
        %1372 = vrot.lane.b32.xlu0 %v1261, 64
        %v1373 = vpop.permute.xlu0 %1372
        %1374 = vrot.lane.b32.xlu0 %v1262, 64
        %v1375 = vpop.permute.xlu0 %1374
        %1376 = vrot.lane.b32.xlu0 %v1263, 64
        %v1377 = vpop.permute.xlu0 %1376
        %v1378 = vsel %vm662, %v1375, %v1377
        %v1379 = vsel %vm662, %v1373, %v1375
        %v1380 = vsel %vm662, %v1371, %v1373
        %v1381 = vsel %vm662, %v1369, %v1371
        %v1382 = vsel %vm662, %v1367, %v1369
        %v1383 = vsel %vm662, %v1365, %v1367
        %v1384 = vsel %vm662, %v1363, %v1365
        %v1385 = vsel %vm662, %v1377, %v1363
        %1386 = vrot.lane.b32.xlu0 %v1256, 62
        %v1387 = vpop.permute.xlu0 %1386
        %1388 = vrot.lane.b32.xlu0 %v1257, 62
        %v1389 = vpop.permute.xlu0 %1388
        %1390 = vrot.lane.b32.xlu0 %v1258, 62
        %v1391 = vpop.permute.xlu0 %1390
        %1392 = vrot.lane.b32.xlu0 %v1259, 62
        %v1393 = vpop.permute.xlu0 %1392
        %1394 = vrot.lane.b32.xlu0 %v1260, 62
        %v1395 = vpop.permute.xlu0 %1394
        %1396 = vrot.lane.b32.xlu0 %v1261, 62
        %v1397 = vpop.permute.xlu0 %1396
        %1398 = vrot.lane.b32.xlu0 %v1262, 62
        %v1399 = vpop.permute.xlu0 %1398
        %1400 = vrot.lane.b32.xlu0 %v1263, 62
        %v1401 = vpop.permute.xlu0 %1400
        %v1402 = vsel %vm712, %v1399, %v1401
        %v1403 = vsel %vm712, %v1397, %v1399
        %v1404 = vsel %vm712, %v1395, %v1397
        %v1405 = vsel %vm712, %v1393, %v1395
        %v1406 = vsel %vm712, %v1391, %v1393
        %v1407 = vsel %vm712, %v1389, %v1391
        %v1408 = vsel %vm712, %v1387, %v1389
        %v1409 = vsel %vm712, %v1401, %v1387
        %1410 = vrot.lane.b32.xlu0 %v1256, 60
        %v1411 = vpop.permute.xlu0 %1410
        %1412 = vrot.lane.b32.xlu0 %v1257, 60
        %v1413 = vpop.permute.xlu0 %1412
        %1414 = vrot.lane.b32.xlu0 %v1258, 60
        %v1415 = vpop.permute.xlu0 %1414
        %1416 = vrot.lane.b32.xlu0 %v1259, 60
        %v1417 = vpop.permute.xlu0 %1416
        %1418 = vrot.lane.b32.xlu0 %v1260, 60
        %v1419 = vpop.permute.xlu0 %1418
        %1420 = vrot.lane.b32.xlu0 %v1261, 60
        %v1421 = vpop.permute.xlu0 %1420
        %1422 = vrot.lane.b32.xlu0 %v1262, 60
        %v1423 = vpop.permute.xlu0 %1422
        %1424 = vrot.lane.b32.xlu0 %v1263, 60
        %v1425 = vpop.permute.xlu0 %1424
        %v1426 = vsel %vm762, %v1423, %v1425
        %v1427 = vsel %vm762, %v1421, %v1423
        %v1428 = vsel %vm762, %v1419, %v1421
        %v1429 = vsel %vm762, %v1417, %v1419
        %v1430 = vsel %vm762, %v1415, %v1417
        %v1431 = vsel %vm762, %v1413, %v1415
        %v1432 = vsel %vm762, %v1411, %v1413
        %v1433 = vsel %vm762, %v1425, %v1411
        %1434 = vrot.lane.b32.xlu0 %v1256, 58
        %v1435 = vpop.permute.xlu0 %1434
        %1436 = vrot.lane.b32.xlu0 %v1257, 58
        %v1437 = vpop.permute.xlu0 %1436
        %1438 = vrot.lane.b32.xlu0 %v1258, 58
        %v1439 = vpop.permute.xlu0 %1438
        %1440 = vrot.lane.b32.xlu0 %v1259, 58
        %v1441 = vpop.permute.xlu0 %1440
        %1442 = vrot.lane.b32.xlu0 %v1260, 58
        %v1443 = vpop.permute.xlu0 %1442
        %1444 = vrot.lane.b32.xlu0 %v1261, 58
        %v1445 = vpop.permute.xlu0 %1444
        %1446 = vrot.lane.b32.xlu0 %v1262, 58
        %v1447 = vpop.permute.xlu0 %1446
        %1448 = vrot.lane.b32.xlu0 %v1263, 58
        %v1449 = vpop.permute.xlu0 %1448
        %vm1450 = vcmp.lt.s32.totalorder %v436, 58
        %v1451 = vsel %vm1450, %v1447, %v1449
        %v1452 = vsel %vm1450, %v1445, %v1447
        %v1453 = vsel %vm1450, %v1443, %v1445
        %v1454 = vsel %vm1450, %v1441, %v1443
        %v1455 = vsel %vm1450, %v1439, %v1441
        %v1456 = vsel %vm1450, %v1437, %v1439
        %v1457 = vsel %vm1450, %v1435, %v1437
        %v1458 = vsel %vm1450, %v1449, %v1435
        %1459 = vrot.lane.b32.xlu0 %v1256, 56
        %v1460 = vpop.permute.xlu0 %1459
        %1461 = vrot.lane.b32.xlu0 %v1257, 56
        %v1462 = vpop.permute.xlu0 %1461
        %1463 = vrot.lane.b32.xlu0 %v1258, 56
        %v1464 = vpop.permute.xlu0 %1463
        %1465 = vrot.lane.b32.xlu0 %v1259, 56
        %v1466 = vpop.permute.xlu0 %1465
        %1467 = vrot.lane.b32.xlu0 %v1260, 56
        %v1468 = vpop.permute.xlu0 %1467
        %1469 = vrot.lane.b32.xlu0 %v1261, 56
        %v1470 = vpop.permute.xlu0 %1469
        %1471 = vrot.lane.b32.xlu0 %v1262, 56
        %v1472 = vpop.permute.xlu0 %1471
        %1473 = vrot.lane.b32.xlu0 %v1263, 56
        %v1474 = vpop.permute.xlu0 %1473
        %vm1475 = vcmp.lt.s32.totalorder %v436, 56
        %v1476 = vsel %vm1475, %v1472, %v1474
        %v1477 = vsel %vm1475, %v1470, %v1472
        %v1478 = vsel %vm1475, %v1468, %v1470
        %v1479 = vsel %vm1475, %v1466, %v1468
        %v1480 = vsel %vm1475, %v1464, %v1466
        %v1481 = vsel %vm1475, %v1462, %v1464
        %v1482 = vsel %vm1475, %v1460, %v1462
        %v1483 = vsel %vm1475, %v1474, %v1460
        %v1484 = vld [vmem:[%s3] sm:$0xff]
        %v1485 = vld [vmem:[%s3 + $0x8] sm:$0xff]
        %v1486 = vld [vmem:[%s3 + $0x10] sm:$0xff]
        %v1487 = vld [vmem:[%s3 + $0x18] sm:$0xff]
        %v1488 = vld [vmem:[%s4] sm:$0xff]
        %v1489 = vld [vmem:[%s4 + $0x8] sm:$0xff]
        %1491 = vset.pattern.permute.xlu0 0
        %1492 = vperm.xlu0 %1491, %v1488
        %v1493 = vpop.permute.xlu0 %1492
        %1496 = vset.pattern.permute.xlu0 0
        %1497 = vperm.xlu0 %1496, %v1489
        %v1498 = vpop.permute.xlu0 %1497
        %v1501 = vsel %vm904, %v1485, 0
        %v1504 = vsel %vm904, %v1487, 0
        %1506 = vmatprep.subr.mxu0 %v1257
        %1507 = vmatpush1.msra.mxu0 %v1256
        %1508 = vmatprep.subr.mxu0 %v1285
        %1509 = vmatpush1.msra.mxu0 %v1286
        %1510 = vmatprep.subr.mxu0 %v1309
        %1511 = vmatpush1.msra.mxu0 %v1310
        %1512 = vmatprep.subr.mxu0 %v1334
        %1513 = vmatpush1.msra.mxu0 %v1335
        %1514 = vmatprep.subr.mxu0 %v1359
        %1515 = vmatpush1.msra.mxu0 %v1360
        %1516 = vmatprep.subr.mxu0 %v1383
        %1517 = vmatpush1.msra.mxu0 %v1384
        %1518 = vmatprep.subr.mxu0 %v1407
        %1519 = vmatpush1.msra.mxu0 %v1408
        %1520 = vmatprep.subr.mxu0 %v1431
        %1521 = vmatpush1.msra.mxu0 %v1432
        %1522 = vmatprep.subr.mxu0 %v1456
        %1523 = vmatpush1.msra.mxu0 %v1457
        %1524 = vmatprep.subr.mxu0 %v1481
        %1525 = vmatpush1.msra.mxu0 %v1482
        %1526 = vmatprep.subr.mxu0 %v1258
        %1527 = vmatpush1.msra.mxu0 %v1257
        %1528 = vmatprep.subr.mxu0 %v1284
        %1529 = vmatpush1.msra.mxu0 %v1285
        %1530 = vmatprep.subr.mxu0 %v1308
        %1531 = vmatpush1.msra.mxu0 %v1309
        %1532 = vmatprep.subr.mxu0 %v1333
        %1533 = vmatpush1.msra.mxu0 %v1334
        %1534 = vmatprep.subr.mxu0 %v1358
        %1535 = vmatpush1.msra.mxu0 %v1359
        %1536 = vmatprep.subr.mxu0 %v1382
        %1537 = vmatpush1.msra.mxu0 %v1383
        %1538 = vmatprep.subr.mxu0 %v1406
        %1539 = vmatpush1.msra.mxu0 %v1407
        %1540 = vmatprep.subr.mxu0 %v1430
        %1541 = vmatpush1.msra.mxu0 %v1431
        %1542 = vmatprep.subr.mxu0 %v1455
        %1543 = vmatpush1.msra.mxu0 %v1456
        %1544 = vmatprep.subr.mxu0 %v1480
        %1545 = vmatpush1.msra.mxu0 %v1481
        %1546 = vmatprep.subr.mxu0 %v1259
        %1547 = vmatpush1.msra.mxu0 %v1258
        %1548 = vmatprep.subr.mxu0 %v1283
        %1549 = vmatpush1.msra.mxu0 %v1284
        %1550 = vmatprep.subr.mxu0 %v1307
        %1551 = vmatpush1.msra.mxu0 %v1308
        %1552 = vmatprep.subr.mxu0 %v1332
        %1553 = vmatpush1.msra.mxu0 %v1333
        %1554 = vmatprep.subr.mxu0 %v1357
        %1555 = vmatpush1.msra.mxu0 %v1358
        %1556 = vmatprep.subr.mxu0 0.0
        %1557 = vmatpush1.msra.mxu0 0.0
        %1558 = vmatprep.subr.mxu0 0.0
        %1559 = vmatpush1.msra.mxu0 0.0
        %1560 = vmatprep.subr.mxu0 0.0
        %1561 = vmatpush1.msra.mxu0 0.0
        %1562 = vmatprep.subr.mxu0 0.0
        %1563 = vmatpush1.msra.mxu0 0.0
        %1564 = vmatprep.subr.mxu0 0.0
        %1565 = vmatpush1.msra.mxu0 0.0
        %1566 = vmatprep.subr.mxu0 0.0
        %1567 = vmatpush1.msra.mxu0 0.0
        %1568 = vmatprep.subr.mxu0 0.0
        %1569 = vmatpush1.msra.mxu0 0.0
        %1570 = vmatprep.mubr.f32.mxu0 %v1501
        %1571 = vmatmul.mubr.f32.gmra.mrb[0].mxu0 %v1484
        %v1572 = vpop.f32.mrb[0].mxu0
        %v1573 = vadd.f32 %v1493, %v1572
        %v1574 = vpop.f32.mrb[0].mxu0
        %v1575 = vadd.f32 %v1493, %v1574
        %1576 = vmatprep.mubr.f32.mxu0 %v1504
        %1577 = vmatmul.mubr.f32.gmra.mrb[0].mxu0 %v1486
        %v1578 = vpop.f32.mrb[0].mxu0
        %v1579 = vadd.f32 %v1498, %v1578
        %v1580 = vpop.f32.mrb[0].mxu0
        %v1581 = vadd.f32 %v1498, %v1580
        %1582 = vdwg.mxu0
        %1583 = vmatprep.subr.mxu0 %v1259
        %1584 = vmatpush1.msra.mxu0 %v1258
        %1585 = vmatprep.subr.mxu0 %v1283
        %1586 = vmatpush1.msra.mxu0 %v1284
        %1587 = vmatprep.subr.mxu0 %v1307
        %1588 = vmatpush1.msra.mxu0 %v1308
        %1589 = vmatprep.subr.mxu0 %v1332
        %1590 = vmatpush1.msra.mxu0 %v1333
        %1591 = vmatprep.subr.mxu0 %v1357
        %1592 = vmatpush1.msra.mxu0 %v1358
        %1593 = vmatprep.subr.mxu0 %v1381
        %1594 = vmatpush1.msra.mxu0 %v1382
        %1595 = vmatprep.subr.mxu0 %v1405
        %1596 = vmatpush1.msra.mxu0 %v1406
        %1597 = vmatprep.subr.mxu0 %v1429
        %1598 = vmatpush1.msra.mxu0 %v1430
        %1599 = vmatprep.subr.mxu0 %v1454
        %1600 = vmatpush1.msra.mxu0 %v1455
        %1601 = vmatprep.subr.mxu0 %v1479
        %1602 = vmatpush1.msra.mxu0 %v1480
        %1603 = vmatprep.subr.mxu0 %v1260
        %1604 = vmatpush1.msra.mxu0 %v1259
        %1605 = vmatprep.subr.mxu0 %v1282
        %1606 = vmatpush1.msra.mxu0 %v1283
        %1607 = vmatprep.subr.mxu0 %v1306
        %1608 = vmatpush1.msra.mxu0 %v1307
        %1609 = vmatprep.subr.mxu0 %v1331
        %1610 = vmatpush1.msra.mxu0 %v1332
        %1611 = vmatprep.subr.mxu0 %v1356
        %1612 = vmatpush1.msra.mxu0 %v1357
        %1613 = vmatprep.subr.mxu0 %v1380
        %1614 = vmatpush1.msra.mxu0 %v1381
        %1615 = vmatprep.subr.mxu0 %v1404
        %1616 = vmatpush1.msra.mxu0 %v1405
        %1617 = vmatprep.subr.mxu0 %v1428
        %1618 = vmatpush1.msra.mxu0 %v1429
        %1619 = vmatprep.subr.mxu0 %v1453
        %1620 = vmatpush1.msra.mxu0 %v1454
        %1621 = vmatprep.subr.mxu0 %v1478
        %1622 = vmatpush1.msra.mxu0 %v1479
        %1623 = vmatprep.subr.mxu0 %v1261
        %1624 = vmatpush1.msra.mxu0 %v1260
        %1625 = vmatprep.subr.mxu0 %v1281
        %1626 = vmatpush1.msra.mxu0 %v1282
        %1627 = vmatprep.subr.mxu0 %v1305
        %1628 = vmatpush1.msra.mxu0 %v1306
        %1629 = vmatprep.subr.mxu0 %v1330
        %1630 = vmatpush1.msra.mxu0 %v1331
        %1631 = vmatprep.subr.mxu0 %v1355
        %1632 = vmatpush1.msra.mxu0 %v1356
        %1633 = vmatprep.subr.mxu0 0.0
        %1634 = vmatpush1.msra.mxu0 0.0
        %1635 = vmatprep.subr.mxu0 0.0
        %1636 = vmatpush1.msra.mxu0 0.0
        %1637 = vmatprep.subr.mxu0 0.0
        %1638 = vmatpush1.msra.mxu0 0.0
        %1639 = vmatprep.subr.mxu0 0.0
        %1640 = vmatpush1.msra.mxu0 0.0
        %1641 = vmatprep.subr.mxu0 0.0
        %1642 = vmatpush1.msra.mxu0 0.0
        %1643 = vmatprep.subr.mxu0 0.0
        %1644 = vmatpush1.msra.mxu0 0.0
        %1645 = vmatprep.subr.mxu0 0.0
        %1646 = vmatpush1.msra.mxu0 0.0
        %1647 = vmatprep.mubr.f32.mxu0 %v1501
        %1648 = vmatmul.mubr.f32.gmra.mrb[0].mxu0 %v1484
        %v1649 = vpop.f32.mrb[0].mxu0
        %v1650 = vadd.f32 %v1493, %v1649
        %v1651 = vpop.f32.mrb[0].mxu0
        %v1652 = vadd.f32 %v1493, %v1651
        %1653 = vmatprep.mubr.f32.mxu0 %v1504
        %1654 = vmatmul.mubr.f32.gmra.mrb[0].mxu0 %v1486
        %v1655 = vpop.f32.mrb[0].mxu0
        %v1656 = vadd.f32 %v1498, %v1655
        %v1657 = vpop.f32.mrb[0].mxu0
        %v1658 = vadd.f32 %v1498, %v1657
        %1659 = vdwg.mxu0
        %1660 = vmatprep.subr.mxu0 %v1261
        %1661 = vmatpush1.msra.mxu0 %v1260
        %1662 = vmatprep.subr.mxu0 %v1281
        %1663 = vmatpush1.msra.mxu0 %v1282
        %1664 = vmatprep.subr.mxu0 %v1305
        %1665 = vmatpush1.msra.mxu0 %v1306
        %1666 = vmatprep.subr.mxu0 %v1330
        %1667 = vmatpush1.msra.mxu0 %v1331
        %1668 = vmatprep.subr.mxu0 %v1355
        %1669 = vmatpush1.msra.mxu0 %v1356
        %1670 = vmatprep.subr.mxu0 %v1379
        %1671 = vmatpush1.msra.mxu0 %v1380
        %1672 = vmatprep.subr.mxu0 %v1403
        %1673 = vmatpush1.msra.mxu0 %v1404
        %1674 = vmatprep.subr.mxu0 %v1427
        %1675 = vmatpush1.msra.mxu0 %v1428
        %1676 = vmatprep.subr.mxu0 %v1452
        %1677 = vmatpush1.msra.mxu0 %v1453
        %1678 = vmatprep.subr.mxu0 %v1477
        %1679 = vmatpush1.msra.mxu0 %v1478
        %1680 = vmatprep.subr.mxu0 %v1262
        %1681 = vmatpush1.msra.mxu0 %v1261
        %1682 = vmatprep.subr.mxu0 %v1280
        %1683 = vmatpush1.msra.mxu0 %v1281
        %1684 = vmatprep.subr.mxu0 %v1304
        %1685 = vmatpush1.msra.mxu0 %v1305
        %1686 = vmatprep.subr.mxu0 %v1329
        %1687 = vmatpush1.msra.mxu0 %v1330
        %1688 = vmatprep.subr.mxu0 %v1354
        %1689 = vmatpush1.msra.mxu0 %v1355
        %1690 = vmatprep.subr.mxu0 %v1378
        %1691 = vmatpush1.msra.mxu0 %v1379
        %1692 = vmatprep.subr.mxu0 %v1402
        %1693 = vmatpush1.msra.mxu0 %v1403
        %1694 = vmatprep.subr.mxu0 %v1426
        %1695 = vmatpush1.msra.mxu0 %v1427
        %1696 = vmatprep.subr.mxu0 %v1451
        %1697 = vmatpush1.msra.mxu0 %v1452
        %1698 = vmatprep.subr.mxu0 %v1476
        %1699 = vmatpush1.msra.mxu0 %v1477
        %1700 = vmatprep.subr.mxu0 %v1263
        %1701 = vmatpush1.msra.mxu0 %v1262
        %1702 = vmatprep.subr.mxu0 %v1287
        %1703 = vmatpush1.msra.mxu0 %v1280
        %1704 = vmatprep.subr.mxu0 %v1311
        %1705 = vmatpush1.msra.mxu0 %v1304
        %1706 = vmatprep.subr.mxu0 %v1336
        %1707 = vmatpush1.msra.mxu0 %v1329
        %1708 = vmatprep.subr.mxu0 %v1361
        %1709 = vmatpush1.msra.mxu0 %v1354
        %1710 = vmatprep.subr.mxu0 0.0
        %1711 = vmatpush1.msra.mxu0 0.0
        %1712 = vmatprep.subr.mxu0 0.0
        %1713 = vmatpush1.msra.mxu0 0.0
        %1714 = vmatprep.subr.mxu0 0.0
        %1715 = vmatpush1.msra.mxu0 0.0
        %1716 = vmatprep.subr.mxu0 0.0
        %1717 = vmatpush1.msra.mxu0 0.0
        %1718 = vmatprep.subr.mxu0 0.0
        %1719 = vmatpush1.msra.mxu0 0.0
        %1720 = vmatprep.subr.mxu0 0.0
        %1721 = vmatpush1.msra.mxu0 0.0
        %1722 = vmatprep.subr.mxu0 0.0
        %1723 = vmatpush1.msra.mxu0 0.0
        %1724 = vmatprep.mubr.f32.mxu0 %v1501
        %1725 = vmatmul.mubr.f32.gmra.mrb[0].mxu0 %v1484
        %v1726 = vpop.f32.mrb[0].mxu0
        %v1727 = vadd.f32 %v1493, %v1726
        %v1728 = vpop.f32.mrb[0].mxu0
        %v1729 = vadd.f32 %v1493, %v1728
        %1730 = vmatprep.mubr.f32.mxu0 %v1504
        %1731 = vmatmul.mubr.f32.gmra.mrb[0].mxu0 %v1486
        %v1732 = vpop.f32.mrb[0].mxu0
        %v1733 = vadd.f32 %v1498, %v1732
        %v1734 = vpop.f32.mrb[0].mxu0
        %v1735 = vadd.f32 %v1498, %v1734
        %1736 = vdwg.mxu0
        %1737 = vmatprep.subr.mxu0 %v1263
        %1738 = vmatpush1.msra.mxu0 %v1262
        %1739 = vmatprep.subr.mxu0 %v1287
        %1740 = vmatpush1.msra.mxu0 %v1280
        %1741 = vmatprep.subr.mxu0 %v1311
        %1742 = vmatpush1.msra.mxu0 %v1304
        %1743 = vmatprep.subr.mxu0 %v1336
        %1744 = vmatpush1.msra.mxu0 %v1329
        %1745 = vmatprep.subr.mxu0 %v1361
        %1746 = vmatpush1.msra.mxu0 %v1354
        %1747 = vmatprep.subr.mxu0 %v1385
        %1748 = vmatpush1.msra.mxu0 %v1378
        %1749 = vmatprep.subr.mxu0 %v1409
        %1750 = vmatpush1.msra.mxu0 %v1402
        %1751 = vmatprep.subr.mxu0 %v1433
        %1752 = vmatpush1.msra.mxu0 %v1426
        %1753 = vmatprep.subr.mxu0 %v1458
        %1754 = vmatpush1.msra.mxu0 %v1451
        %1755 = vmatprep.subr.mxu0 %v1483
        %1756 = vmatpush1.msra.mxu0 %v1476
        %1757 = vmatprep.subr.mxu0 %v1256
        %1758 = vmatpush1.msra.mxu0 %v1263
        %1759 = vmatprep.subr.mxu0 %v1286
        %1760 = vmatpush1.msra.mxu0 %v1287
        %1761 = vmatprep.subr.mxu0 %v1310
        %1762 = vmatpush1.msra.mxu0 %v1311
        %1763 = vmatprep.subr.mxu0 %v1335
        %1764 = vmatpush1.msra.mxu0 %v1336
        %1765 = vmatprep.subr.mxu0 %v1360
        %1766 = vmatpush1.msra.mxu0 %v1361
        %1767 = vmatprep.subr.mxu0 %v1384
        %1768 = vmatpush1.msra.mxu0 %v1385
        %1769 = vmatprep.subr.mxu0 %v1408
        %1770 = vmatpush1.msra.mxu0 %v1409
        %1771 = vmatprep.subr.mxu0 %v1432
        %1772 = vmatpush1.msra.mxu0 %v1433
        %1773 = vmatprep.subr.mxu0 %v1457
        %1774 = vmatpush1.msra.mxu0 %v1458
        %1775 = vmatprep.subr.mxu0 %v1482
        %1776 = vmatpush1.msra.mxu0 %v1483
        %1777 = vmatprep.subr.mxu0 %v1257
        %1778 = vmatpush1.msra.mxu0 %v1256
        %1779 = vmatprep.subr.mxu0 %v1285
        %1780 = vmatpush1.msra.mxu0 %v1286
        %1781 = vmatprep.subr.mxu0 %v1309
        %1782 = vmatpush1.msra.mxu0 %v1310
        %1783 = vmatprep.subr.mxu0 %v1334
        %1784 = vmatpush1.msra.mxu0 %v1335
        %1785 = vmatprep.subr.mxu0 %v1359
        %1786 = vmatpush1.msra.mxu0 %v1360
        %1787 = vmatprep.subr.mxu0 0.0
        %1788 = vmatpush1.msra.mxu0 0.0
        %1789 = vmatprep.subr.mxu0 0.0
        %1790 = vmatpush1.msra.mxu0 0.0
        %1791 = vmatprep.subr.mxu0 0.0
        %1792 = vmatpush1.msra.mxu0 0.0
        %1793 = vmatprep.subr.mxu0 0.0
        %1794 = vmatpush1.msra.mxu0 0.0
        %1795 = vmatprep.subr.mxu0 0.0
        %1796 = vmatpush1.msra.mxu0 0.0
        %1797 = vmatprep.subr.mxu0 0.0
        %1798 = vmatpush1.msra.mxu0 0.0
        %1799 = vmatprep.subr.mxu0 0.0
        %1800 = vmatpush1.msra.mxu0 0.0
        %1801 = vmatprep.mubr.f32.mxu0 %v1501
        %1802 = vmatmul.mubr.f32.gmra.mrb[0].mxu0 %v1484
        %v1803 = vpop.f32.mrb[0].mxu0
        %v1804 = vadd.f32 %v1493, %v1803
        %v1805 = vpop.f32.mrb[0].mxu0
        %v1806 = vadd.f32 %v1493, %v1805
        %1807 = vmatprep.mubr.f32.mxu0 %v1504
        %1808 = vmatmul.mubr.f32.gmra.mrb[0].mxu0 %v1486
        %v1809 = vpop.f32.mrb[0].mxu0
        %v1810 = vadd.f32 %v1498, %v1809
        %v1811 = vpop.f32.mrb[0].mxu0
        %v1812 = vadd.f32 %v1498, %v1811
        %1813 = vdwg.mxu0
        %v1814 = vmax.f32 %v1573, 0.0
        %v1815 = vmax.f32 %v1575, 0.0
        %v1816 = vmax.f32 %v1650, 0.0
        %v1817 = vmax.f32 %v1652, 0.0
        %v1818 = vmax.f32 %v1727, 0.0
        %v1819 = vmax.f32 %v1729, 0.0
        %v1820 = vmax.f32 %v1804, 0.0
        %v1821 = vmax.f32 %v1806, 0.0
        %v1822 = vmax.f32 %v1579, 0.0
        %v1823 = vmax.f32 %v1581, 0.0
        %v1824 = vmax.f32 %v1656, 0.0
        %v1825 = vmax.f32 %v1658, 0.0
        %v1826 = vmax.f32 %v1733, 0.0
        %v1827 = vmax.f32 %v1735, 0.0
        %v1828 = vmax.f32 %v1810, 0.0
        %v1829 = vmax.f32 %v1812, 0.0
        %1830 = vrot.lane.b32.xlu0 %v1814, 126
        %v1831 = vpop.permute.xlu0 %1830
        %1832 = vrot.lane.b32.xlu0 %v1822, 126
        %v1833 = vpop.permute.xlu0 %1832
        %1834 = vrot.lane.b32.xlu0 %v1815, 126
        %v1835 = vpop.permute.xlu0 %1834
        %1836 = vrot.lane.b32.xlu0 %v1823, 126
        %v1837 = vpop.permute.xlu0 %1836
        %1838 = vrot.lane.b32.xlu0 %v1816, 126
        %v1839 = vpop.permute.xlu0 %1838
        %1840 = vrot.lane.b32.xlu0 %v1824, 126
        %v1841 = vpop.permute.xlu0 %1840
        %1842 = vrot.lane.b32.xlu0 %v1817, 126
        %v1843 = vpop.permute.xlu0 %1842
        %1844 = vrot.lane.b32.xlu0 %v1825, 126
        %v1845 = vpop.permute.xlu0 %1844
        %1846 = vrot.lane.b32.xlu0 %v1818, 126
        %v1847 = vpop.permute.xlu0 %1846
        %1848 = vrot.lane.b32.xlu0 %v1826, 126
        %v1849 = vpop.permute.xlu0 %1848
        %1850 = vrot.lane.b32.xlu0 %v1819, 126
        %v1851 = vpop.permute.xlu0 %1850
        %1852 = vrot.lane.b32.xlu0 %v1827, 126
        %v1853 = vpop.permute.xlu0 %1852
        %1854 = vrot.lane.b32.xlu0 %v1820, 126
        %v1855 = vpop.permute.xlu0 %1854
        %1856 = vrot.lane.b32.xlu0 %v1828, 126
        %v1857 = vpop.permute.xlu0 %1856
        %1858 = vrot.lane.b32.xlu0 %v1821, 126
        %v1859 = vpop.permute.xlu0 %1858
        %1860 = vrot.lane.b32.xlu0 %v1829, 126
        %v1861 = vpop.permute.xlu0 %1860
        %v1862 = vsel %vm462, %v1855, %v1859
        %v1863 = vsel %vm462, %v1857, %v1861
        %v1864 = vsel %vm462, %v1851, %v1855
        %v1865 = vsel %vm462, %v1853, %v1857
        %v1866 = vsel %vm462, %v1847, %v1851
        %v1867 = vsel %vm462, %v1849, %v1853
        %v1868 = vsel %vm462, %v1843, %v1847
        %v1869 = vsel %vm462, %v1845, %v1849
        %v1870 = vsel %vm462, %v1839, %v1843
        %v1871 = vsel %vm462, %v1841, %v1845
        %v1872 = vsel %vm462, %v1835, %v1839
        %v1873 = vsel %vm462, %v1837, %v1841
        %v1874 = vsel %vm462, %v1831, %v1835
        %v1875 = vsel %vm462, %v1833, %v1837
        %v1876 = vsel %vm462, %v1859, %v1831
        %v1877 = vsel %vm462, %v1861, %v1833
        %v1878 = vmax.f32 %v1814, %v1874
        %v1879 = vmax.f32 %v1815, %v1872
        %v1880 = vmax.f32 %v1816, %v1870
        %v1881 = vmax.f32 %v1817, %v1868
        %v1882 = vmax.f32 %v1818, %v1866
        %v1883 = vmax.f32 %v1819, %v1864
        %v1884 = vmax.f32 %v1820, %v1862
        %v1885 = vmax.f32 %v1821, %v1876
        %v1886 = vmax.f32 %v1822, %v1875
        %v1887 = vmax.f32 %v1823, %v1873
        %v1888 = vmax.f32 %v1824, %v1871
        %v1889 = vmax.f32 %v1825, %v1869
        %v1890 = vmax.f32 %v1826, %v1867
        %v1891 = vmax.f32 %v1827, %v1865
        %v1892 = vmax.f32 %v1828, %v1863
        %v1893 = vmax.f32 %v1829, %v1877
        %1894 = vrot.lane.b32.xlu0 %v1878, 64
        %v1895 = vpop.permute.xlu0 %1894
        %1896 = vrot.lane.b32.xlu0 %v1886, 64
        %v1897 = vpop.permute.xlu0 %1896
        %1898 = vrot.lane.b32.xlu0 %v1879, 64
        %v1899 = vpop.permute.xlu0 %1898
        %1900 = vrot.lane.b32.xlu0 %v1887, 64
        %v1901 = vpop.permute.xlu0 %1900
        %1902 = vrot.lane.b32.xlu0 %v1880, 64
        %v1903 = vpop.permute.xlu0 %1902
        %1904 = vrot.lane.b32.xlu0 %v1888, 64
        %v1905 = vpop.permute.xlu0 %1904
        %1906 = vrot.lane.b32.xlu0 %v1881, 64
        %v1907 = vpop.permute.xlu0 %1906
        %1908 = vrot.lane.b32.xlu0 %v1889, 64
        %v1909 = vpop.permute.xlu0 %1908
        %1910 = vrot.lane.b32.xlu0 %v1882, 64
        %v1911 = vpop.permute.xlu0 %1910
        %1912 = vrot.lane.b32.xlu0 %v1890, 64
        %v1913 = vpop.permute.xlu0 %1912
        %1914 = vrot.lane.b32.xlu0 %v1883, 64
        %v1915 = vpop.permute.xlu0 %1914
        %1916 = vrot.lane.b32.xlu0 %v1891, 64
        %v1917 = vpop.permute.xlu0 %1916
        %1918 = vrot.lane.b32.xlu0 %v1884, 64
        %v1919 = vpop.permute.xlu0 %1918
        %1920 = vrot.lane.b32.xlu0 %v1892, 64
        %v1921 = vpop.permute.xlu0 %1920
        %1922 = vrot.lane.b32.xlu0 %v1885, 64
        %v1923 = vpop.permute.xlu0 %1922
        %1924 = vrot.lane.b32.xlu0 %v1893, 64
        %v1925 = vpop.permute.xlu0 %1924
        %v1926 = vsel %vm662, %v1919, %v1923
        %v1927 = vsel %vm662, %v1921, %v1925
        %v1928 = vsel %vm662, %v1915, %v1919
        %v1929 = vsel %vm662, %v1917, %v1921
        %v1930 = vsel %vm662, %v1911, %v1915
        %v1931 = vsel %vm662, %v1913, %v1917
        %v1932 = vsel %vm662, %v1907, %v1911
        %v1933 = vsel %vm662, %v1909, %v1913
        %v1934 = vsel %vm662, %v1903, %v1907
        %v1935 = vsel %vm662, %v1905, %v1909
        %v1936 = vsel %vm662, %v1899, %v1903
        %v1937 = vsel %vm662, %v1901, %v1905
        %v1938 = vsel %vm662, %v1895, %v1899
        %v1939 = vsel %vm662, %v1897, %v1901
        %v1940 = vsel %vm662, %v1923, %v1895
        %v1941 = vsel %vm662, %v1925, %v1897
        %v1942 = vmax.f32 %v1878, %v1938
        %v1943 = vmax.f32 %v1879, %v1936
        %v1944 = vmax.f32 %v1880, %v1934
        %v1945 = vmax.f32 %v1881, %v1932
        %v1946 = vmax.f32 %v1882, %v1930
        %v1947 = vmax.f32 %v1883, %v1928
        %v1948 = vmax.f32 %v1884, %v1926
        %v1949 = vmax.f32 %v1885, %v1940
        %v1950 = vmax.f32 %v1886, %v1939
        %v1951 = vmax.f32 %v1887, %v1937
        %v1952 = vmax.f32 %v1888, %v1935
        %v1953 = vmax.f32 %v1889, %v1933
        %v1954 = vmax.f32 %v1890, %v1931
        %v1955 = vmax.f32 %v1891, %v1929
        %v1956 = vmax.f32 %v1892, %v1927
        %v1957 = vmax.f32 %v1893, %v1941
        %v1958 = vld [vmem:[%s5] sm:$0xff]
        %v1959 = vld [vmem:[%s5 + $0x8] sm:$0xff]
        %v1960 = vld [vmem:[%s5 + $0x10] sm:$0xff]
        %v1961 = vld [vmem:[%s5 + $0x18] sm:$0xff]
        %v1962 = vld [vmem:[%s5 + $0x20] sm:$0xff]
        %v1963 = vld [vmem:[%s5 + $0x28] sm:$0xff]
        %v1964 = vld [vmem:[%s5 + $0x30] sm:$0xff]
        %v1965 = vld [vmem:[%s5 + $0x38] sm:$0xff]
        %v1966 = vld [vmem:[%s5 + $0x40] sm:$0xff]
        %v1967 = vld [vmem:[%s5 + $0x48] sm:$0xff]
        %v1968 = vld [vmem:[%s5 + $0x50] sm:$0xff]
        %v1969 = vld [vmem:[%s5 + $0x58] sm:$0xff]
        %v1970 = vld [vmem:[%s5 + $0x60] sm:$0xff]
        %v1971 = vld [vmem:[%s5 + $0x68] sm:$0xff]
        %v1972 = vld [vmem:[%s5 + $0x70] sm:$0xff]
        %v1973 = vld [vmem:[%s5 + $0x78] sm:$0xff]
        %v1974 = vld [vmem:[%s5 + $0x80] sm:$0xff]
        %v1975 = vld [vmem:[%s5 + $0x88] sm:$0xff]
        %v1976 = vld [vmem:[%s5 + $0x90] sm:$0xff]
        %v1977 = vld [vmem:[%s5 + $0x98] sm:$0xff]
        %v1978 = vld [vmem:[%s5 + $0xa0] sm:$0xff]
        %v1979 = vld [vmem:[%s5 + $0xa8] sm:$0xff]
        %v1980 = vld [vmem:[%s5 + $0xb0] sm:$0xff]
        %v1981 = vld [vmem:[%s5 + $0xb8] sm:$0xff]
        %v1982 = vld [vmem:[%s5 + $0xc0] sm:$0xff]
        %v1983 = vld [vmem:[%s5 + $0xc8] sm:$0xff]
        %v1984 = vld [vmem:[%s5 + $0xd0] sm:$0xff]
        %v1985 = vld [vmem:[%s5 + $0xd8] sm:$0xff]
        %v1986 = vld [vmem:[%s5 + $0xe0] sm:$0xff]
        %v1987 = vld [vmem:[%s5 + $0xe8] sm:$0xff]
        %v1988 = vld [vmem:[%s5 + $0xf0] sm:$0xff]
        %v1989 = vld [vmem:[%s5 + $0xf8] sm:$0xff]
        %v1990 = vld [vmem:[%s5 + $0x100] sm:$0xff]
        %v1991 = vld [vmem:[%s5 + $0x108] sm:$0xff]
        %v1992 = vld [vmem:[%s5 + $0x110] sm:$0xff]
        %v1993 = vld [vmem:[%s5 + $0x118] sm:$0xff]
        %v1994 = vld [vmem:[%s5 + $0x120] sm:$0xff]
        %v1995 = vld [vmem:[%s5 + $0x128] sm:$0xff]
        %v1996 = vld [vmem:[%s5 + $0x130] sm:$0xff]
        %v1997 = vld [vmem:[%s5 + $0x138] sm:$0xff]
        %v1998 = vld [vmem:[%s5 + $0x140] sm:$0xff]
        %v1999 = vld [vmem:[%s5 + $0x148] sm:$0xff]
        %v2000 = vld [vmem:[%s5 + $0x150] sm:$0xff]
        %v2001 = vld [vmem:[%s5 + $0x158] sm:$0xff]
        %v2002 = vld [vmem:[%s5 + $0x160] sm:$0xff]
        %v2003 = vld [vmem:[%s5 + $0x168] sm:$0xff]
        %v2004 = vld [vmem:[%s5 + $0x170] sm:$0xff]
        %v2005 = vld [vmem:[%s5 + $0x178] sm:$0xff]
        %v2006 = vld [vmem:[%s5 + $0x180] sm:$0xff]
        %v2007 = vld [vmem:[%s5 + $0x188] sm:$0xff]
        %v2008 = vld [vmem:[%s5 + $0x190] sm:$0xff]
        %v2009 = vld [vmem:[%s5 + $0x198] sm:$0xff]
        %v2010 = vld [vmem:[%s5 + $0x1a0] sm:$0xff]
        %v2011 = vld [vmem:[%s5 + $0x1a8] sm:$0xff]
        %v2012 = vld [vmem:[%s5 + $0x1b0] sm:$0xff]
        %v2013 = vld [vmem:[%s5 + $0x1b8] sm:$0xff]
        %v2014 = vld [vmem:[%s5 + $0x1c0] sm:$0xff]
        %v2015 = vld [vmem:[%s5 + $0x1c8] sm:$0xff]
        %v2016 = vld [vmem:[%s5 + $0x1d0] sm:$0xff]
        %v2017 = vld [vmem:[%s5 + $0x1d8] sm:$0xff]
        %v2018 = vld [vmem:[%s5 + $0x1e0] sm:$0xff]
        %v2019 = vld [vmem:[%s5 + $0x1e8] sm:$0xff]
        %v2020 = vld [vmem:[%s5 + $0x1f0] sm:$0xff]
        %v2021 = vld [vmem:[%s5 + $0x1f8] sm:$0xff]
        %v2022 = vld [vmem:[%s5 + $0x200] sm:$0xff]
        %v2023 = vld [vmem:[%s5 + $0x208] sm:$0xff]
        %v2024 = vld [vmem:[%s5 + $0x210] sm:$0xff]
        %v2025 = vld [vmem:[%s5 + $0x218] sm:$0xff]
        %v2026 = vld [vmem:[%s5 + $0x220] sm:$0xff]
        %v2027 = vld [vmem:[%s5 + $0x228] sm:$0xff]
        %v2028 = vld [vmem:[%s5 + $0x230] sm:$0xff]
        %v2029 = vld [vmem:[%s5 + $0x238] sm:$0xff]
        %v2030 = vld [vmem:[%s5 + $0x240] sm:$0xff]
        %v2031 = vld [vmem:[%s5 + $0x248] sm:$0xff]
        %v2032 = vld [vmem:[%s5 + $0x250] sm:$0xff]
        %v2033 = vld [vmem:[%s5 + $0x258] sm:$0xff]
        %v2034 = vld [vmem:[%s5 + $0x260] sm:$0xff]
        %v2035 = vld [vmem:[%s5 + $0x268] sm:$0xff]
        %v2036 = vld [vmem:[%s5 + $0x270] sm:$0xff]
        %v2037 = vld [vmem:[%s5 + $0x278] sm:$0xff]
        %v2038 = vld [vmem:[%s5 + $0x280] sm:$0xff]
        %v2039 = vld [vmem:[%s5 + $0x288] sm:$0xff]
        %v2040 = vld [vmem:[%s5 + $0x290] sm:$0xff]
        %v2041 = vld [vmem:[%s5 + $0x298] sm:$0xff]
        %v2042 = vld [vmem:[%s5 + $0x2a0] sm:$0xff]
        %v2043 = vld [vmem:[%s5 + $0x2a8] sm:$0xff]
        %v2044 = vld [vmem:[%s5 + $0x2b0] sm:$0xff]
        %v2045 = vld [vmem:[%s5 + $0x2b8] sm:$0xff]
        %v2046 = vld [vmem:[%s5 + $0x2c0] sm:$0xff]
        %v2047 = vld [vmem:[%s5 + $0x2c8] sm:$0xff]
        %v2048 = vld [vmem:[%s5 + $0x2d0] sm:$0xff]
        %v2049 = vld [vmem:[%s5 + $0x2d8] sm:$0xff]
        %v2050 = vld [vmem:[%s5 + $0x2e0] sm:$0xff]
        %v2051 = vld [vmem:[%s5 + $0x2e8] sm:$0xff]
        %v2052 = vld [vmem:[%s5 + $0x2f0] sm:$0xff]
        %v2053 = vld [vmem:[%s5 + $0x2f8] sm:$0xff]
        %v2054 = vld [vmem:[%s5 + $0x300] sm:$0xff]
        %v2055 = vld [vmem:[%s5 + $0x308] sm:$0xff]
        %v2056 = vld [vmem:[%s5 + $0x310] sm:$0xff]
        %v2057 = vld [vmem:[%s5 + $0x318] sm:$0xff]
        %v2058 = vld [vmem:[%s5 + $0x320] sm:$0xff]
        %v2059 = vld [vmem:[%s5 + $0x328] sm:$0xff]
        %v2060 = vld [vmem:[%s5 + $0x330] sm:$0xff]
        %v2061 = vld [vmem:[%s5 + $0x338] sm:$0xff]
        %v2062 = vld [vmem:[%s5 + $0x340] sm:$0xff]
        %v2063 = vld [vmem:[%s5 + $0x348] sm:$0xff]
        %v2064 = vld [vmem:[%s5 + $0x350] sm:$0xff]
        %v2065 = vld [vmem:[%s5 + $0x358] sm:$0xff]
        %v2066 = vld [vmem:[%s5 + $0x360] sm:$0xff]
        %v2067 = vld [vmem:[%s5 + $0x368] sm:$0xff]
        %v2068 = vld [vmem:[%s5 + $0x370] sm:$0xff]
        %v2069 = vld [vmem:[%s5 + $0x378] sm:$0xff]
        %v2070 = vld [vmem:[%s5 + $0x380] sm:$0xff]
        %v2071 = vld [vmem:[%s5 + $0x388] sm:$0xff]
        %v2072 = vld [vmem:[%s5 + $0x390] sm:$0xff]
        %v2073 = vld [vmem:[%s5 + $0x398] sm:$0xff]
        %v2074 = vld [vmem:[%s5 + $0x3a0] sm:$0xff]
        %v2075 = vld [vmem:[%s5 + $0x3a8] sm:$0xff]
        %v2076 = vld [vmem:[%s5 + $0x3b0] sm:$0xff]
        %v2077 = vld [vmem:[%s5 + $0x3b8] sm:$0xff]
        %v2078 = vld [vmem:[%s5 + $0x3c0] sm:$0xff]
        %v2079 = vld [vmem:[%s5 + $0x3c8] sm:$0xff]
        %v2080 = vld [vmem:[%s5 + $0x3d0] sm:$0xff]
        %v2081 = vld [vmem:[%s5 + $0x3d8] sm:$0xff]
        %v2082 = vld [vmem:[%s5 + $0x3e0] sm:$0xff]
        %v2083 = vld [vmem:[%s5 + $0x3e8] sm:$0xff]
        %v2084 = vld [vmem:[%s5 + $0x3f0] sm:$0xff]
        %v2085 = vld [vmem:[%s5 + $0x3f8] sm:$0xff]
        %2086 = vmatprep.subr.mxu0 0.0
        %2087 = vmatpush1.msra.mxu0 %v1958
        %2088 = vmatprep.subr.mxu0 0.0
        %2089 = vmatpush1.msra.mxu0 %v1959
        %2090 = vmatprep.subr.mxu0 0.0
        %2091 = vmatpush1.msra.mxu0 %v1960
        %2092 = vmatprep.subr.mxu0 0.0
        %2093 = vmatpush1.msra.mxu0 %v1961
        %2094 = vmatprep.subr.mxu0 0.0
        %2095 = vmatpush1.msra.mxu0 %v1962
        %2096 = vmatprep.subr.mxu0 0.0
        %2097 = vmatpush1.msra.mxu0 %v1963
        %2098 = vmatprep.subr.mxu0 0.0
        %2099 = vmatpush1.msra.mxu0 %v1964
        %2100 = vmatprep.subr.mxu0 0.0
        %2101 = vmatpush1.msra.mxu0 %v1965
        %2102 = vmatprep.subr.mxu0 0.0
        %2103 = vmatpush1.msra.mxu0 %v1966
        %2104 = vmatprep.subr.mxu0 0.0
        %2105 = vmatpush1.msra.mxu0 %v1967
        %2106 = vmatprep.subr.mxu0 0.0
        %2107 = vmatpush1.msra.mxu0 %v1968
        %2108 = vmatprep.subr.mxu0 0.0
        %2109 = vmatpush1.msra.mxu0 %v1969
        %2110 = vmatprep.subr.mxu0 0.0
        %2111 = vmatpush1.msra.mxu0 %v1970
        %2112 = vmatprep.subr.mxu0 0.0
        %2113 = vmatpush1.msra.mxu0 %v1971
        %2114 = vmatprep.subr.mxu0 0.0
        %2115 = vmatpush1.msra.mxu0 %v1972
        %2116 = vmatprep.subr.mxu0 0.0
        %2117 = vmatpush1.msra.mxu0 %v1973
        %2118 = vmatprep.subr.mxu0 0.0
        %2119 = vmatpush1.msra.mxu0 %v1974
        %2120 = vmatprep.subr.mxu0 0.0
        %2121 = vmatpush1.msra.mxu0 %v1975
        %2122 = vmatprep.subr.mxu0 0.0
        %2123 = vmatpush1.msra.mxu0 %v1976
        %2124 = vmatprep.subr.mxu0 0.0
        %2125 = vmatpush1.msra.mxu0 %v1977
        %2126 = vmatprep.subr.mxu0 0.0
        %2127 = vmatpush1.msra.mxu0 %v1978
        %2128 = vmatprep.subr.mxu0 0.0
        %2129 = vmatpush1.msra.mxu0 %v1979
        %2130 = vmatprep.subr.mxu0 0.0
        %2131 = vmatpush1.msra.mxu0 %v1980
        %2132 = vmatprep.subr.mxu0 0.0
        %2133 = vmatpush1.msra.mxu0 %v1981
        %2134 = vmatprep.subr.mxu0 0.0
        %2135 = vmatpush1.msra.mxu0 %v1982
        %2136 = vmatprep.subr.mxu0 0.0
        %2137 = vmatpush1.msra.mxu0 %v1983
        %2138 = vmatprep.subr.mxu0 0.0
        %2139 = vmatpush1.msra.mxu0 %v1984
        %2140 = vmatprep.subr.mxu0 0.0
        %2141 = vmatpush1.msra.mxu0 %v1985
        %2142 = vmatprep.subr.mxu0 0.0
        %2143 = vmatpush1.msra.mxu0 %v1986
        %2144 = vmatprep.subr.mxu0 0.0
        %2145 = vmatpush1.msra.mxu0 %v1987
        %2146 = vmatprep.subr.mxu0 0.0
        %2147 = vmatpush1.msra.mxu0 %v1988
        %2148 = vmatprep.subr.mxu0 0.0
        %2149 = vmatpush1.msra.mxu0 %v1989
        %2150 = vmatprep.mubr.f32.mxu0 %v1943
        %2151 = vmatmul.mubr.f32.gmra.mrb[0].mxu0 %v1942
        %v2152 = vpop.f32.mrb[0].mxu0
        %v2153 = vadd.f32 0.0, %v2152
        %v2154 = vpop.f32.mrb[0].mxu0
        %2155 = vmatprep.mubr.f32.mxu0 %v1951
        %2156 = vmatmul.mubr.f32.gmra.mrb[0].mxu0 %v1950
        %v2157 = vpop.f32.mrb[0].mxu0
        %v2158 = vadd.f32 0.0, %v2157
        %v2159 = vpop.f32.mrb[0].mxu0
        %2160 = vdwg.mxu0
        %2161 = vmatprep.subr.mxu0 0.0
        %2162 = vmatpush1.msra.mxu0 %v1990
        %2163 = vmatprep.subr.mxu0 0.0
        %2164 = vmatpush1.msra.mxu0 %v1991
        %2165 = vmatprep.subr.mxu0 0.0
        %2166 = vmatpush1.msra.mxu0 %v1992
        %2167 = vmatprep.subr.mxu0 0.0
        %2168 = vmatpush1.msra.mxu0 %v1993
        %2169 = vmatprep.subr.mxu0 0.0
        %2170 = vmatpush1.msra.mxu0 %v1994
        %2171 = vmatprep.subr.mxu0 0.0
        %2172 = vmatpush1.msra.mxu0 %v1995
        %2173 = vmatprep.subr.mxu0 0.0
        %2174 = vmatpush1.msra.mxu0 %v1996
        %2175 = vmatprep.subr.mxu0 0.0
        %2176 = vmatpush1.msra.mxu0 %v1997
        %2177 = vmatprep.subr.mxu0 0.0
        %2178 = vmatpush1.msra.mxu0 %v1998
        %2179 = vmatprep.subr.mxu0 0.0
        %2180 = vmatpush1.msra.mxu0 %v1999
        %2181 = vmatprep.subr.mxu0 0.0
        %2182 = vmatpush1.msra.mxu0 %v2000
        %2183 = vmatprep.subr.mxu0 0.0
        %2184 = vmatpush1.msra.mxu0 %v2001
        %2185 = vmatprep.subr.mxu0 0.0
        %2186 = vmatpush1.msra.mxu0 %v2002
        %2187 = vmatprep.subr.mxu0 0.0
        %2188 = vmatpush1.msra.mxu0 %v2003
        %2189 = vmatprep.subr.mxu0 0.0
        %2190 = vmatpush1.msra.mxu0 %v2004
        %2191 = vmatprep.subr.mxu0 0.0
        %2192 = vmatpush1.msra.mxu0 %v2005
        %2193 = vmatprep.subr.mxu0 0.0
        %2194 = vmatpush1.msra.mxu0 %v2006
        %2195 = vmatprep.subr.mxu0 0.0
        %2196 = vmatpush1.msra.mxu0 %v2007
        %2197 = vmatprep.subr.mxu0 0.0
        %2198 = vmatpush1.msra.mxu0 %v2008
        %2199 = vmatprep.subr.mxu0 0.0
        %2200 = vmatpush1.msra.mxu0 %v2009
        %2201 = vmatprep.subr.mxu0 0.0
        %2202 = vmatpush1.msra.mxu0 %v2010
        %2203 = vmatprep.subr.mxu0 0.0
        %2204 = vmatpush1.msra.mxu0 %v2011
        %2205 = vmatprep.subr.mxu0 0.0
        %2206 = vmatpush1.msra.mxu0 %v2012
        %2207 = vmatprep.subr.mxu0 0.0
        %2208 = vmatpush1.msra.mxu0 %v2013
        %2209 = vmatprep.subr.mxu0 0.0
        %2210 = vmatpush1.msra.mxu0 %v2014
        %2211 = vmatprep.subr.mxu0 0.0
        %2212 = vmatpush1.msra.mxu0 %v2015
        %2213 = vmatprep.subr.mxu0 0.0
        %2214 = vmatpush1.msra.mxu0 %v2016
        %2215 = vmatprep.subr.mxu0 0.0
        %2216 = vmatpush1.msra.mxu0 %v2017
        %2217 = vmatprep.subr.mxu0 0.0
        %2218 = vmatpush1.msra.mxu0 %v2018
        %2219 = vmatprep.subr.mxu0 0.0
        %2220 = vmatpush1.msra.mxu0 %v2019
        %2221 = vmatprep.subr.mxu0 0.0
        %2222 = vmatpush1.msra.mxu0 %v2020
        %2223 = vmatprep.subr.mxu0 0.0
        %2224 = vmatpush1.msra.mxu0 %v2021
        %2225 = vmatprep.mubr.f32.mxu0 %v1945
        %2226 = vmatmul.mubr.f32.gmra.mrb[0].mxu0 %v1944
        %v2227 = vpop.f32.mrb[0].mxu0
        %v2228 = vadd.f32 %v2153, %v2227
        %v2229 = vpop.f32.mrb[0].mxu0
        %2230 = vmatprep.mubr.f32.mxu0 %v1953
        %2231 = vmatmul.mubr.f32.gmra.mrb[0].mxu0 %v1952
        %v2232 = vpop.f32.mrb[0].mxu0
        %v2233 = vadd.f32 %v2158, %v2232
        %v2234 = vpop.f32.mrb[0].mxu0
        %2235 = vdwg.mxu0
        %2236 = vmatprep.subr.mxu0 0.0
        %2237 = vmatpush1.msra.mxu0 %v2022
        %2238 = vmatprep.subr.mxu0 0.0
        %2239 = vmatpush1.msra.mxu0 %v2023
        %2240 = vmatprep.subr.mxu0 0.0
        %2241 = vmatpush1.msra.mxu0 %v2024
        %2242 = vmatprep.subr.mxu0 0.0
        %2243 = vmatpush1.msra.mxu0 %v2025
        %2244 = vmatprep.subr.mxu0 0.0
        %2245 = vmatpush1.msra.mxu0 %v2026
        %2246 = vmatprep.subr.mxu0 0.0
        %2247 = vmatpush1.msra.mxu0 %v2027
        %2248 = vmatprep.subr.mxu0 0.0
        %2249 = vmatpush1.msra.mxu0 %v2028
        %2250 = vmatprep.subr.mxu0 0.0
        %2251 = vmatpush1.msra.mxu0 %v2029
        %2252 = vmatprep.subr.mxu0 0.0
        %2253 = vmatpush1.msra.mxu0 %v2030
        %2254 = vmatprep.subr.mxu0 0.0
        %2255 = vmatpush1.msra.mxu0 %v2031
        %2256 = vmatprep.subr.mxu0 0.0
        %2257 = vmatpush1.msra.mxu0 %v2032
        %2258 = vmatprep.subr.mxu0 0.0
        %2259 = vmatpush1.msra.mxu0 %v2033
        %2260 = vmatprep.subr.mxu0 0.0
        %2261 = vmatpush1.msra.mxu0 %v2034
        %2262 = vmatprep.subr.mxu0 0.0
        %2263 = vmatpush1.msra.mxu0 %v2035
        %2264 = vmatprep.subr.mxu0 0.0
        %2265 = vmatpush1.msra.mxu0 %v2036
        %2266 = vmatprep.subr.mxu0 0.0
        %2267 = vmatpush1.msra.mxu0 %v2037
        %2268 = vmatprep.subr.mxu0 0.0
        %2269 = vmatpush1.msra.mxu0 %v2038
        %2270 = vmatprep.subr.mxu0 0.0
        %2271 = vmatpush1.msra.mxu0 %v2039
        %2272 = vmatprep.subr.mxu0 0.0
        %2273 = vmatpush1.msra.mxu0 %v2040
        %2274 = vmatprep.subr.mxu0 0.0
        %2275 = vmatpush1.msra.mxu0 %v2041
        %2276 = vmatprep.subr.mxu0 0.0
        %2277 = vmatpush1.msra.mxu0 %v2042
        %2278 = vmatprep.subr.mxu0 0.0
        %2279 = vmatpush1.msra.mxu0 %v2043
        %2280 = vmatprep.subr.mxu0 0.0
        %2281 = vmatpush1.msra.mxu0 %v2044
        %2282 = vmatprep.subr.mxu0 0.0
        %2283 = vmatpush1.msra.mxu0 %v2045
        %2284 = vmatprep.subr.mxu0 0.0
        %2285 = vmatpush1.msra.mxu0 %v2046
        %2286 = vmatprep.subr.mxu0 0.0
        %2287 = vmatpush1.msra.mxu0 %v2047
        %2288 = vmatprep.subr.mxu0 0.0
        %2289 = vmatpush1.msra.mxu0 %v2048
        %2290 = vmatprep.subr.mxu0 0.0
        %2291 = vmatpush1.msra.mxu0 %v2049
        %2292 = vmatprep.subr.mxu0 0.0
        %2293 = vmatpush1.msra.mxu0 %v2050
        %2294 = vmatprep.subr.mxu0 0.0
        %2295 = vmatpush1.msra.mxu0 %v2051
        %2296 = vmatprep.subr.mxu0 0.0
        %2297 = vmatpush1.msra.mxu0 %v2052
        %2298 = vmatprep.subr.mxu0 0.0
        %2299 = vmatpush1.msra.mxu0 %v2053
        %2300 = vmatprep.mubr.f32.mxu0 %v1947
        %2301 = vmatmul.mubr.f32.gmra.mrb[0].mxu0 %v1946
        %v2302 = vpop.f32.mrb[0].mxu0
        %v2303 = vadd.f32 %v2228, %v2302
        %v2304 = vpop.f32.mrb[0].mxu0
        %2305 = vmatprep.mubr.f32.mxu0 %v1955
        %2306 = vmatmul.mubr.f32.gmra.mrb[0].mxu0 %v1954
        %v2307 = vpop.f32.mrb[0].mxu0
        %v2308 = vadd.f32 %v2233, %v2307
        %v2309 = vpop.f32.mrb[0].mxu0
        %2310 = vdwg.mxu0
        %2311 = vmatprep.subr.mxu0 0.0
        %2312 = vmatpush1.msra.mxu0 %v2054
        %2313 = vmatprep.subr.mxu0 0.0
        %2314 = vmatpush1.msra.mxu0 %v2055
        %2315 = vmatprep.subr.mxu0 0.0
        %2316 = vmatpush1.msra.mxu0 %v2056
        %2317 = vmatprep.subr.mxu0 0.0
        %2318 = vmatpush1.msra.mxu0 %v2057
        %2319 = vmatprep.subr.mxu0 0.0
        %2320 = vmatpush1.msra.mxu0 %v2058
        %2321 = vmatprep.subr.mxu0 0.0
        %2322 = vmatpush1.msra.mxu0 %v2059
        %2323 = vmatprep.subr.mxu0 0.0
        %2324 = vmatpush1.msra.mxu0 %v2060
        %2325 = vmatprep.subr.mxu0 0.0
        %2326 = vmatpush1.msra.mxu0 %v2061
        %2327 = vmatprep.subr.mxu0 0.0
        %2328 = vmatpush1.msra.mxu0 %v2062
        %2329 = vmatprep.subr.mxu0 0.0
        %2330 = vmatpush1.msra.mxu0 %v2063
        %2331 = vmatprep.subr.mxu0 0.0
        %2332 = vmatpush1.msra.mxu0 %v2064
        %2333 = vmatprep.subr.mxu0 0.0
        %2334 = vmatpush1.msra.mxu0 %v2065
        %2335 = vmatprep.subr.mxu0 0.0
        %2336 = vmatpush1.msra.mxu0 %v2066
        %2337 = vmatprep.subr.mxu0 0.0
        %2338 = vmatpush1.msra.mxu0 %v2067
        %2339 = vmatprep.subr.mxu0 0.0
        %2340 = vmatpush1.msra.mxu0 %v2068
        %2341 = vmatprep.subr.mxu0 0.0
        %2342 = vmatpush1.msra.mxu0 %v2069
        %2343 = vmatprep.subr.mxu0 0.0
        %2344 = vmatpush1.msra.mxu0 %v2070
        %2345 = vmatprep.subr.mxu0 0.0
        %2346 = vmatpush1.msra.mxu0 %v2071
        %2347 = vmatprep.subr.mxu0 0.0
        %2348 = vmatpush1.msra.mxu0 %v2072
        %2349 = vmatprep.subr.mxu0 0.0
        %2350 = vmatpush1.msra.mxu0 %v2073
        %2351 = vmatprep.subr.mxu0 0.0
        %2352 = vmatpush1.msra.mxu0 %v2074
        %2353 = vmatprep.subr.mxu0 0.0
        %2354 = vmatpush1.msra.mxu0 %v2075
        %2355 = vmatprep.subr.mxu0 0.0
        %2356 = vmatpush1.msra.mxu0 %v2076
        %2357 = vmatprep.subr.mxu0 0.0
        %2358 = vmatpush1.msra.mxu0 %v2077
        %2359 = vmatprep.subr.mxu0 0.0
        %2360 = vmatpush1.msra.mxu0 %v2078
        %2361 = vmatprep.subr.mxu0 0.0
        %2362 = vmatpush1.msra.mxu0 %v2079
        %2363 = vmatprep.subr.mxu0 0.0
        %2364 = vmatpush1.msra.mxu0 %v2080
        %2365 = vmatprep.subr.mxu0 0.0
        %2366 = vmatpush1.msra.mxu0 %v2081
        %2367 = vmatprep.subr.mxu0 0.0
        %2368 = vmatpush1.msra.mxu0 %v2082
        %2369 = vmatprep.subr.mxu0 0.0
        %2370 = vmatpush1.msra.mxu0 %v2083
        %2371 = vmatprep.subr.mxu0 0.0
        %2372 = vmatpush1.msra.mxu0 %v2084
        %2373 = vmatprep.subr.mxu0 0.0
        %2374 = vmatpush1.msra.mxu0 %v2085
        %2375 = vmatprep.mubr.f32.mxu0 %v1949
        %2376 = vmatmul.mubr.f32.gmra.mrb[0].mxu0 %v1948
        %v2377 = vpop.f32.mrb[0].mxu0
        %v2378 = vadd.f32 %v2303, %v2377
        %v2379 = vpop.f32.mrb[0].mxu0
        %2380 = vmatprep.mubr.f32.mxu0 %v1957
        %2381 = vmatmul.mubr.f32.gmra.mrb[0].mxu0 %v1956
        %v2382 = vpop.f32.mrb[0].mxu0
        %v2383 = vadd.f32 %v2308, %v2382
        %v2384 = vpop.f32.mrb[0].mxu0
        %2385 = vdwg.mxu0
        %v2386 = vlaneseq
        %vm2387 = vcmp.ge.s32.totalorder %v2386, 0
        %vm2388 = vcmp.lt.s32.totalorder %v2386, 25
        %vm2389 = vmand %vm2387, %vm2388
        %2390 = vst.msk [vmem:[#allocation2] sm:$0x1] %vm2389, %v2378
        %v2393 = vunpack.c.l.s4 1966171168
        %v2394 = vunpack.c.0.s8 %v2393
        %v2395 = vlaneseq
        %v2396 = vshrl.u32 %v2395, 7
        %v2397 = vsub.s32 %v2394, %v2396
        %v2398 = vrot.slane %v2378, %v2397
        %v2399 = vcombine.high %v2398, %v2398
        %v2401 = vunpack.c.l.s4 1966171168
        %v2402 = vunpack.c.0.s8 %v2401
        %v2403 = vlaneseq
        %v2404 = vshrl.u32 %v2403, 7
        %v2405 = vsub.s32 %v2402, %v2404
        %v2406 = vrot.slane %v2398, %v2405
        %v2408 = vunpack.c.l.s4 1966171168
        %v2409 = vunpack.c.0.s8 %v2408
        %v2410 = vlaneseq
        %v2411 = vshrl.u32 %v2410, 7
        %v2412 = vsub.s32 %v2409, %v2411
        %v2413 = vrot.slane %v2399, %v2412
        %2414 = vrot.lane.b32.xlu0 %v2413, 25
        %v2415 = vpop.permute.xlu0 %2414
        %vm2417 = vcmp.ge.s32.totalorder %v2386, 25
        %vm2418 = vcmp.lt.s32.totalorder %v2386, 50
        %vm2419 = vmand %vm2417, %vm2418
        %2420 = vst.msk [vmem:[#allocation2] sm:$0x1] %vm2419, %v2415
        %v2421 = vcombine.high %v2406, %v2406
        %2422 = vrot.lane.b32.xlu0 %v2421, 50
        %v2423 = vpop.permute.xlu0 %2422
        %vm2425 = vcmp.ge.s32.totalorder %v2386, 50
        %vm2426 = vcmp.lt.s32.totalorder %v2386, 75
        %vm2427 = vmand %vm2425, %vm2426
        %2428 = vst.msk [vmem:[#allocation2] sm:$0x1] %vm2427, %v2423
        %v2429 = vcombine.high %v2413, %v2413
        %2430 = vrot.lane.b32.xlu0 %v2429, 75
        %v2431 = vpop.permute.xlu0 %2430
        %vm2433 = vcmp.ge.s32.totalorder %v2386, 75
        %vm2434 = vcmp.lt.s32.totalorder %v2386, 100
        %vm2435 = vmand %vm2433, %vm2434
        %2436 = vst.msk [vmem:[#allocation2] sm:$0x1] %vm2435, %v2431
        %v2437 = vcombine.high %v2378, %v2378
        %v2439 = vunpack.c.l.s4 1966171168
        %v2440 = vunpack.c.0.s8 %v2439
        %v2441 = vlaneseq
        %v2442 = vshrl.u32 %v2441, 7
        %v2443 = vsub.s32 %v2440, %v2442
        %v2444 = vrot.slane %v2437, %v2443
        %v2446 = vunpack.c.l.s4 1966171168
        %v2447 = vunpack.c.0.s8 %v2446
        %v2448 = vlaneseq
        %v2449 = vshrl.u32 %v2448, 7
        %v2450 = vsub.s32 %v2447, %v2449
        %v2451 = vrot.slane %v2444, %v2450
        %2452 = vrot.lane.b32.xlu0 %v2451, 100
        %v2453 = vpop.permute.xlu0 %2452
        %vm2455 = vcmp.ge.s32.totalorder %v2386, 100
        %vm2456 = vcmp.lt.s32.totalorder %v2386, 125
        %vm2457 = vmand %vm2455, %vm2456
        %2458 = vst.msk [vmem:[#allocation2] sm:$0x1] %vm2457, %v2453
        %v2459 = vcombine.high %v2444, %v2444
        %v2461 = vunpack.c.l.s4 1966171168
        %v2462 = vunpack.c.0.s8 %v2461
        %v2463 = vlaneseq
        %v2464 = vshrl.u32 %v2463, 7
        %v2465 = vsub.s32 %v2462, %v2464
        %v2466 = vrot.slane %v2459, %v2465
        %2467 = vrot.lane.b32.xlu0 %v2466, 125
        %v2468 = vpop.permute.xlu0 %2467
        %v2469 = vrot.slane %v2468, 7
        %vm2470 = vcmask 1022976
        %v2471 = vsel %vm2470, %v2469, %v2468
        %vm2473 = vcmp.ge.s32.totalorder %v2386, 125
        %vm2474 = vcmp.lt.s32.totalorder %v2386, 150
        %vm2475 = vmand %vm2473, %vm2474
        %2476 = vst.msk [vmem:[#allocation2] sm:$0x3] %vm2475, %v2471
        %v2477 = vcombine.high %v2451, %v2451
        %2478 = vrot.lane.b32.xlu0 %v2477, 22
        %v2479 = vpop.permute.xlu0 %2478
        %vm2481 = vcmp.ge.s32.totalorder %v2386, 22
        %vm2482 = vcmp.lt.s32.totalorder %v2386, 47
        %vm2483 = vmand %vm2481, %vm2482
        %2484 = vst.msk [vmem:[#allocation2 + $0x1] sm:$0x1] %vm2483, %v2479
        %v2485 = vcombine.high %v2466, %v2466
        %2486 = vrot.lane.b32.xlu0 %v2485, 47
        %v2487 = vpop.permute.xlu0 %2486
        %vm2489 = vcmp.ge.s32.totalorder %v2386, 47
        %vm2490 = vcmp.lt.s32.totalorder %v2386, 72
        %vm2491 = vmand %vm2489, %vm2490
        %2492 = vst.msk [vmem:[#allocation2 + $0x1] sm:$0x1] %vm2491, %v2487
        %v2495 = vunpack.c.l.s4 1966171168
        %v2496 = vunpack.c.0.s8 %v2495
        %v2497 = vlaneseq
        %v2498 = vshrl.u32 %v2497, 7
        %v2499 = vsub.s32 %v2496, %v2498
        %v2500 = vrot.slane %v2383, %v2499
        %v2502 = vunpack.c.l.s4 1966171168
        %v2503 = vunpack.c.0.s8 %v2502
        %v2504 = vlaneseq
        %v2505 = vshrl.u32 %v2504, 7
        %v2506 = vsub.s32 %v2503, %v2505
        %v2507 = vrot.slane %v2500, %v2506
        %2508 = vrot.lane.b32.xlu0 %v2507, 72
        %v2509 = vpop.permute.xlu0 %2508
        %vm2511 = vcmp.ge.s32.totalorder %v2386, 72
        %vm2512 = vcmp.lt.s32.totalorder %v2386, 97
        %vm2513 = vmand %vm2511, %vm2512
        %2514 = vst.msk [vmem:[#allocation2 + $0x1] sm:$0x1] %vm2513, %v2509
        %v2515 = vcombine.high %v2500, %v2500
        %v2517 = vunpack.c.l.s4 1966171168
        %v2518 = vunpack.c.0.s8 %v2517
        %v2519 = vlaneseq
        %v2520 = vshrl.u32 %v2519, 7
        %v2521 = vsub.s32 %v2518, %v2520
        %v2522 = vrot.slane %v2515, %v2521
        %2523 = vrot.lane.b32.xlu0 %v2522, 97
        %v2524 = vpop.permute.xlu0 %2523
        %vm2526 = vcmp.ge.s32.totalorder %v2386, 97
        %vm2527 = vcmp.lt.s32.totalorder %v2386, 122
        %vm2528 = vmand %vm2526, %vm2527
        %2529 = vst.msk [vmem:[#allocation2 + $0x1] sm:$0x1] %vm2528, %v2524
        %v2530 = vcombine.high %v2507, %v2507
        %2531 = vrot.lane.b32.xlu0 %v2530, 122
        %v2532 = vpop.permute.xlu0 %2531
        %v2533 = vrot.slane %v2532, 7
        %vm2534 = vcmask 998400
        %v2535 = vsel %vm2534, %v2533, %v2532
        %vm2537 = vcmp.ge.s32.totalorder %v2386, 122
        %vm2538 = vcmp.lt.s32.totalorder %v2386, 147
        %vm2539 = vmand %vm2537, %vm2538
        %2540 = vst.msk [vmem:[#allocation2 + $0x1] sm:$0x3] %vm2539, %v2535
        %v2541 = vcombine.high %v2522, %v2522
        %2542 = vrot.lane.b32.xlu0 %v2541, 19
        %v2543 = vpop.permute.xlu0 %2542
        %vm2545 = vcmp.ge.s32.totalorder %v2386, 19
        %vm2546 = vcmp.lt.s32.totalorder %v2386, 44
        %vm2547 = vmand %vm2545, %vm2546
        %2548 = vst.msk [vmem:[#allocation2 + $0x2] sm:$0x1] %vm2547, %v2543
        %v2549 = vcombine.high %v2383, %v2383
        %v2551 = vunpack.c.l.s4 1966171168
        %v2552 = vunpack.c.0.s8 %v2551
        %v2553 = vlaneseq
        %v2554 = vshrl.u32 %v2553, 7
        %v2555 = vsub.s32 %v2552, %v2554
        %v2556 = vrot.slane %v2549, %v2555
        %v2558 = vunpack.c.l.s4 1966171168
        %v2559 = vunpack.c.0.s8 %v2558
        %v2560 = vlaneseq
        %v2561 = vshrl.u32 %v2560, 7
        %v2562 = vsub.s32 %v2559, %v2561
        %v2563 = vrot.slane %v2556, %v2562
        %2564 = vrot.lane.b32.xlu0 %v2563, 44
        %v2565 = vpop.permute.xlu0 %2564
        %vm2567 = vcmp.ge.s32.totalorder %v2386, 44
        %vm2568 = vcmp.lt.s32.totalorder %v2386, 69
        %vm2569 = vmand %vm2567, %vm2568
        %2570 = vst.msk [vmem:[#allocation2 + $0x2] sm:$0x1] %vm2569, %v2565
        %v2571 = vcombine.high %v2556, %v2556
        %v2573 = vunpack.c.l.s4 1966171168
        %v2574 = vunpack.c.0.s8 %v2573
        %v2575 = vlaneseq
        %v2576 = vshrl.u32 %v2575, 7
        %v2577 = vsub.s32 %v2574, %v2576
        %v2578 = vrot.slane %v2571, %v2577
        %2579 = vrot.lane.b32.xlu0 %v2578, 69
        %v2580 = vpop.permute.xlu0 %2579
        %vm2582 = vcmp.ge.s32.totalorder %v2386, 69
        %vm2583 = vcmp.lt.s32.totalorder %v2386, 94
        %vm2584 = vmand %vm2582, %vm2583
        %2585 = vst.msk [vmem:[#allocation2 + $0x2] sm:$0x1] %vm2584, %v2580
        %v2586 = vcombine.high %v2563, %v2563
        %2587 = vrot.lane.b32.xlu0 %v2586, 94
        %v2588 = vpop.permute.xlu0 %2587
        %vm2590 = vcmp.ge.s32.totalorder %v2386, 94
        %vm2591 = vcmp.lt.s32.totalorder %v2386, 119
        %vm2592 = vmand %vm2590, %vm2591
        %2593 = vst.msk [vmem:[#allocation2 + $0x2] sm:$0x1] %vm2592, %v2588
        %v2594 = vcombine.high %v2578, %v2578
        %2595 = vrot.lane.b32.xlu0 %v2594, 119
        %v2596 = vpop.permute.xlu0 %2595
        %v2597 = vrot.slane %v2596, 7
        %vm2598 = vcmask 973824
        %v2599 = vsel %vm2598, %v2597, %v2596
        %vm2601 = vcmp.ge.s32.totalorder %v2386, 119
        %vm2602 = vcmp.lt.s32.totalorder %v2386, 144
        %vm2603 = vmand %vm2601, %vm2602
        %2604 = vst.msk [vmem:[#allocation2 + $0x2] sm:$0x3] %vm2603, %v2599
        %v2605 = vld [vmem:[#allocation2] sm:$0xf]
        %v2606 = vld [vmem:[%s6] sm:$0xff]
        %v2607 = vld [vmem:[%s6 + $0x8] sm:$0xff]
        %v2608 = vld [vmem:[%s6 + $0x10] sm:$0xff]
        %v2609 = vld [vmem:[%s6 + $0x18] sm:$0xff]
        %v2610 = vld [vmem:[%s6 + $0x20] sm:$0xff]
        %v2611 = vld [vmem:[%s6 + $0x28] sm:$0xff]
        %v2612 = vld [vmem:[%s6 + $0x30] sm:$0xff]
        %v2613 = vld [vmem:[%s6 + $0x38] sm:$0xff]
        %v2614 = vld [vmem:[%s6 + $0x40] sm:$0xff]
        %v2615 = vld [vmem:[%s6 + $0x48] sm:$0xff]
        %v2616 = vld [vmem:[%s6 + $0x50] sm:$0xff]
        %v2617 = vld [vmem:[%s6 + $0x58] sm:$0xff]
        %v2618 = vld [vmem:[%s6 + $0x60] sm:$0xff]
        %v2619 = vld [vmem:[%s6 + $0x68] sm:$0xff]
        %v2620 = vld [vmem:[%s6 + $0x70] sm:$0xff]
        %v2621 = vld [vmem:[%s6 + $0x78] sm:$0xff]
        %v2622 = vld [vmem:[%s6 + $0x80] sm:$0xff]
        %v2623 = vld [vmem:[%s6 + $0x88] sm:$0xff]
        %v2624 = vld [vmem:[%s6 + $0x90] sm:$0xff]
        %v2625 = vld [vmem:[%s6 + $0x98] sm:$0xff]
        %v2626 = vld [vmem:[%s6 + $0xa0] sm:$0xff]
        %v2627 = vld [vmem:[%s6 + $0xa8] sm:$0xff]
        %v2628 = vld [vmem:[%s6 + $0xb0] sm:$0xff]
        %v2629 = vld [vmem:[%s6 + $0xb8] sm:$0xff]
        %v2630 = vld [vmem:[%s6 + $0xc0] sm:$0xff]
        %v2631 = vld [vmem:[%s6 + $0xc8] sm:$0xff]
        %v2632 = vld [vmem:[%s6 + $0xd0] sm:$0xff]
        %v2633 = vld [vmem:[%s6 + $0xd8] sm:$0xff]
        %v2634 = vld [vmem:[%s6 + $0xe0] sm:$0xff]
        %v2635 = vld [vmem:[%s6 + $0xe8] sm:$0xff]
        %v2636 = vld [vmem:[%s6 + $0xf0] sm:$0xff]
        %v2637 = vld [vmem:[%s6 + $0xf8] sm:$0xff]
        %v2638 = vld [vmem:[%s6 + $0x100] sm:$0xff]
        %v2639 = vld [vmem:[%s6 + $0x108] sm:$0xff]
        %v2640 = vld [vmem:[%s6 + $0x110] sm:$0xff]
        %v2641 = vld [vmem:[%s6 + $0x118] sm:$0xff]
        %v2642 = vld [vmem:[%s6 + $0x120] sm:$0xff]
        %v2643 = vld [vmem:[%s6 + $0x128] sm:$0xff]
        %v2644 = vld [vmem:[%s6 + $0x130] sm:$0xff]
        %v2645 = vld [vmem:[%s6 + $0x138] sm:$0xff]
        %v2646 = vld [vmem:[%s6 + $0x140] sm:$0xff]
        %v2647 = vld [vmem:[%s6 + $0x148] sm:$0xff]
        %v2648 = vld [vmem:[%s6 + $0x150] sm:$0xff]
        %v2649 = vld [vmem:[%s6 + $0x158] sm:$0xff]
        %v2650 = vld [vmem:[%s6 + $0x160] sm:$0xff]
        %v2651 = vld [vmem:[%s6 + $0x168] sm:$0xff]
        %v2652 = vld [vmem:[%s6 + $0x170] sm:$0xff]
        %v2653 = vld [vmem:[%s6 + $0x178] sm:$0xff]
        %v2654 = vld [vmem:[%s6 + $0x180] sm:$0xff]
        %v2655 = vld [vmem:[%s6 + $0x188] sm:$0xff]
        %v2656 = vld [vmem:[%s7] sm:$0x1]
        %v2658 = vlaneseq
        %v2659 = vshrl.u32 %v2658, 7
        %v2660 = vsub.s32 0, %v2659
        %v2661 = vrot.slane %v2605, %v2660
        %v2662 = vlaneseq
        %v2663 = vshrl.u32 %v2662, 7
        %v2664 = vsub.s32 1, %v2663
        %v2665 = vrot.slane %v2605, %v2664
        %v2666 = vlaneseq
        %v2667 = vshrl.u32 %v2666, 7
        %v2668 = vsub.s32 2, %v2667
        %v2669 = vrot.slane %v2605, %v2668
        %v2670 = vlaneseq
        %v2671 = vshrl.u32 %v2670, 7
        %v2672 = vsub.s32 3, %v2671
        %v2673 = vrot.slane %v2605, %v2672
        %vm2677 = vcmask 130048
        %v2678 = vsel %vm2677, %v2673, 0
        %2680 = vmatprep.subr.mxu0 0.0
        %2681 = vmatpush1.msra.mxu0 %v2606
        %2682 = vmatprep.subr.mxu0 0.0
        %2683 = vmatpush1.msra.mxu0 %v2607
        %2684 = vmatprep.subr.mxu0 0.0
        %2685 = vmatpush1.msra.mxu0 %v2608
        %2686 = vmatprep.subr.mxu0 0.0
        %2687 = vmatpush1.msra.mxu0 %v2609
        %2688 = vmatprep.subr.mxu0 0.0
        %2689 = vmatpush1.msra.mxu0 %v2610
        %2690 = vmatprep.subr.mxu0 0.0
        %2691 = vmatpush1.msra.mxu0 %v2611
        %2692 = vmatprep.subr.mxu0 0.0
        %2693 = vmatpush1.msra.mxu0 %v2612
        %2694 = vmatprep.subr.mxu0 0.0
        %2695 = vmatpush1.msra.mxu0 %v2613
        %2696 = vmatprep.subr.mxu0 0.0
        %2697 = vmatpush1.msra.mxu0 %v2614
        %2698 = vmatprep.subr.mxu0 0.0
        %2699 = vmatpush1.msra.mxu0 %v2615
        %2700 = vmatprep.subr.mxu0 0.0
        %2701 = vmatpush1.msra.mxu0 %v2616
        %2702 = vmatprep.subr.mxu0 0.0
        %2703 = vmatpush1.msra.mxu0 %v2617
        %2704 = vmatprep.subr.mxu0 0.0
        %2705 = vmatpush1.msra.mxu0 %v2618
        %2706 = vmatprep.subr.mxu0 0.0
        %2707 = vmatpush1.msra.mxu0 %v2619
        %2708 = vmatprep.subr.mxu0 0.0
        %2709 = vmatpush1.msra.mxu0 %v2620
        %2710 = vmatprep.subr.mxu0 0.0
        %2711 = vmatpush1.msra.mxu0 %v2621
        %2712 = vmatprep.subr.mxu0 0.0
        %2713 = vmatpush1.msra.mxu0 %v2622
        %2714 = vmatprep.subr.mxu0 0.0
        %2715 = vmatpush1.msra.mxu0 %v2623
        %2716 = vmatprep.subr.mxu0 0.0
        %2717 = vmatpush1.msra.mxu0 %v2624
        %2718 = vmatprep.subr.mxu0 0.0
        %2719 = vmatpush1.msra.mxu0 %v2625
        %2720 = vmatprep.subr.mxu0 0.0
        %2721 = vmatpush1.msra.mxu0 %v2626
        %2722 = vmatprep.subr.mxu0 0.0
        %2723 = vmatpush1.msra.mxu0 %v2627
        %2724 = vmatprep.subr.mxu0 0.0
        %2725 = vmatpush1.msra.mxu0 %v2628
        %2726 = vmatprep.subr.mxu0 0.0
        %2727 = vmatpush1.msra.mxu0 %v2629
        %2728 = vmatprep.subr.mxu0 0.0
        %2729 = vmatpush1.msra.mxu0 %v2630
        %2730 = vmatprep.subr.mxu0 0.0
        %2731 = vmatpush1.msra.mxu0 %v2631
        %2732 = vmatprep.subr.mxu0 0.0
        %2733 = vmatpush1.msra.mxu0 %v2632
        %2734 = vmatprep.subr.mxu0 0.0
        %2735 = vmatpush1.msra.mxu0 %v2633
        %2736 = vmatprep.subr.mxu0 0.0
        %2737 = vmatpush1.msra.mxu0 %v2634
        %2738 = vmatprep.subr.mxu0 0.0
        %2739 = vmatpush1.msra.mxu0 %v2635
        %2740 = vmatprep.subr.mxu0 0.0
        %2741 = vmatpush1.msra.mxu0 %v2636
        %2742 = vmatprep.subr.mxu0 0.0
        %2743 = vmatpush1.msra.mxu0 %v2637
        %2744 = vmatprep.mubr.f32.mxu0 %v2665
        %2745 = vmatmul.mubr.f32.gmra.mrb[0].mxu0 %v2661
        %v2746 = vpop.f32.mrb[0].mxu0
        %v2747 = vadd.f32 %v2656, %v2746
        %v2748 = vpop.f32.mrb[0].mxu0
        %2749 = vdwg.mxu0
        %2750 = vmatprep.subr.mxu0 0.0
        %2751 = vmatpush1.msra.mxu0 %v2638
        %2752 = vmatprep.subr.mxu0 0.0
        %2753 = vmatpush1.msra.mxu0 %v2639
        %2754 = vmatprep.subr.mxu0 0.0
        %2755 = vmatpush1.msra.mxu0 %v2640
        %2756 = vmatprep.subr.mxu0 0.0
        %2757 = vmatpush1.msra.mxu0 %v2641
        %2758 = vmatprep.subr.mxu0 0.0
        %2759 = vmatpush1.msra.mxu0 %v2642
        %2760 = vmatprep.subr.mxu0 0.0
        %2761 = vmatpush1.msra.mxu0 %v2643
        %2762 = vmatprep.subr.mxu0 0.0
        %2763 = vmatpush1.msra.mxu0 %v2644
        %2764 = vmatprep.subr.mxu0 0.0
        %2765 = vmatpush1.msra.mxu0 %v2645
        %2766 = vmatprep.subr.mxu0 0.0
        %2767 = vmatpush1.msra.mxu0 %v2646
        %2768 = vmatprep.subr.mxu0 0.0
        %2769 = vmatpush1.msra.mxu0 %v2647
        %2770 = vmatprep.subr.mxu0 0.0
        %2771 = vmatpush1.msra.mxu0 %v2648
        %2772 = vmatprep.subr.mxu0 0.0
        %2773 = vmatpush1.msra.mxu0 %v2649
        %2774 = vmatprep.subr.mxu0 0.0
        %2775 = vmatpush1.msra.mxu0 %v2650
        %2776 = vmatprep.subr.mxu0 0.0
        %2777 = vmatpush1.msra.mxu0 %v2651
        %2778 = vmatprep.subr.mxu0 0.0
        %2779 = vmatpush1.msra.mxu0 %v2652
        %2780 = vmatprep.subr.mxu0 0.0
        %2781 = vmatpush1.msra.mxu0 %v2653
        %2782 = vmatprep.subr.mxu0 0.0
        %2783 = vmatpush1.msra.mxu0 %v2654
        %2784 = vmatprep.subr.mxu0 0.0
        %2785 = vmatpush1.msra.mxu0 %v2655
        %2786 = vmatprep.subr.mxu0 0.0
        %2787 = vmatpush1.msra.mxu0 0.0
        %2788 = vmatprep.subr.mxu0 0.0
        %2789 = vmatpush1.msra.mxu0 0.0
        %2790 = vmatprep.subr.mxu0 0.0
        %2791 = vmatpush1.msra.mxu0 0.0
        %2792 = vmatprep.subr.mxu0 0.0
        %2793 = vmatpush1.msra.mxu0 0.0
        %2794 = vmatprep.subr.mxu0 0.0
        %2795 = vmatpush1.msra.mxu0 0.0
        %2796 = vmatprep.subr.mxu0 0.0
        %2797 = vmatpush1.msra.mxu0 0.0
        %2798 = vmatprep.subr.mxu0 0.0
        %2799 = vmatpush1.msra.mxu0 0.0
        %2800 = vmatprep.subr.mxu0 0.0
        %2801 = vmatpush1.msra.mxu0 0.0
        %2802 = vmatprep.subr.mxu0 0.0
        %2803 = vmatpush1.msra.mxu0 0.0
        %2804 = vmatprep.subr.mxu0 0.0
        %2805 = vmatpush1.msra.mxu0 0.0
        %2806 = vmatprep.subr.mxu0 0.0
        %2807 = vmatpush1.msra.mxu0 0.0
        %2808 = vmatprep.subr.mxu0 0.0
        %2809 = vmatpush1.msra.mxu0 0.0
        %2810 = vmatprep.subr.mxu0 0.0
        %2811 = vmatpush1.msra.mxu0 0.0
        %2812 = vmatprep.subr.mxu0 0.0
        %2813 = vmatpush1.msra.mxu0 0.0
        %2814 = vmatprep.mubr.f32.mxu0 %v2678
        %2815 = vmatmul.mubr.f32.gmra.mrb[0].mxu0 %v2669
        %v2816 = vpop.f32.mrb[0].mxu0
        %v2817 = vadd.f32 %v2747, %v2816
        %v2818 = vpop.f32.mrb[0].mxu0
        %2819 = vdwg.mxu0
        %v2820 = vmax.f32 %v2817, 0.0
        %v2821 = vld [vmem:[%s8] sm:$0xff]
        %v2822 = vld [vmem:[%s8 + $0x8] sm:$0xff]
        %v2823 = vld [vmem:[%s8 + $0x10] sm:$0xff]
        %v2824 = vld [vmem:[%s8 + $0x18] sm:$0xff]
        %v2825 = vld [vmem:[%s8 + $0x20] sm:$0xff]
        %v2826 = vld [vmem:[%s8 + $0x28] sm:$0xff]
        %v2827 = vld [vmem:[%s8 + $0x30] sm:$0xff]
        %v2828 = vld [vmem:[%s8 + $0x38] sm:$0xff]
        %v2829 = vld [vmem:[%s8 + $0x40] sm:$0xff]
        %v2830 = vld [vmem:[%s8 + $0x48] sm:$0xff]
        %v2831 = vld [vmem:[%s8 + $0x50] sm:$0xff]
        %v2832 = vld [vmem:[%s8 + $0x58] sm:$0xff]
        %v2833 = vld [vmem:[%s8 + $0x60] sm:$0xff]
        %v2834 = vld [vmem:[%s8 + $0x68] sm:$0xff]
        %v2835 = vld [vmem:[%s8 + $0x70] sm:$0xff]
        %v2836 = vld [vmem:[%s9] sm:$0x1]
        %vm2837 = vcmask 982016
        %v2839 = vsel %vm2837, %v2820, 0
        %2841 = vmatprep.subr.mxu0 0.0
        %2842 = vmatpush1.msra.mxu0 %v2821
        %2843 = vmatprep.subr.mxu0 0.0
        %2844 = vmatpush1.msra.mxu0 %v2822
        %2845 = vmatprep.subr.mxu0 0.0
        %2846 = vmatpush1.msra.mxu0 %v2823
        %2847 = vmatprep.subr.mxu0 0.0
        %2848 = vmatpush1.msra.mxu0 %v2824
        %2849 = vmatprep.subr.mxu0 0.0
        %2850 = vmatpush1.msra.mxu0 %v2825
        %2851 = vmatprep.subr.mxu0 0.0
        %2852 = vmatpush1.msra.mxu0 %v2826
        %2853 = vmatprep.subr.mxu0 0.0
        %2854 = vmatpush1.msra.mxu0 %v2827
        %2855 = vmatprep.subr.mxu0 0.0
        %2856 = vmatpush1.msra.mxu0 %v2828
        %2857 = vmatprep.subr.mxu0 0.0
        %2858 = vmatpush1.msra.mxu0 %v2829
        %2859 = vmatprep.subr.mxu0 0.0
        %2860 = vmatpush1.msra.mxu0 %v2830
        %2861 = vmatprep.subr.mxu0 0.0
        %2862 = vmatpush1.msra.mxu0 %v2831
        %2863 = vmatprep.subr.mxu0 0.0
        %2864 = vmatpush1.msra.mxu0 %v2832
        %2865 = vmatprep.subr.mxu0 0.0
        %2866 = vmatpush1.msra.mxu0 %v2833
        %2867 = vmatprep.subr.mxu0 0.0
        %2868 = vmatpush1.msra.mxu0 %v2834
        %2869 = vmatprep.subr.mxu0 0.0
        %2870 = vmatpush1.msra.mxu0 %v2835
        %2871 = vmatprep.subr.mxu0 0.0
        %2872 = vmatpush1.msra.mxu0 0.0
        %2873 = vmatprep.subr.mxu0 0.0
        %2874 = vmatpush1.msra.mxu0 0.0
        %2875 = vmatprep.subr.mxu0 0.0
        %2876 = vmatpush1.msra.mxu0 0.0
        %2877 = vmatprep.subr.mxu0 0.0
        %2878 = vmatpush1.msra.mxu0 0.0
        %2879 = vmatprep.subr.mxu0 0.0
        %2880 = vmatpush1.msra.mxu0 0.0
        %2881 = vmatprep.subr.mxu0 0.0
        %2882 = vmatpush1.msra.mxu0 0.0
        %2883 = vmatprep.subr.mxu0 0.0
        %2884 = vmatpush1.msra.mxu0 0.0
        %2885 = vmatprep.subr.mxu0 0.0
        %2886 = vmatpush1.msra.mxu0 0.0
        %2887 = vmatprep.subr.mxu0 0.0
        %2888 = vmatpush1.msra.mxu0 0.0
        %2889 = vmatprep.subr.mxu0 0.0
        %2890 = vmatpush1.msra.mxu0 0.0
        %2891 = vmatprep.subr.mxu0 0.0
        %2892 = vmatpush1.msra.mxu0 0.0
        %2893 = vmatprep.subr.mxu0 0.0
        %2894 = vmatpush1.msra.mxu0 0.0
        %2895 = vmatprep.subr.mxu0 0.0
        %2896 = vmatpush1.msra.mxu0 0.0
        %2897 = vmatprep.subr.mxu0 0.0
        %2898 = vmatpush1.msra.mxu0 0.0
        %2899 = vmatprep.subr.mxu0 0.0
        %2900 = vmatpush1.msra.mxu0 0.0
        %2901 = vmatprep.subr.mxu0 0.0
        %2902 = vmatpush1.msra.mxu0 0.0
        %2903 = vmatprep.subr.mxu0 0.0
        %2904 = vmatpush1.msra.mxu0 0.0
        %2905 = vmatprep.mubr.f32.mxu0 0.0
        %2906 = vmatmul.mubr.f32.gmra.mrb[0].mxu0 %v2839
        %v2907 = vpop.f32.mrb[0].mxu0
        %v2908 = vadd.f32 %v2836, %v2907
        %v2909 = vpop.f32.mrb[0].mxu0
        %2910 = vdwg.mxu0
        %v2911 = vmax.f32 %v2908, 0.0
        %v2912 = vld [vmem:[%s10] sm:$0xff]
        %v2913 = vld [vmem:[%s10 + $0x8] sm:$0xff]
        %v2914 = vld [vmem:[%s10 + $0x10] sm:$0xff]
        %v2915 = vld [vmem:[%s10 + $0x18] sm:$0xff]
        %v2916 = vld [vmem:[%s10 + $0x20] sm:$0xff]
        %v2917 = vld [vmem:[%s10 + $0x28] sm:$0xff]
        %v2918 = vld [vmem:[%s10 + $0x30] sm:$0xff]
        %v2919 = vld [vmem:[%s10 + $0x38] sm:$0xff]
        %v2920 = vld [vmem:[%s10 + $0x40] sm:$0xff]
        %v2921 = vld [vmem:[%s10 + $0x48] sm:$0xff]
        %v2922 = vld [vmem:[%s10 + $0x50] sm:$0xf]
        %v2923 = vld [vmem:[%s11] sm:$0x1]
        %vm2924 = vcmask 687104
        %v2926 = vsel %vm2924, %v2911, 0
        %vm2928 = vcmask 1043456
        %v2930 = vsel %vm2928, %v2922, 0
        %2932 = vmatprep.subr.mxu0 0.0
        %2933 = vmatpush1.msra.mxu0 %v2912
        %2934 = vmatprep.subr.mxu0 0.0
        %2935 = vmatpush1.msra.mxu0 %v2913
        %2936 = vmatprep.subr.mxu0 0.0
        %2937 = vmatpush1.msra.mxu0 %v2914
        %2938 = vmatprep.subr.mxu0 0.0
        %2939 = vmatpush1.msra.mxu0 %v2915
        %2940 = vmatprep.subr.mxu0 0.0
        %2941 = vmatpush1.msra.mxu0 %v2916
        %2942 = vmatprep.subr.mxu0 0.0
        %2943 = vmatpush1.msra.mxu0 %v2917
        %2944 = vmatprep.subr.mxu0 0.0
        %2945 = vmatpush1.msra.mxu0 %v2918
        %2946 = vmatprep.subr.mxu0 0.0
        %2947 = vmatpush1.msra.mxu0 %v2919
        %2948 = vmatprep.subr.mxu0 0.0
        %2949 = vmatpush1.msra.mxu0 %v2920
        %2950 = vmatprep.subr.mxu0 0.0
        %2951 = vmatpush1.msra.mxu0 %v2921
        %2952 = vmatprep.subr.mxu0 0.0
        %2953 = vmatpush1.msra.mxu0 %v2930
        %2954 = vmatprep.subr.mxu0 0.0
        %2955 = vmatpush1.msra.mxu0 0.0
        %2956 = vmatprep.subr.mxu0 0.0
        %2957 = vmatpush1.msra.mxu0 0.0
        %2958 = vmatprep.subr.mxu0 0.0
        %2959 = vmatpush1.msra.mxu0 0.0
        %2960 = vmatprep.subr.mxu0 0.0
        %2961 = vmatpush1.msra.mxu0 0.0
        %2962 = vmatprep.subr.mxu0 0.0
        %2963 = vmatpush1.msra.mxu0 0.0
        %2964 = vmatprep.subr.mxu0 0.0
        %2965 = vmatpush1.msra.mxu0 0.0
        %2966 = vmatprep.subr.mxu0 0.0
        %2967 = vmatpush1.msra.mxu0 0.0
        %2968 = vmatprep.subr.mxu0 0.0
        %2969 = vmatpush1.msra.mxu0 0.0
        %2970 = vmatprep.subr.mxu0 0.0
        %2971 = vmatpush1.msra.mxu0 0.0
        %2972 = vmatprep.subr.mxu0 0.0
        %2973 = vmatpush1.msra.mxu0 0.0
        %2974 = vmatprep.subr.mxu0 0.0
        %2975 = vmatpush1.msra.mxu0 0.0
        %2976 = vmatprep.subr.mxu0 0.0
        %2977 = vmatpush1.msra.mxu0 0.0
        %2978 = vmatprep.subr.mxu0 0.0
        %2979 = vmatpush1.msra.mxu0 0.0
        %2980 = vmatprep.subr.mxu0 0.0
        %2981 = vmatpush1.msra.mxu0 0.0
        %2982 = vmatprep.subr.mxu0 0.0
        %2983 = vmatpush1.msra.mxu0 0.0
        %2984 = vmatprep.subr.mxu0 0.0
        %2985 = vmatpush1.msra.mxu0 0.0
        %2986 = vmatprep.subr.mxu0 0.0
        %2987 = vmatpush1.msra.mxu0 0.0
        %2988 = vmatprep.subr.mxu0 0.0
        %2989 = vmatpush1.msra.mxu0 0.0
        %2990 = vmatprep.subr.mxu0 0.0
        %2991 = vmatpush1.msra.mxu0 0.0
        %2992 = vmatprep.subr.mxu0 0.0
        %2993 = vmatpush1.msra.mxu0 0.0
        %2994 = vmatprep.subr.mxu0 0.0
        %2995 = vmatpush1.msra.mxu0 0.0
        %2996 = vmatprep.mubr.f32.mxu0 0.0
        %2997 = vmatmul.mubr.f32.gmra.mrb[0].mxu0 %v2926
        %v2998 = vpop.f32.mrb[0].mxu0
        %v2999 = vadd.f32 %v2923, %v2998
        %v3000 = vpop.f32.mrb[0].mxu0
        %3001 = vdwg.mxu0
        %vm3002 = vcmask 73728
        %3003 = vst.msk [vmem:[%s405] sm:$0x1] %vm3002, %v2999
        %s3004 = sand.u32 %s291, 1
        %s3005 = scalar_lea.sflag [#allocation4], %s3004
        %s3006 = sand.u32 %s291, 1
        %s3007 = scalar_lea.vmem [#allocation3], %s3006
        // Predicated region
        $region69: #{neural_network_forward.1} parent=67 // pred_check
          %p3008 = pneg %p301
        $region70: #{neural_network_forward.1} parent=67 // pred_check_branch
          %3010 = sbr.rel (%p3008) target = $region72
        $region71: #{neural_network_forward.1} parent=67 // pred_region
          %s3012 = ssub.s32 16, 16
          %3013 = vsyncadd %s3005, %s3012
          %s3014 = smul.addr %s26, 16
          %s3015 = scalar_lea.hbm %s12, %s3014
          %s3017 = sshll.u32 %s3007, 4
          %s3018 = int_to_ptr.vmem [resolvable:$true] %s3017
          %3020 = dma.vmem_to_hbm [thread:$0]  %s3018, 16, %s3015, %s3005
        $region72: #{neural_network_forward.1} parent=67 // pred_fallthru
          _
      $region68: #{neural_network_forward.1} parent=5 // pred_fallthru
        _
      %p3021 = scmp.le.s32.totalorder 2, %s21
      // Predicated region
      $region73: #{neural_network_forward.1} parent=5 // pred_check
        %p3022 = pneg %p3021
      $region74: #{neural_network_forward.1} parent=5 // pred_check_branch
        %3024 = sbr.rel (%p3022) target = $region76
      $region75: #{neural_network_forward.1} parent=5 // pred_region
        %s3025 = ssub.s32 %s21, 2
        // Predicated region
        $region77: #{neural_network_forward.1} parent=75 // pred_check
          %p3026 = pneg %p307
        $region78: #{neural_network_forward.1} parent=75 // pred_check_branch
          %3028 = sbr.rel (%p3026) target = $region80
        $region79: #{neural_network_forward.1} parent=75 // pred_region
          %s3029 = sand.u32 %s292, 1
          %s3030 = scalar_lea.sflag [#allocation4], %s3029
          %s3031 = sand.u32 %s292, 1
          %s3032 = scalar_lea.vmem [#allocation3], %s3031
          %3033 = dma.done %s3030, 16
        $region80: #{neural_network_forward.1} parent=75 // pred_fallthru
          _
      $region76: #{neural_network_forward.1} parent=5 // pred_fallthru
        _
    $region6: #{neural_network_forward.1} parent=1 // loop_footer
      %s25 = sadd.s32 1, %s21
    $region7: #{neural_network_forward.1} parent=1 // loop_footer_branch
      %20 = sbr.rel target = $region3
    $region8: #{neural_network_forward.1} parent=1 // loop_exit
      _
    %3034 = vsyncpa [#allocation4], 1
    %s3035 = scalar_lea.sflag [#allocation4], 1
    %3036 = vsyncpa %s3035, 1

</llo_original>
